<compile_context>
chip_gen: v6e
topology: v6e:2x2x1
jax: 0.10.0
libtpu: 0.0.40
codegen_flags: <defaults>
</compile_context>

<pallas_src>
from functools import partial

import jax
import jax.numpy as jnp
from jax.experimental import pallas as pl
from jax.experimental.pallas import tpu as pltpu


# ----------------------------------------------------------------------------
# Fused whole-network Pallas kernel (one grid step = one image of the batch)
# ----------------------------------------------------------------------------
def denoiser_kernel(x_ref, mask_ref, w_in_ref, b_in_ref,
                    blk_w_ref, blk_b_ref, bn_s_ref, bn_t_ref,
                    w_out_ref, b_out_ref, o_ref, abuf, pscr, *, W, depth):
    Cbuf, Mb = abuf.shape          # padded channel count, flat-buffer lanes
    KKC, M = pscr.shape            # im2col rows (K*K*Cbuf), pixels per image
    K = mask_ref.shape[0]
    pad = K // 2
    S = (Mb - M) // 2              # zero-border width (128-lane aligned)
    Cout = o_ref.shape[0]

    # Zero-bordered activation buffer: only the interior [S, S+M) is ever written,
    # so out-of-image taps read zeros == PyTorch 'same' zero padding.
    abuf[...] = jnp.zeros_like(abuf)

    def build_patches():
        # In-kernel im2col: K*K static lane-shifted slices of the flat padded
        # activation.  A flat shift that crosses an image row would wrap onto the
        # adjacent row's real data -> killed by the per-kw column mask; rows that
        # fall outside the image read the zero border instead.
        for kh in range(K):
            for kw in range(K):
                t = kh * K + kw
                shift = (kh - pad) * W + (kw - pad)
                tap = abuf[:, S + shift:S + shift + M]          # (Cbuf, M)
                if kw != pad:
                    tap = tap * mask_ref[kw:kw + 1, :]
                # sublane-aligned (Cbuf is a multiple of 8 not required; offsets
                # t*Cbuf are static) rows of the resident patch scratch
                pscr[t * Cbuf:(t + 1) * Cbuf, :] = tap.astype(pscr.dtype)

    def conv(w_slab, b_col, relu):
        # One MXU matmul per conv: (Cbuf, K*K*Cbuf) @ (K*K*Cbuf, M), f32 accumulate.
        build_patches()
        acc = jnp.dot(w_slab, pscr[...], preferred_element_type=jnp.float32)
        acc = acc + b_col                                        # lane broadcast
        if relu:
            acc = jnp.maximum(acc, 0.0)
        return acc

    # conv_in: Conv2d + ReLU
    abuf[:, S:S + M] = x_ref[...]
    y = conv(w_in_ref[...], b_in_ref[...], True)

    # ResBlocks: BN -> Conv -> ReLU -> BN -> Conv -> ReLU, then + skip.
    # Eval-mode BN is a per-channel affine applied to the *interior* only, so the
    # zero border stays zero (matches BN output being zero-padded by the conv).
    for d in range(depth):
        abuf[:, S:S + M] = y * bn_s_ref[d, 0] + bn_t_ref[d, 0]
        h = conv(blk_w_ref[d, 0], blk_b_ref[d, 0], True)
        abuf[:, S:S + M] = h * bn_s_ref[d, 1] + bn_t_ref[d, 1]
        h = conv(blk_w_ref[d, 1], blk_b_ref[d, 1], True)
        y = h + y                                                # skip (ReLU before add)

    # conv_out: Conv2d, no activation
    abuf[:, S:S + M] = y
    out = conv(w_out_ref[...], b_out_ref[...], False)
    o_ref[...] = out[:Cout, :].astype(o_ref.dtype)               # lane-dense store


# ----------------------------------------------------------------------------
# Wrapper: parameter packing (tiny, one-time) + the single pallas_call
# ----------------------------------------------------------------------------
def denoisernet_forward(x, params, K, *, compute_dtype=jnp.float32):
    N, Cin, H, W = x.shape
    F = params["conv_in"]["w"].shape[0]
    Cout = params["conv_out"]["w"].shape[0]
    depth = len(params["res_blocks"])
    Cbuf = max(Cin, F, Cout)                 # uniform channel count for the buffers
    M = H * W
    pad = K // 2
    # Zero border wide enough for the largest flat tap shift (pad*W + pad), rounded
    # up to a 128-lane multiple so interior stores stay vreg-aligned.
    S = -(-(pad * (W + 1)) // 128) * 128
    Mb = M + 2 * S
    KKC = K * K * Cbuf

    # ---- wrapper glue: layouts + parameter packing ---------------------------
    x_cm = x.reshape(N, Cin, M)
    if Cbuf > Cin:
        x_cm = jnp.pad(x_cm, ((0, 0), (0, Cbuf - Cin), (0, 0)))

    wpos = jnp.arange(M, dtype=jnp.int32) % W
    masks = jnp.stack(
        [((wpos + (kw - pad) >= 0) & (wpos + (kw - pad) < W)).astype(jnp.float32)
         for kw in range(K)], axis=0)                                     # (K, M)

    def slab(w):   # (O, C, K, K) -> (Cbuf, K*K*Cbuf), (kh, kw, c) minor ordering
        O, C = w.shape[:2]
        w = jnp.pad(w, ((0, Cbuf - O), (0, Cbuf - C), (0, 0), (0, 0)))
        return jnp.transpose(w, (0, 2, 3, 1)).reshape(Cbuf, KKC).astype(compute_dtype)

    def col(v):    # (C,) -> (Cbuf, 1) zero-padded bias / affine column
        return jnp.pad(v, (0, Cbuf - v.shape[0])).reshape(Cbuf, 1).astype(jnp.float32)

    def bn_cols(bn, eps=1e-5):
        gamma, beta, mean, var = bn
        s = gamma * jax.lax.rsqrt(var + eps)
        return col(s), col(beta - mean * s)

    w_in, b_in = slab(params["conv_in"]["w"]), col(params["conv_in"]["b"])
    w_out, b_out = slab(params["conv_out"]["w"]), col(params["conv_out"]["b"])

    if depth > 0:
        blk_w = jnp.stack([jnp.stack([slab(b["conv1_w"]), slab(b["conv2_w"])])
                           for b in params["res_blocks"]])
        blk_b = jnp.stack([jnp.stack([col(b["conv1_b"]), col(b["conv2_b"])])
                           for b in params["res_blocks"]])
        st = [[bn_cols(b["bn1"]), bn_cols(b["bn2"])] for b in params["res_blocks"]]
        bn_s = jnp.stack([jnp.stack([a[0][0], a[1][0]]) for a in st])
        bn_t = jnp.stack([jnp.stack([a[0][1], a[1][1]]) for a in st])
    else:  # dummies (never read when depth == 0)
        blk_w = jnp.zeros((1, 2, Cbuf, KKC), compute_dtype)
        blk_b = bn_s = bn_t = jnp.zeros((1, 2, Cbuf, 1), jnp.float32)

    def resident(shape):
        return pl.BlockSpec(shape, lambda n, _s=shape: (0,) * len(_s))

    n_convs = 2 + 2 * depth
    wbytes = jnp.dtype(compute_dtype).itemsize
    cost = pl.CostEstimate(
        flops=2 * Cbuf * KKC * M * n_convs * N,
        transcendentals=0,
        bytes_accessed=4 * (x_cm.size + masks.size + b_in.size + blk_b.size
                            + bn_s.size + bn_t.size + b_out.size + N * Cout * M)
                       + wbytes * (w_in.size + blk_w.size + w_out.size))

    out = pl.pallas_call(
        partial(denoiser_kernel, W=W, depth=depth),
        out_shape=jax.ShapeDtypeStruct((N, Cout, M), x.dtype),
        grid=(N,),
        in_specs=[
            pl.BlockSpec((None, Cbuf, M), lambda n: (n, 0, 0)),   # per-image input
            resident(masks.shape),
            resident(w_in.shape), resident(b_in.shape),
            resident(blk_w.shape), resident(blk_b.shape),
            resident(bn_s.shape), resident(bn_t.shape),
            resident(w_out.shape), resident(b_out.shape),
        ],
        out_specs=pl.BlockSpec((None, Cout, M), lambda n: (n, 0, 0)),
        scratch_shapes=[pltpu.VMEM((Cbuf, Mb), jnp.float32),      # zero-bordered act
                        pltpu.VMEM((KKC, M), compute_dtype)],     # im2col patches
        compiler_params=pltpu.CompilerParams(
            dimension_semantics=("parallel",)),                   # v7x megacore
        cost_estimate=cost,
    )(x_cm, masks, w_in, b_in, blk_w, blk_b, bn_s, bn_t, w_out, b_out)

    return out.reshape(N, Cout, H, W)


# ----------------------------------------------------------------------------
# Pure-JAX reference (Conv2d 'same' zero padding, eval-mode BN, ReLU-then-skip)
# ----------------------------------------------------------------------------
def _ref_conv(x, w, b, K):
    pad = K // 2
    y = jax.lax.conv_general_dilated(
        x, w, (1, 1), ((pad, pad), (pad, pad)),
        dimension_numbers=("NCHW", "OIHW", "NCHW"),
        precision=jax.lax.Precision.HIGHEST)
    return y + b[None, :, None, None]


def _ref_bn(x, gamma, beta, mean, var, eps=1e-5):
    s = (gamma / jnp.sqrt(var + eps))[None, :, None, None]
    return (x - mean[None, :, None, None]) * s + beta[None, :, None, None]


def denoisernet_reference(x, params, K):
    y = jnp.maximum(_ref_conv(x, params["conv_in"]["w"], params["conv_in"]["b"], K), 0.0)
    for blk in params["res_blocks"]:
        h = _ref_bn(y, *blk["bn1"])
        h = jnp.maximum(_ref_conv(h, blk["conv1_w"], blk["conv1_b"], K), 0.0)
        h = _ref_bn(h, *blk["bn2"])
        h = jnp.maximum(_ref_conv(h, blk["conv2_w"], blk["conv2_b"], K), 0.0)
        y = h + y
    return _ref_conv(y, params["conv_out"]["w"], params["conv_out"]["b"], K)


# ----------------------------------------------------------------------------
if __name__ == "__main__":
    # DenoiserNet(iscolor=True, num_feats=8, depth=2, kernel_size=3)
    N, H, W = 2, 16, 16
    in_feats, num_feats, depth, K = 3, 8, 2, 3

    key = jax.random.PRNGKey(0)
    keys = jax.random.split(key, 3 + 4 * depth)

    def conv_init(k, cout, cin, ksz):
        kw, kb = jax.random.split(k)
        bound = 1.0 / jnp.sqrt(jnp.float32(cin * ksz * ksz))
        w = jax.random.uniform(kw, (cout, cin, ksz, ksz), jnp.float32, -bound, bound)
        b = jax.random.uniform(kb, (cout,), jnp.float32, -bound, bound)
        return w, b

    def bn_init(k, c):
        k1, k2, k3, k4 = jax.random.split(k, 4)
        gamma = 1.0 + 0.1 * jax.random.normal(k1, (c,), jnp.float32)
        beta = 0.1 * jax.random.normal(k2, (c,), jnp.float32)
        mean = 0.1 * jax.random.normal(k3, (c,), jnp.float32)
        var = jax.random.uniform(k4, (c,), jnp.float32, 0.5, 1.5)
        return (gamma, beta, mean, var)

    w_in, b_in = conv_init(keys[1], num_feats, in_feats, K)
    w_out, b_out = conv_init(keys[2], in_feats, num_feats, K)
    res_blocks = []
    for d in range(depth):
        kb1, kc1, kb2, kc2 = keys[3 + 4 * d: 3 + 4 * d + 4]
        w1, b1 = conv_init(kc1, num_feats, num_feats, K)
        w2, b2 = conv_init(kc2, num_feats, num_feats, K)
        res_blocks.append(dict(bn1=bn_init(kb1, num_feats), conv1_w=w1, conv1_b=b1,
                               bn2=bn_init(kb2, num_feats), conv2_w=w2, conv2_b=b2))
    params = dict(conv_in=dict(w=w_in, b=b_in),
                  res_blocks=res_blocks,
                  conv_out=dict(w=w_out, b=b_out))

    x = jax.random.normal(keys[0], (N, in_feats, H, W), jnp.float32)

    fwd = jax.jit(lambda xx: denoisernet_forward(xx, params, K))
    y = jax.block_until_ready(fwd(x))

    ref = denoisernet_reference(x, params, K)

    assert y.shape == (N, in_feats, H, W)
    assert jnp.allclose(y, ref, atol=5e-4, rtol=5e-4), "mismatch vs reference DenoiserNet"
    print("KERNEL_OK")
</pallas_src>

<mosaic_0001>
module attributes {stable_mosaic.version = 11 : i64} {
  func.func @denoiser_kernel(%arg0: i32, %arg1: memref<1x8x256xf32, #tpu.memory_space<vmem>>, %arg2: memref<3x256xf32, #tpu.memory_space<vmem>>, %arg3: memref<8x72xf32, #tpu.memory_space<vmem>>, %arg4: memref<8x1xf32, #tpu.memory_space<vmem>>, %arg5: memref<2x2x8x72xf32, #tpu.memory_space<vmem>>, %arg6: memref<2x2x8x1xf32, #tpu.memory_space<vmem>>, %arg7: memref<2x2x8x1xf32, #tpu.memory_space<vmem>>, %arg8: memref<2x2x8x1xf32, #tpu.memory_space<vmem>>, %arg9: memref<8x72xf32, #tpu.memory_space<vmem>>, %arg10: memref<8x1xf32, #tpu.memory_space<vmem>>, %arg11: memref<1x3x256xf32, #tpu.memory_space<vmem>>, %arg12: memref<8x512xf32, #tpu.memory_space<vmem>>, %arg13: memref<72x256xf32, #tpu.memory_space<vmem>>) attributes {dimension_semantics = [#tpu.dimension_semantics<parallel>], iteration_bounds = array<i64: 2>, scalar_prefetch = 0 : i64, scratch_operands = 2 : i64, tpu.core_type = #tpu.core_type<tc>, window_params = [{transform_indices = @transform_0, window_bounds = array<i64: 1, 8, 256>}, {pipeline_mode = #tpu.pipeline_mode<synchronous>, transform_indices = @transform_1, window_bounds = array<i64: 3, 256>}, {pipeline_mode = #tpu.pipeline_mode<synchronous>, transform_indices = @transform_2, window_bounds = array<i64: 8, 72>}, {pipeline_mode = #tpu.pipeline_mode<synchronous>, transform_indices = @transform_3, window_bounds = array<i64: 8, 1>}, {pipeline_mode = #tpu.pipeline_mode<synchronous>, transform_indices = @transform_4, window_bounds = array<i64: 2, 2, 8, 72>}, {pipeline_mode = #tpu.pipeline_mode<synchronous>, transform_indices = @transform_5, window_bounds = array<i64: 2, 2, 8, 1>}, {pipeline_mode = #tpu.pipeline_mode<synchronous>, transform_indices = @transform_6, window_bounds = array<i64: 2, 2, 8, 1>}, {pipeline_mode = #tpu.pipeline_mode<synchronous>, transform_indices = @transform_7, window_bounds = array<i64: 2, 2, 8, 1>}, {pipeline_mode = #tpu.pipeline_mode<synchronous>, transform_indices = @transform_8, window_bounds = array<i64: 8, 72>}, {pipeline_mode = #tpu.pipeline_mode<synchronous>, transform_indices = @transform_9, window_bounds = array<i64: 8, 1>}, {transform_indices = @transform_10, window_bounds = array<i64: 1, 3, 256>}]} {
    %cst = arith.constant 0.000000e+00 : f32
    %0 = vector.broadcast %cst : f32 to vector<8x512xf32>
    %c0 = arith.constant 0 : index
    %c0_0 = arith.constant 0 : index
    %1 = vector.load %arg12[%c0, %c0_0] : memref<8x512xf32, #tpu.memory_space<vmem>>, vector<8x512xf32>
    tpu.vector_store %arg12[%c0, %c0_0], %0 {strides = array<i32>} : memref<8x512xf32, #tpu.memory_space<vmem>>, vector<8x512xf32>,
    %c0_1 = arith.constant 0 : index
    %c0_2 = arith.constant 0 : index
    %c0_3 = arith.constant 0 : index
    %2 = vector.load %arg1[%c0_1, %c0_2, %c0_3] : memref<1x8x256xf32, #tpu.memory_space<vmem>>, vector<1x8x256xf32>
    %3 = vector.shape_cast %2 : vector<1x8x256xf32> to vector<8x256xf32>
    %c0_4 = arith.constant 0 : index
    %c128 = arith.constant 128 : index
    %4 = vector.load %arg12[%c0_4, %c128] : memref<8x512xf32, #tpu.memory_space<vmem>>, vector<8x256xf32>
    tpu.vector_store %arg12[%c0_4, %c128], %3 {strides = array<i32>} : memref<8x512xf32, #tpu.memory_space<vmem>>, vector<8x256xf32>,
    %c0_5 = arith.constant 0 : index
    %c0_6 = arith.constant 0 : index
    %5 = vector.load %arg3[%c0_5, %c0_6] : memref<8x72xf32, #tpu.memory_space<vmem>>, vector<8x72xf32>
    %c0_7 = arith.constant 0 : index
    %c0_8 = arith.constant 0 : index
    %6 = vector.load %arg4[%c0_7, %c0_8] : memref<8x1xf32, #tpu.memory_space<vmem>>, vector<8x1xf32>
    %c0_9 = arith.constant 0 : index
    %c111 = arith.constant 111 : index
    %7 = vector.load %arg12[%c0_9, %c111] : memref<8x512xf32, #tpu.memory_space<vmem>>, vector<8x256xf32>
    %c0_10 = arith.constant 0 : index
    %c0_11 = arith.constant 0 : index
    %8 = vector.load %arg2[%c0_10, %c0_11] : memref<3x256xf32, #tpu.memory_space<vmem>>, vector<1x256xf32>
    %9 = vector.broadcast %8 : vector<1x256xf32> to vector<8x256xf32>
    %10 = arith.mulf %7, %9 : vector<8x256xf32>
    %c0_12 = arith.constant 0 : index
    %c0_13 = arith.constant 0 : index
    %11 = vector.load %arg13[%c0_12, %c0_13] : memref<72x256xf32, #tpu.memory_space<vmem>>, vector<8x256xf32>
    tpu.vector_store %arg13[%c0_12, %c0_13], %10 {strides = array<i32>} : memref<72x256xf32, #tpu.memory_space<vmem>>, vector<8x256xf32>,
    %c0_14 = arith.constant 0 : index
    %c112 = arith.constant 112 : index
    %12 = vector.load %arg12[%c0_14, %c112] : memref<8x512xf32, #tpu.memory_space<vmem>>, vector<8x256xf32>
    %c8 = arith.constant 8 : index
    %c0_15 = arith.constant 0 : index
    %13 = vector.load %arg13[%c8, %c0_15] : memref<72x256xf32, #tpu.memory_space<vmem>>, vector<8x256xf32>
    tpu.vector_store %arg13[%c8, %c0_15], %12 {strides = array<i32>} : memref<72x256xf32, #tpu.memory_space<vmem>>, vector<8x256xf32>,
    %c0_16 = arith.constant 0 : index
    %c113 = arith.constant 113 : index
    %14 = vector.load %arg12[%c0_16, %c113] : memref<8x512xf32, #tpu.memory_space<vmem>>, vector<8x256xf32>
    %c2 = arith.constant 2 : index
    %c0_17 = arith.constant 0 : index
    %15 = vector.load %arg2[%c2, %c0_17] : memref<3x256xf32, #tpu.memory_space<vmem>>, vector<1x256xf32>
    %16 = vector.broadcast %15 : vector<1x256xf32> to vector<8x256xf32>
    %17 = arith.mulf %14, %16 : vector<8x256xf32>
    %c16 = arith.constant 16 : index
    %c0_18 = arith.constant 0 : index
    %18 = vector.load %arg13[%c16, %c0_18] : memref<72x256xf32, #tpu.memory_space<vmem>>, vector<8x256xf32>
    tpu.vector_store %arg13[%c16, %c0_18], %17 {strides = array<i32>} : memref<72x256xf32, #tpu.memory_space<vmem>>, vector<8x256xf32>,
    %c0_19 = arith.constant 0 : index
    %c127 = arith.constant 127 : index
    %19 = vector.load %arg12[%c0_19, %c127] : memref<8x512xf32, #tpu.memory_space<vmem>>, vector<8x256xf32>
    %c0_20 = arith.constant 0 : index
    %c0_21 = arith.constant 0 : index
    %20 = vector.load %arg2[%c0_20, %c0_21] : memref<3x256xf32, #tpu.memory_space<vmem>>, vector<1x256xf32>
    %21 = vector.broadcast %20 : vector<1x256xf32> to vector<8x256xf32>
    %22 = arith.mulf %19, %21 : vector<8x256xf32>
    %c24 = arith.constant 24 : index
    %c0_22 = arith.constant 0 : index
    %23 = vector.load %arg13[%c24, %c0_22] : memref<72x256xf32, #tpu.memory_space<vmem>>, vector<8x256xf32>
    tpu.vector_store %arg13[%c24, %c0_22], %22 {strides = array<i32>} : memref<72x256xf32, #tpu.memory_space<vmem>>, vector<8x256xf32>,
    %c0_23 = arith.constant 0 : index
    %c128_24 = arith.constant 128 : index
    %24 = vector.load %arg12[%c0_23, %c128_24] : memref<8x512xf32, #tpu.memory_space<vmem>>, vector<8x256xf32>
    %c32 = arith.constant 32 : index
    %c0_25 = arith.constant 0 : index
    %25 = vector.load %arg13[%c32, %c0_25] : memref<72x256xf32, #tpu.memory_space<vmem>>, vector<8x256xf32>
    tpu.vector_store %arg13[%c32, %c0_25], %24 {strides = array<i32>} : memref<72x256xf32, #tpu.memory_space<vmem>>, vector<8x256xf32>,
    %c0_26 = arith.constant 0 : index
    %c129 = arith.constant 129 : index
    %26 = vector.load %arg12[%c0_26, %c129] : memref<8x512xf32, #tpu.memory_space<vmem>>, vector<8x256xf32>
    %c2_27 = arith.constant 2 : index
    %c0_28 = arith.constant 0 : index
    %27 = vector.load %arg2[%c2_27, %c0_28] : memref<3x256xf32, #tpu.memory_space<vmem>>, vector<1x256xf32>
    %28 = vector.broadcast %27 : vector<1x256xf32> to vector<8x256xf32>
    %29 = arith.mulf %26, %28 : vector<8x256xf32>
    %c40 = arith.constant 40 : index
    %c0_29 = arith.constant 0 : index
    %30 = vector.load %arg13[%c40, %c0_29] : memref<72x256xf32, #tpu.memory_space<vmem>>, vector<8x256xf32>
    tpu.vector_store %arg13[%c40, %c0_29], %29 {strides = array<i32>} : memref<72x256xf32, #tpu.memory_space<vmem>>, vector<8x256xf32>,
    %c0_30 = arith.constant 0 : index
    %c143 = arith.constant 143 : index
    %31 = vector.load %arg12[%c0_30, %c143] : memref<8x512xf32, #tpu.memory_space<vmem>>, vector<8x256xf32>
    %c0_31 = arith.constant 0 : index
    %c0_32 = arith.constant 0 : index
    %32 = vector.load %arg2[%c0_31, %c0_32] : memref<3x256xf32, #tpu.memory_space<vmem>>, vector<1x256xf32>
    %33 = vector.broadcast %32 : vector<1x256xf32> to vector<8x256xf32>
    %34 = arith.mulf %31, %33 : vector<8x256xf32>
    %c48 = arith.constant 48 : index
    %c0_33 = arith.constant 0 : index
    %35 = vector.load %arg13[%c48, %c0_33] : memref<72x256xf32, #tpu.memory_space<vmem>>, vector<8x256xf32>
    tpu.vector_store %arg13[%c48, %c0_33], %34 {strides = array<i32>} : memref<72x256xf32, #tpu.memory_space<vmem>>, vector<8x256xf32>,
    %c0_34 = arith.constant 0 : index
    %c144 = arith.constant 144 : index
    %36 = vector.load %arg12[%c0_34, %c144] : memref<8x512xf32, #tpu.memory_space<vmem>>, vector<8x256xf32>
    %c56 = arith.constant 56 : index
    %c0_35 = arith.constant 0 : index
    %37 = vector.load %arg13[%c56, %c0_35] : memref<72x256xf32, #tpu.memory_space<vmem>>, vector<8x256xf32>
    tpu.vector_store %arg13[%c56, %c0_35], %36 {strides = array<i32>} : memref<72x256xf32, #tpu.memory_space<vmem>>, vector<8x256xf32>,
    %c0_36 = arith.constant 0 : index
    %c145 = arith.constant 145 : index
    %38 = vector.load %arg12[%c0_36, %c145] : memref<8x512xf32, #tpu.memory_space<vmem>>, vector<8x256xf32>
    %c2_37 = arith.constant 2 : index
    %c0_38 = arith.constant 0 : index
    %39 = vector.load %arg2[%c2_37, %c0_38] : memref<3x256xf32, #tpu.memory_space<vmem>>, vector<1x256xf32>
    %40 = vector.broadcast %39 : vector<1x256xf32> to vector<8x256xf32>
    %41 = arith.mulf %38, %40 : vector<8x256xf32>
    %c64 = arith.constant 64 : index
    %c0_39 = arith.constant 0 : index
    %42 = vector.load %arg13[%c64, %c0_39] : memref<72x256xf32, #tpu.memory_space<vmem>>, vector<8x256xf32>
    tpu.vector_store %arg13[%c64, %c0_39], %41 {strides = array<i32>} : memref<72x256xf32, #tpu.memory_space<vmem>>, vector<8x256xf32>,
    %c0_40 = arith.constant 0 : index
    %c0_41 = arith.constant 0 : index
    %43 = vector.load %arg13[%c0_40, %c0_41] : memref<72x256xf32, #tpu.memory_space<vmem>>, vector<72x256xf32>
    %cst_42 = arith.constant dense<0.000000e+00> : vector<8x256xf32>
    %44 = tpu.matmul %5, %43, %cst_42 {dimension_numbers = #tpu.dot_dimension_numbers<[1], [0], [0], [1], [0, 0, 1, 1], [], []>} : vector<8x72xf32>, vector<72x256xf32>, vector<8x256xf32> -> vector<8x256xf32>
    %45 = vector.broadcast %6 : vector<8x1xf32> to vector<8x256xf32>
    %46 = arith.addf %44, %45 : vector<8x256xf32>
    %cst_43 = arith.constant 0.000000e+00 : f32
    %47 = vector.broadcast %cst_43 : f32 to vector<8x256xf32>
    %48 = arith.maximumf %46, %47 : vector<8x256xf32>
    %c0_44 = arith.constant 0 : index
    %c0_45 = arith.constant 0 : index
    %c0_46 = arith.constant 0 : index
    %c0_47 = arith.constant 0 : index
    %49 = vector.load %arg7[%c0_44, %c0_45, %c0_46, %c0_47] : memref<2x2x8x1xf32, #tpu.memory_space<vmem>>, vector<1x1x8x1xf32>
    %50 = vector.shape_cast %49 : vector<1x1x8x1xf32> to vector<8x1xf32>
    %51 = vector.broadcast %50 : vector<8x1xf32> to vector<8x256xf32>
    %52 = arith.mulf %48, %51 : vector<8x256xf32>
    %c0_48 = arith.constant 0 : index
    %c0_49 = arith.constant 0 : index
    %c0_50 = arith.constant 0 : index
    %c0_51 = arith.constant 0 : index
    %53 = vector.load %arg8[%c0_48, %c0_49, %c0_50, %c0_51] : memref<2x2x8x1xf32, #tpu.memory_space<vmem>>, vector<1x1x8x1xf32>
    %54 = vector.shape_cast %53 : vector<1x1x8x1xf32> to vector<8x1xf32>
    %55 = vector.broadcast %54 : vector<8x1xf32> to vector<8x256xf32>
    %56 = arith.addf %52, %55 : vector<8x256xf32>
    %c0_52 = arith.constant 0 : index
    %c128_53 = arith.constant 128 : index
    %57 = vector.load %arg12[%c0_52, %c128_53] : memref<8x512xf32, #tpu.memory_space<vmem>>, vector<8x256xf32>
    tpu.vector_store %arg12[%c0_52, %c128_53], %56 {strides = array<i32>} : memref<8x512xf32, #tpu.memory_space<vmem>>, vector<8x256xf32>,
    %c0_54 = arith.constant 0 : index
    %c0_55 = arith.constant 0 : index
    %c0_56 = arith.constant 0 : index
    %c0_57 = arith.constant 0 : index
    %58 = vector.load %arg5[%c0_54, %c0_55, %c0_56, %c0_57] : memref<2x2x8x72xf32, #tpu.memory_space<vmem>>, vector<1x1x8x72xf32>
    %59 = vector.shape_cast %58 : vector<1x1x8x72xf32> to vector<8x72xf32>
    %c0_58 = arith.constant 0 : index
    %c0_59 = arith.constant 0 : index
    %c0_60 = arith.constant 0 : index
    %c0_61 = arith.constant 0 : index
    %60 = vector.load %arg6[%c0_58, %c0_59, %c0_60, %c0_61] : memref<2x2x8x1xf32, #tpu.memory_space<vmem>>, vector<1x1x8x1xf32>
    %61 = vector.shape_cast %60 : vector<1x1x8x1xf32> to vector<8x1xf32>
    %c0_62 = arith.constant 0 : index
    %c111_63 = arith.constant 111 : index
    %62 = vector.load %arg12[%c0_62, %c111_63] : memref<8x512xf32, #tpu.memory_space<vmem>>, vector<8x256xf32>
    %c0_64 = arith.constant 0 : index
    %c0_65 = arith.constant 0 : index
    %63 = vector.load %arg2[%c0_64, %c0_65] : memref<3x256xf32, #tpu.memory_space<vmem>>, vector<1x256xf32>
    %64 = vector.broadcast %63 : vector<1x256xf32> to vector<8x256xf32>
    %65 = arith.mulf %62, %64 : vector<8x256xf32>
    %c0_66 = arith.constant 0 : index
    %c0_67 = arith.constant 0 : index
    %66 = vector.load %arg13[%c0_66, %c0_67] : memref<72x256xf32, #tpu.memory_space<vmem>>, vector<8x256xf32>
    tpu.vector_store %arg13[%c0_66, %c0_67], %65 {strides = array<i32>} : memref<72x256xf32, #tpu.memory_space<vmem>>, vector<8x256xf32>,
    %c0_68 = arith.constant 0 : index
    %c112_69 = arith.constant 112 : index
    %67 = vector.load %arg12[%c0_68, %c112_69] : memref<8x512xf32, #tpu.memory_space<vmem>>, vector<8x256xf32>
    %c8_70 = arith.constant 8 : index
    %c0_71 = arith.constant 0 : index
    %68 = vector.load %arg13[%c8_70, %c0_71] : memref<72x256xf32, #tpu.memory_space<vmem>>, vector<8x256xf32>
    tpu.vector_store %arg13[%c8_70, %c0_71], %67 {strides = array<i32>} : memref<72x256xf32, #tpu.memory_space<vmem>>, vector<8x256xf32>,
    %c0_72 = arith.constant 0 : index
    %c113_73 = arith.constant 113 : index
    %69 = vector.load %arg12[%c0_72, %c113_73] : memref<8x512xf32, #tpu.memory_space<vmem>>, vector<8x256xf32>
    %c2_74 = arith.constant 2 : index
    %c0_75 = arith.constant 0 : index
    %70 = vector.load %arg2[%c2_74, %c0_75] : memref<3x256xf32, #tpu.memory_space<vmem>>, vector<1x256xf32>
    %71 = vector.broadcast %70 : vector<1x256xf32> to vector<8x256xf32>
    %72 = arith.mulf %69, %71 : vector<8x256xf32>
    %c16_76 = arith.constant 16 : index
    %c0_77 = arith.constant 0 : index
    %73 = vector.load %arg13[%c16_76, %c0_77] : memref<72x256xf32, #tpu.memory_space<vmem>>, vector<8x256xf32>
    tpu.vector_store %arg13[%c16_76, %c0_77], %72 {strides = array<i32>} : memref<72x256xf32, #tpu.memory_space<vmem>>, vector<8x256xf32>,
    %c0_78 = arith.constant 0 : index
    %c127_79 = arith.constant 127 : index
    %74 = vector.load %arg12[%c0_78, %c127_79] : memref<8x512xf32, #tpu.memory_space<vmem>>, vector<8x256xf32>
    %c0_80 = arith.constant 0 : index
    %c0_81 = arith.constant 0 : index
    %75 = vector.load %arg2[%c0_80, %c0_81] : memref<3x256xf32, #tpu.memory_space<vmem>>, vector<1x256xf32>
    %76 = vector.broadcast %75 : vector<1x256xf32> to vector<8x256xf32>
    %77 = arith.mulf %74, %76 : vector<8x256xf32>
    %c24_82 = arith.constant 24 : index
    %c0_83 = arith.constant 0 : index
    %78 = vector.load %arg13[%c24_82, %c0_83] : memref<72x256xf32, #tpu.memory_space<vmem>>, vector<8x256xf32>
    tpu.vector_store %arg13[%c24_82, %c0_83], %77 {strides = array<i32>} : memref<72x256xf32, #tpu.memory_space<vmem>>, vector<8x256xf32>,
    %c0_84 = arith.constant 0 : index
    %c128_85 = arith.constant 128 : index
    %79 = vector.load %arg12[%c0_84, %c128_85] : memref<8x512xf32, #tpu.memory_space<vmem>>, vector<8x256xf32>
    %c32_86 = arith.constant 32 : index
    %c0_87 = arith.constant 0 : index
    %80 = vector.load %arg13[%c32_86, %c0_87] : memref<72x256xf32, #tpu.memory_space<vmem>>, vector<8x256xf32>
    tpu.vector_store %arg13[%c32_86, %c0_87], %79 {strides = array<i32>} : memref<72x256xf32, #tpu.memory_space<vmem>>, vector<8x256xf32>,
    %c0_88 = arith.constant 0 : index
    %c129_89 = arith.constant 129 : index
    %81 = vector.load %arg12[%c0_88, %c129_89] : memref<8x512xf32, #tpu.memory_space<vmem>>, vector<8x256xf32>
    %c2_90 = arith.constant 2 : index
    %c0_91 = arith.constant 0 : index
    %82 = vector.load %arg2[%c2_90, %c0_91] : memref<3x256xf32, #tpu.memory_space<vmem>>, vector<1x256xf32>
    %83 = vector.broadcast %82 : vector<1x256xf32> to vector<8x256xf32>
    %84 = arith.mulf %81, %83 : vector<8x256xf32>
    %c40_92 = arith.constant 40 : index
    %c0_93 = arith.constant 0 : index
    %85 = vector.load %arg13[%c40_92, %c0_93] : memref<72x256xf32, #tpu.memory_space<vmem>>, vector<8x256xf32>
    tpu.vector_store %arg13[%c40_92, %c0_93], %84 {strides = array<i32>} : memref<72x256xf32, #tpu.memory_space<vmem>>, vector<8x256xf32>,
    %c0_94 = arith.constant 0 : index
    %c143_95 = arith.constant 143 : index
    %86 = vector.load %arg12[%c0_94, %c143_95] : memref<8x512xf32, #tpu.memory_space<vmem>>, vector<8x256xf32>
    %c0_96 = arith.constant 0 : index
    %c0_97 = arith.constant 0 : index
    %87 = vector.load %arg2[%c0_96, %c0_97] : memref<3x256xf32, #tpu.memory_space<vmem>>, vector<1x256xf32>
    %88 = vector.broadcast %87 : vector<1x256xf32> to vector<8x256xf32>
    %89 = arith.mulf %86, %88 : vector<8x256xf32>
    %c48_98 = arith.constant 48 : index
    %c0_99 = arith.constant 0 : index
    %90 = vector.load %arg13[%c48_98, %c0_99] : memref<72x256xf32, #tpu.memory_space<vmem>>, vector<8x256xf32>
    tpu.vector_store %arg13[%c48_98, %c0_99], %89 {strides = array<i32>} : memref<72x256xf32, #tpu.memory_space<vmem>>, vector<8x256xf32>,
    %c0_100 = arith.constant 0 : index
    %c144_101 = arith.constant 144 : index
    %91 = vector.load %arg12[%c0_100, %c144_101] : memref<8x512xf32, #tpu.memory_space<vmem>>, vector<8x256xf32>
    %c56_102 = arith.constant 56 : index
    %c0_103 = arith.constant 0 : index
    %92 = vector.load %arg13[%c56_102, %c0_103] : memref<72x256xf32, #tpu.memory_space<vmem>>, vector<8x256xf32>
    tpu.vector_store %arg13[%c56_102, %c0_103], %91 {strides = array<i32>} : memref<72x256xf32, #tpu.memory_space<vmem>>, vector<8x256xf32>,
    %c0_104 = arith.constant 0 : index
    %c145_105 = arith.constant 145 : index
    %93 = vector.load %arg12[%c0_104, %c145_105] : memref<8x512xf32, #tpu.memory_space<vmem>>, vector<8x256xf32>
    %c2_106 = arith.constant 2 : index
    %c0_107 = arith.constant 0 : index
    %94 = vector.load %arg2[%c2_106, %c0_107] : memref<3x256xf32, #tpu.memory_space<vmem>>, vector<1x256xf32>
    %95 = vector.broadcast %94 : vector<1x256xf32> to vector<8x256xf32>
    %96 = arith.mulf %93, %95 : vector<8x256xf32>
    %c64_108 = arith.constant 64 : index
    %c0_109 = arith.constant 0 : index
    %97 = vector.load %arg13[%c64_108, %c0_109] : memref<72x256xf32, #tpu.memory_space<vmem>>, vector<8x256xf32>
    tpu.vector_store %arg13[%c64_108, %c0_109], %96 {strides = array<i32>} : memref<72x256xf32, #tpu.memory_space<vmem>>, vector<8x256xf32>,
    %c0_110 = arith.constant 0 : index
    %c0_111 = arith.constant 0 : index
    %98 = vector.load %arg13[%c0_110, %c0_111] : memref<72x256xf32, #tpu.memory_space<vmem>>, vector<72x256xf32>
    %cst_112 = arith.constant dense<0.000000e+00> : vector<8x256xf32>
    %99 = tpu.matmul %59, %98, %cst_112 {dimension_numbers = #tpu.dot_dimension_numbers<[1], [0], [0], [1], [0, 0, 1, 1], [], []>} : vector<8x72xf32>, vector<72x256xf32>, vector<8x256xf32> -> vector<8x256xf32>
    %100 = vector.broadcast %61 : vector<8x1xf32> to vector<8x256xf32>
    %101 = arith.addf %99, %100 : vector<8x256xf32>
    %cst_113 = arith.constant 0.000000e+00 : f32
    %102 = vector.broadcast %cst_113 : f32 to vector<8x256xf32>
    %103 = arith.maximumf %101, %102 : vector<8x256xf32>
    %c0_114 = arith.constant 0 : index
    %c1 = arith.constant 1 : index
    %c0_115 = arith.constant 0 : index
    %c0_116 = arith.constant 0 : index
    %104 = vector.load %arg7[%c0_114, %c1, %c0_115, %c0_116] : memref<2x2x8x1xf32, #tpu.memory_space<vmem>>, vector<1x1x8x1xf32>
    %105 = vector.shape_cast %104 : vector<1x1x8x1xf32> to vector<8x1xf32>
    %106 = vector.broadcast %105 : vector<8x1xf32> to vector<8x256xf32>
    %107 = arith.mulf %103, %106 : vector<8x256xf32>
    %c0_117 = arith.constant 0 : index
    %c1_118 = arith.constant 1 : index
    %c0_119 = arith.constant 0 : index
    %c0_120 = arith.constant 0 : index
    %108 = vector.load %arg8[%c0_117, %c1_118, %c0_119, %c0_120] : memref<2x2x8x1xf32, #tpu.memory_space<vmem>>, vector<1x1x8x1xf32>
    %109 = vector.shape_cast %108 : vector<1x1x8x1xf32> to vector<8x1xf32>
    %110 = vector.broadcast %109 : vector<8x1xf32> to vector<8x256xf32>
    %111 = arith.addf %107, %110 : vector<8x256xf32>
    %c0_121 = arith.constant 0 : index
    %c128_122 = arith.constant 128 : index
    %112 = vector.load %arg12[%c0_121, %c128_122] : memref<8x512xf32, #tpu.memory_space<vmem>>, vector<8x256xf32>
    tpu.vector_store %arg12[%c0_121, %c128_122], %111 {strides = array<i32>} : memref<8x512xf32, #tpu.memory_space<vmem>>, vector<8x256xf32>,
    %c0_123 = arith.constant 0 : index
    %c1_124 = arith.constant 1 : index
    %c0_125 = arith.constant 0 : index
    %c0_126 = arith.constant 0 : index
    %113 = vector.load %arg5[%c0_123, %c1_124, %c0_125, %c0_126] : memref<2x2x8x72xf32, #tpu.memory_space<vmem>>, vector<1x1x8x72xf32>
    %114 = vector.shape_cast %113 : vector<1x1x8x72xf32> to vector<8x72xf32>
    %c0_127 = arith.constant 0 : index
    %c1_128 = arith.constant 1 : index
    %c0_129 = arith.constant 0 : index
    %c0_130 = arith.constant 0 : index
    %115 = vector.load %arg6[%c0_127, %c1_128, %c0_129, %c0_130] : memref<2x2x8x1xf32, #tpu.memory_space<vmem>>, vector<1x1x8x1xf32>
    %116 = vector.shape_cast %115 : vector<1x1x8x1xf32> to vector<8x1xf32>
    %c0_131 = arith.constant 0 : index
    %c111_132 = arith.constant 111 : index
    %117 = vector.load %arg12[%c0_131, %c111_132] : memref<8x512xf32, #tpu.memory_space<vmem>>, vector<8x256xf32>
    %c0_133 = arith.constant 0 : index
    %c0_134 = arith.constant 0 : index
    %118 = vector.load %arg2[%c0_133, %c0_134] : memref<3x256xf32, #tpu.memory_space<vmem>>, vector<1x256xf32>
    %119 = vector.broadcast %118 : vector<1x256xf32> to vector<8x256xf32>
    %120 = arith.mulf %117, %119 : vector<8x256xf32>
    %c0_135 = arith.constant 0 : index
    %c0_136 = arith.constant 0 : index
    %121 = vector.load %arg13[%c0_135, %c0_136] : memref<72x256xf32, #tpu.memory_space<vmem>>, vector<8x256xf32>
    tpu.vector_store %arg13[%c0_135, %c0_136], %120 {strides = array<i32>} : memref<72x256xf32, #tpu.memory_space<vmem>>, vector<8x256xf32>,
    %c0_137 = arith.constant 0 : index
    %c112_138 = arith.constant 112 : index
    %122 = vector.load %arg12[%c0_137, %c112_138] : memref<8x512xf32, #tpu.memory_space<vmem>>, vector<8x256xf32>
    %c8_139 = arith.constant 8 : index
    %c0_140 = arith.constant 0 : index
    %123 = vector.load %arg13[%c8_139, %c0_140] : memref<72x256xf32, #tpu.memory_space<vmem>>, vector<8x256xf32>
    tpu.vector_store %arg13[%c8_139, %c0_140], %122 {strides = array<i32>} : memref<72x256xf32, #tpu.memory_space<vmem>>, vector<8x256xf32>,
    %c0_141 = arith.constant 0 : index
    %c113_142 = arith.constant 113 : index
    %124 = vector.load %arg12[%c0_141, %c113_142] : memref<8x512xf32, #tpu.memory_space<vmem>>, vector<8x256xf32>
    %c2_143 = arith.constant 2 : index
    %c0_144 = arith.constant 0 : index
    %125 = vector.load %arg2[%c2_143, %c0_144] : memref<3x256xf32, #tpu.memory_space<vmem>>, vector<1x256xf32>
    %126 = vector.broadcast %125 : vector<1x256xf32> to vector<8x256xf32>
    %127 = arith.mulf %124, %126 : vector<8x256xf32>
    %c16_145 = arith.constant 16 : index
    %c0_146 = arith.constant 0 : index
    %128 = vector.load %arg13[%c16_145, %c0_146] : memref<72x256xf32, #tpu.memory_space<vmem>>, vector<8x256xf32>
    tpu.vector_store %arg13[%c16_145, %c0_146], %127 {strides = array<i32>} : memref<72x256xf32, #tpu.memory_space<vmem>>, vector<8x256xf32>,
    %c0_147 = arith.constant 0 : index
    %c127_148 = arith.constant 127 : index
    %129 = vector.load %arg12[%c0_147, %c127_148] : memref<8x512xf32, #tpu.memory_space<vmem>>, vector<8x256xf32>
    %c0_149 = arith.constant 0 : index
    %c0_150 = arith.constant 0 : index
    %130 = vector.load %arg2[%c0_149, %c0_150] : memref<3x256xf32, #tpu.memory_space<vmem>>, vector<1x256xf32>
    %131 = vector.broadcast %130 : vector<1x256xf32> to vector<8x256xf32>
    %132 = arith.mulf %129, %131 : vector<8x256xf32>
    %c24_151 = arith.constant 24 : index
    %c0_152 = arith.constant 0 : index
    %133 = vector.load %arg13[%c24_151, %c0_152] : memref<72x256xf32, #tpu.memory_space<vmem>>, vector<8x256xf32>
    tpu.vector_store %arg13[%c24_151, %c0_152], %132 {strides = array<i32>} : memref<72x256xf32, #tpu.memory_space<vmem>>, vector<8x256xf32>,
    %c0_153 = arith.constant 0 : index
    %c128_154 = arith.constant 128 : index
    %134 = vector.load %arg12[%c0_153, %c128_154] : memref<8x512xf32, #tpu.memory_space<vmem>>, vector<8x256xf32>
    %c32_155 = arith.constant 32 : index
    %c0_156 = arith.constant 0 : index
    %135 = vector.load %arg13[%c32_155, %c0_156] : memref<72x256xf32, #tpu.memory_space<vmem>>, vector<8x256xf32>
    tpu.vector_store %arg13[%c32_155, %c0_156], %134 {strides = array<i32>} : memref<72x256xf32, #tpu.memory_space<vmem>>, vector<8x256xf32>,
    %c0_157 = arith.constant 0 : index
    %c129_158 = arith.constant 129 : index
    %136 = vector.load %arg12[%c0_157, %c129_158] : memref<8x512xf32, #tpu.memory_space<vmem>>, vector<8x256xf32>
    %c2_159 = arith.constant 2 : index
    %c0_160 = arith.constant 0 : index
    %137 = vector.load %arg2[%c2_159, %c0_160] : memref<3x256xf32, #tpu.memory_space<vmem>>, vector<1x256xf32>
    %138 = vector.broadcast %137 : vector<1x256xf32> to vector<8x256xf32>
    %139 = arith.mulf %136, %138 : vector<8x256xf32>
    %c40_161 = arith.constant 40 : index
    %c0_162 = arith.constant 0 : index
    %140 = vector.load %arg13[%c40_161, %c0_162] : memref<72x256xf32, #tpu.memory_space<vmem>>, vector<8x256xf32>
    tpu.vector_store %arg13[%c40_161, %c0_162], %139 {strides = array<i32>} : memref<72x256xf32, #tpu.memory_space<vmem>>, vector<8x256xf32>,
    %c0_163 = arith.constant 0 : index
    %c143_164 = arith.constant 143 : index
    %141 = vector.load %arg12[%c0_163, %c143_164] : memref<8x512xf32, #tpu.memory_space<vmem>>, vector<8x256xf32>
    %c0_165 = arith.constant 0 : index
    %c0_166 = arith.constant 0 : index
    %142 = vector.load %arg2[%c0_165, %c0_166] : memref<3x256xf32, #tpu.memory_space<vmem>>, vector<1x256xf32>
    %143 = vector.broadcast %142 : vector<1x256xf32> to vector<8x256xf32>
    %144 = arith.mulf %141, %143 : vector<8x256xf32>
    %c48_167 = arith.constant 48 : index
    %c0_168 = arith.constant 0 : index
    %145 = vector.load %arg13[%c48_167, %c0_168] : memref<72x256xf32, #tpu.memory_space<vmem>>, vector<8x256xf32>
    tpu.vector_store %arg13[%c48_167, %c0_168], %144 {strides = array<i32>} : memref<72x256xf32, #tpu.memory_space<vmem>>, vector<8x256xf32>,
    %c0_169 = arith.constant 0 : index
    %c144_170 = arith.constant 144 : index
    %146 = vector.load %arg12[%c0_169, %c144_170] : memref<8x512xf32, #tpu.memory_space<vmem>>, vector<8x256xf32>
    %c56_171 = arith.constant 56 : index
    %c0_172 = arith.constant 0 : index
    %147 = vector.load %arg13[%c56_171, %c0_172] : memref<72x256xf32, #tpu.memory_space<vmem>>, vector<8x256xf32>
    tpu.vector_store %arg13[%c56_171, %c0_172], %146 {strides = array<i32>} : memref<72x256xf32, #tpu.memory_space<vmem>>, vector<8x256xf32>,
    %c0_173 = arith.constant 0 : index
    %c145_174 = arith.constant 145 : index
    %148 = vector.load %arg12[%c0_173, %c145_174] : memref<8x512xf32, #tpu.memory_space<vmem>>, vector<8x256xf32>
    %c2_175 = arith.constant 2 : index
    %c0_176 = arith.constant 0 : index
    %149 = vector.load %arg2[%c2_175, %c0_176] : memref<3x256xf32, #tpu.memory_space<vmem>>, vector<1x256xf32>
    %150 = vector.broadcast %149 : vector<1x256xf32> to vector<8x256xf32>
    %151 = arith.mulf %148, %150 : vector<8x256xf32>
    %c64_177 = arith.constant 64 : index
    %c0_178 = arith.constant 0 : index
    %152 = vector.load %arg13[%c64_177, %c0_178] : memref<72x256xf32, #tpu.memory_space<vmem>>, vector<8x256xf32>
    tpu.vector_store %arg13[%c64_177, %c0_178], %151 {strides = array<i32>} : memref<72x256xf32, #tpu.memory_space<vmem>>, vector<8x256xf32>,
    %c0_179 = arith.constant 0 : index
    %c0_180 = arith.constant 0 : index
    %153 = vector.load %arg13[%c0_179, %c0_180] : memref<72x256xf32, #tpu.memory_space<vmem>>, vector<72x256xf32>
    %cst_181 = arith.constant dense<0.000000e+00> : vector<8x256xf32>
    %154 = tpu.matmul %114, %153, %cst_181 {dimension_numbers = #tpu.dot_dimension_numbers<[1], [0], [0], [1], [0, 0, 1, 1], [], []>} : vector<8x72xf32>, vector<72x256xf32>, vector<8x256xf32> -> vector<8x256xf32>
    %155 = vector.broadcast %116 : vector<8x1xf32> to vector<8x256xf32>
    %156 = arith.addf %154, %155 : vector<8x256xf32>
    %cst_182 = arith.constant 0.000000e+00 : f32
    %157 = vector.broadcast %cst_182 : f32 to vector<8x256xf32>
    %158 = arith.maximumf %156, %157 : vector<8x256xf32>
    %159 = arith.addf %158, %48 : vector<8x256xf32>
    %c1_183 = arith.constant 1 : index
    %c0_184 = arith.constant 0 : index
    %c0_185 = arith.constant 0 : index
    %c0_186 = arith.constant 0 : index
    %160 = vector.load %arg7[%c1_183, %c0_184, %c0_185, %c0_186] : memref<2x2x8x1xf32, #tpu.memory_space<vmem>>, vector<1x1x8x1xf32>
    %161 = vector.shape_cast %160 : vector<1x1x8x1xf32> to vector<8x1xf32>
    %162 = vector.broadcast %161 : vector<8x1xf32> to vector<8x256xf32>
    %163 = arith.mulf %159, %162 : vector<8x256xf32>
    %c1_187 = arith.constant 1 : index
    %c0_188 = arith.constant 0 : index
    %c0_189 = arith.constant 0 : index
    %c0_190 = arith.constant 0 : index
    %164 = vector.load %arg8[%c1_187, %c0_188, %c0_189, %c0_190] : memref<2x2x8x1xf32, #tpu.memory_space<vmem>>, vector<1x1x8x1xf32>
    %165 = vector.shape_cast %164 : vector<1x1x8x1xf32> to vector<8x1xf32>
    %166 = vector.broadcast %165 : vector<8x1xf32> to vector<8x256xf32>
    %167 = arith.addf %163, %166 : vector<8x256xf32>
    %c0_191 = arith.constant 0 : index
    %c128_192 = arith.constant 128 : index
    %168 = vector.load %arg12[%c0_191, %c128_192] : memref<8x512xf32, #tpu.memory_space<vmem>>, vector<8x256xf32>
    tpu.vector_store %arg12[%c0_191, %c128_192], %167 {strides = array<i32>} : memref<8x512xf32, #tpu.memory_space<vmem>>, vector<8x256xf32>,
    %c1_193 = arith.constant 1 : index
    %c0_194 = arith.constant 0 : index
    %c0_195 = arith.constant 0 : index
    %c0_196 = arith.constant 0 : index
    %169 = vector.load %arg5[%c1_193, %c0_194, %c0_195, %c0_196] : memref<2x2x8x72xf32, #tpu.memory_space<vmem>>, vector<1x1x8x72xf32>
    %170 = vector.shape_cast %169 : vector<1x1x8x72xf32> to vector<8x72xf32>
    %c1_197 = arith.constant 1 : index
    %c0_198 = arith.constant 0 : index
    %c0_199 = arith.constant 0 : index
    %c0_200 = arith.constant 0 : index
    %171 = vector.load %arg6[%c1_197, %c0_198, %c0_199, %c0_200] : memref<2x2x8x1xf32, #tpu.memory_space<vmem>>, vector<1x1x8x1xf32>
    %172 = vector.shape_cast %171 : vector<1x1x8x1xf32> to vector<8x1xf32>
    %c0_201 = arith.constant 0 : index
    %c111_202 = arith.constant 111 : index
    %173 = vector.load %arg12[%c0_201, %c111_202] : memref<8x512xf32, #tpu.memory_space<vmem>>, vector<8x256xf32>
    %c0_203 = arith.constant 0 : index
    %c0_204 = arith.constant 0 : index
    %174 = vector.load %arg2[%c0_203, %c0_204] : memref<3x256xf32, #tpu.memory_space<vmem>>, vector<1x256xf32>
    %175 = vector.broadcast %174 : vector<1x256xf32> to vector<8x256xf32>
    %176 = arith.mulf %173, %175 : vector<8x256xf32>
    %c0_205 = arith.constant 0 : index
    %c0_206 = arith.constant 0 : index
    %177 = vector.load %arg13[%c0_205, %c0_206] : memref<72x256xf32, #tpu.memory_space<vmem>>, vector<8x256xf32>
    tpu.vector_store %arg13[%c0_205, %c0_206], %176 {strides = array<i32>} : memref<72x256xf32, #tpu.memory_space<vmem>>, vector<8x256xf32>,
    %c0_207 = arith.constant 0 : index
    %c112_208 = arith.constant 112 : index
    %178 = vector.load %arg12[%c0_207, %c112_208] : memref<8x512xf32, #tpu.memory_space<vmem>>, vector<8x256xf32>
    %c8_209 = arith.constant 8 : index
    %c0_210 = arith.constant 0 : index
    %179 = vector.load %arg13[%c8_209, %c0_210] : memref<72x256xf32, #tpu.memory_space<vmem>>, vector<8x256xf32>
    tpu.vector_store %arg13[%c8_209, %c0_210], %178 {strides = array<i32>} : memref<72x256xf32, #tpu.memory_space<vmem>>, vector<8x256xf32>,
    %c0_211 = arith.constant 0 : index
    %c113_212 = arith.constant 113 : index
    %180 = vector.load %arg12[%c0_211, %c113_212] : memref<8x512xf32, #tpu.memory_space<vmem>>, vector<8x256xf32>
    %c2_213 = arith.constant 2 : index
    %c0_214 = arith.constant 0 : index
    %181 = vector.load %arg2[%c2_213, %c0_214] : memref<3x256xf32, #tpu.memory_space<vmem>>, vector<1x256xf32>
    %182 = vector.broadcast %181 : vector<1x256xf32> to vector<8x256xf32>
    %183 = arith.mulf %180, %182 : vector<8x256xf32>
    %c16_215 = arith.constant 16 : index
    %c0_216 = arith.constant 0 : index
    %184 = vector.load %arg13[%c16_215, %c0_216] : memref<72x256xf32, #tpu.memory_space<vmem>>, vector<8x256xf32>
    tpu.vector_store %arg13[%c16_215, %c0_216], %183 {strides = array<i32>} : memref<72x256xf32, #tpu.memory_space<vmem>>, vector<8x256xf32>,
    %c0_217 = arith.constant 0 : index
    %c127_218 = arith.constant 127 : index
    %185 = vector.load %arg12[%c0_217, %c127_218] : memref<8x512xf32, #tpu.memory_space<vmem>>, vector<8x256xf32>
    %c0_219 = arith.constant 0 : index
    %c0_220 = arith.constant 0 : index
    %186 = vector.load %arg2[%c0_219, %c0_220] : memref<3x256xf32, #tpu.memory_space<vmem>>, vector<1x256xf32>
    %187 = vector.broadcast %186 : vector<1x256xf32> to vector<8x256xf32>
    %188 = arith.mulf %185, %187 : vector<8x256xf32>
    %c24_221 = arith.constant 24 : index
    %c0_222 = arith.constant 0 : index
    %189 = vector.load %arg13[%c24_221, %c0_222] : memref<72x256xf32, #tpu.memory_space<vmem>>, vector<8x256xf32>
    tpu.vector_store %arg13[%c24_221, %c0_222], %188 {strides = array<i32>} : memref<72x256xf32, #tpu.memory_space<vmem>>, vector<8x256xf32>,
    %c0_223 = arith.constant 0 : index
    %c128_224 = arith.constant 128 : index
    %190 = vector.load %arg12[%c0_223, %c128_224] : memref<8x512xf32, #tpu.memory_space<vmem>>, vector<8x256xf32>
    %c32_225 = arith.constant 32 : index
    %c0_226 = arith.constant 0 : index
    %191 = vector.load %arg13[%c32_225, %c0_226] : memref<72x256xf32, #tpu.memory_space<vmem>>, vector<8x256xf32>
    tpu.vector_store %arg13[%c32_225, %c0_226], %190 {strides = array<i32>} : memref<72x256xf32, #tpu.memory_space<vmem>>, vector<8x256xf32>,
    %c0_227 = arith.constant 0 : index
    %c129_228 = arith.constant 129 : index
    %192 = vector.load %arg12[%c0_227, %c129_228] : memref<8x512xf32, #tpu.memory_space<vmem>>, vector<8x256xf32>
    %c2_229 = arith.constant 2 : index
    %c0_230 = arith.constant 0 : index
    %193 = vector.load %arg2[%c2_229, %c0_230] : memref<3x256xf32, #tpu.memory_space<vmem>>, vector<1x256xf32>
    %194 = vector.broadcast %193 : vector<1x256xf32> to vector<8x256xf32>
    %195 = arith.mulf %192, %194 : vector<8x256xf32>
    %c40_231 = arith.constant 40 : index
    %c0_232 = arith.constant 0 : index
    %196 = vector.load %arg13[%c40_231, %c0_232] : memref<72x256xf32, #tpu.memory_space<vmem>>, vector<8x256xf32>
    tpu.vector_store %arg13[%c40_231, %c0_232], %195 {strides = array<i32>} : memref<72x256xf32, #tpu.memory_space<vmem>>, vector<8x256xf32>,
    %c0_233 = arith.constant 0 : index
    %c143_234 = arith.constant 143 : index
    %197 = vector.load %arg12[%c0_233, %c143_234] : memref<8x512xf32, #tpu.memory_space<vmem>>, vector<8x256xf32>
    %c0_235 = arith.constant 0 : index
    %c0_236 = arith.constant 0 : index
    %198 = vector.load %arg2[%c0_235, %c0_236] : memref<3x256xf32, #tpu.memory_space<vmem>>, vector<1x256xf32>
    %199 = vector.broadcast %198 : vector<1x256xf32> to vector<8x256xf32>
    %200 = arith.mulf %197, %199 : vector<8x256xf32>
    %c48_237 = arith.constant 48 : index
    %c0_238 = arith.constant 0 : index
    %201 = vector.load %arg13[%c48_237, %c0_238] : memref<72x256xf32, #tpu.memory_space<vmem>>, vector<8x256xf32>
    tpu.vector_store %arg13[%c48_237, %c0_238], %200 {strides = array<i32>} : memref<72x256xf32, #tpu.memory_space<vmem>>, vector<8x256xf32>,
    %c0_239 = arith.constant 0 : index
    %c144_240 = arith.constant 144 : index
    %202 = vector.load %arg12[%c0_239, %c144_240] : memref<8x512xf32, #tpu.memory_space<vmem>>, vector<8x256xf32>
    %c56_241 = arith.constant 56 : index
    %c0_242 = arith.constant 0 : index
    %203 = vector.load %arg13[%c56_241, %c0_242] : memref<72x256xf32, #tpu.memory_space<vmem>>, vector<8x256xf32>
    tpu.vector_store %arg13[%c56_241, %c0_242], %202 {strides = array<i32>} : memref<72x256xf32, #tpu.memory_space<vmem>>, vector<8x256xf32>,
    %c0_243 = arith.constant 0 : index
    %c145_244 = arith.constant 145 : index
    %204 = vector.load %arg12[%c0_243, %c145_244] : memref<8x512xf32, #tpu.memory_space<vmem>>, vector<8x256xf32>
    %c2_245 = arith.constant 2 : index
    %c0_246 = arith.constant 0 : index
    %205 = vector.load %arg2[%c2_245, %c0_246] : memref<3x256xf32, #tpu.memory_space<vmem>>, vector<1x256xf32>
    %206 = vector.broadcast %205 : vector<1x256xf32> to vector<8x256xf32>
    %207 = arith.mulf %204, %206 : vector<8x256xf32>
    %c64_247 = arith.constant 64 : index
    %c0_248 = arith.constant 0 : index
    %208 = vector.load %arg13[%c64_247, %c0_248] : memref<72x256xf32, #tpu.memory_space<vmem>>, vector<8x256xf32>
    tpu.vector_store %arg13[%c64_247, %c0_248], %207 {strides = array<i32>} : memref<72x256xf32, #tpu.memory_space<vmem>>, vector<8x256xf32>,
    %c0_249 = arith.constant 0 : index
    %c0_250 = arith.constant 0 : index
    %209 = vector.load %arg13[%c0_249, %c0_250] : memref<72x256xf32, #tpu.memory_space<vmem>>, vector<72x256xf32>
    %cst_251 = arith.constant dense<0.000000e+00> : vector<8x256xf32>
    %210 = tpu.matmul %170, %209, %cst_251 {dimension_numbers = #tpu.dot_dimension_numbers<[1], [0], [0], [1], [0, 0, 1, 1], [], []>} : vector<8x72xf32>, vector<72x256xf32>, vector<8x256xf32> -> vector<8x256xf32>
    %211 = vector.broadcast %172 : vector<8x1xf32> to vector<8x256xf32>
    %212 = arith.addf %210, %211 : vector<8x256xf32>
    %cst_252 = arith.constant 0.000000e+00 : f32
    %213 = vector.broadcast %cst_252 : f32 to vector<8x256xf32>
    %214 = arith.maximumf %212, %213 : vector<8x256xf32>
    %c1_253 = arith.constant 1 : index
    %c1_254 = arith.constant 1 : index
    %c0_255 = arith.constant 0 : index
    %c0_256 = arith.constant 0 : index
    %215 = vector.load %arg7[%c1_253, %c1_254, %c0_255, %c0_256] : memref<2x2x8x1xf32, #tpu.memory_space<vmem>>, vector<1x1x8x1xf32>
    %216 = vector.shape_cast %215 : vector<1x1x8x1xf32> to vector<8x1xf32>
    %217 = vector.broadcast %216 : vector<8x1xf32> to vector<8x256xf32>
    %218 = arith.mulf %214, %217 : vector<8x256xf32>
    %c1_257 = arith.constant 1 : index
    %c1_258 = arith.constant 1 : index
    %c0_259 = arith.constant 0 : index
    %c0_260 = arith.constant 0 : index
    %219 = vector.load %arg8[%c1_257, %c1_258, %c0_259, %c0_260] : memref<2x2x8x1xf32, #tpu.memory_space<vmem>>, vector<1x1x8x1xf32>
    %220 = vector.shape_cast %219 : vector<1x1x8x1xf32> to vector<8x1xf32>
    %221 = vector.broadcast %220 : vector<8x1xf32> to vector<8x256xf32>
    %222 = arith.addf %218, %221 : vector<8x256xf32>
    %c0_261 = arith.constant 0 : index
    %c128_262 = arith.constant 128 : index
    %223 = vector.load %arg12[%c0_261, %c128_262] : memref<8x512xf32, #tpu.memory_space<vmem>>, vector<8x256xf32>
    tpu.vector_store %arg12[%c0_261, %c128_262], %222 {strides = array<i32>} : memref<8x512xf32, #tpu.memory_space<vmem>>, vector<8x256xf32>,
    %c1_263 = arith.constant 1 : index
    %c1_264 = arith.constant 1 : index
    %c0_265 = arith.constant 0 : index
    %c0_266 = arith.constant 0 : index
    %224 = vector.load %arg5[%c1_263, %c1_264, %c0_265, %c0_266] : memref<2x2x8x72xf32, #tpu.memory_space<vmem>>, vector<1x1x8x72xf32>
    %225 = vector.shape_cast %224 : vector<1x1x8x72xf32> to vector<8x72xf32>
    %c1_267 = arith.constant 1 : index
    %c1_268 = arith.constant 1 : index
    %c0_269 = arith.constant 0 : index
    %c0_270 = arith.constant 0 : index
    %226 = vector.load %arg6[%c1_267, %c1_268, %c0_269, %c0_270] : memref<2x2x8x1xf32, #tpu.memory_space<vmem>>, vector<1x1x8x1xf32>
    %227 = vector.shape_cast %226 : vector<1x1x8x1xf32> to vector<8x1xf32>
    %c0_271 = arith.constant 0 : index
    %c111_272 = arith.constant 111 : index
    %228 = vector.load %arg12[%c0_271, %c111_272] : memref<8x512xf32, #tpu.memory_space<vmem>>, vector<8x256xf32>
    %c0_273 = arith.constant 0 : index
    %c0_274 = arith.constant 0 : index
    %229 = vector.load %arg2[%c0_273, %c0_274] : memref<3x256xf32, #tpu.memory_space<vmem>>, vector<1x256xf32>
    %230 = vector.broadcast %229 : vector<1x256xf32> to vector<8x256xf32>
    %231 = arith.mulf %228, %230 : vector<8x256xf32>
    %c0_275 = arith.constant 0 : index
    %c0_276 = arith.constant 0 : index
    %232 = vector.load %arg13[%c0_275, %c0_276] : memref<72x256xf32, #tpu.memory_space<vmem>>, vector<8x256xf32>
    tpu.vector_store %arg13[%c0_275, %c0_276], %231 {strides = array<i32>} : memref<72x256xf32, #tpu.memory_space<vmem>>, vector<8x256xf32>,
    %c0_277 = arith.constant 0 : index
    %c112_278 = arith.constant 112 : index
    %233 = vector.load %arg12[%c0_277, %c112_278] : memref<8x512xf32, #tpu.memory_space<vmem>>, vector<8x256xf32>
    %c8_279 = arith.constant 8 : index
    %c0_280 = arith.constant 0 : index
    %234 = vector.load %arg13[%c8_279, %c0_280] : memref<72x256xf32, #tpu.memory_space<vmem>>, vector<8x256xf32>
    tpu.vector_store %arg13[%c8_279, %c0_280], %233 {strides = array<i32>} : memref<72x256xf32, #tpu.memory_space<vmem>>, vector<8x256xf32>,
    %c0_281 = arith.constant 0 : index
    %c113_282 = arith.constant 113 : index
    %235 = vector.load %arg12[%c0_281, %c113_282] : memref<8x512xf32, #tpu.memory_space<vmem>>, vector<8x256xf32>
    %c2_283 = arith.constant 2 : index
    %c0_284 = arith.constant 0 : index
    %236 = vector.load %arg2[%c2_283, %c0_284] : memref<3x256xf32, #tpu.memory_space<vmem>>, vector<1x256xf32>
    %237 = vector.broadcast %236 : vector<1x256xf32> to vector<8x256xf32>
    %238 = arith.mulf %235, %237 : vector<8x256xf32>
    %c16_285 = arith.constant 16 : index
    %c0_286 = arith.constant 0 : index
    %239 = vector.load %arg13[%c16_285, %c0_286] : memref<72x256xf32, #tpu.memory_space<vmem>>, vector<8x256xf32>
    tpu.vector_store %arg13[%c16_285, %c0_286], %238 {strides = array<i32>} : memref<72x256xf32, #tpu.memory_space<vmem>>, vector<8x256xf32>,
    %c0_287 = arith.constant 0 : index
    %c127_288 = arith.constant 127 : index
    %240 = vector.load %arg12[%c0_287, %c127_288] : memref<8x512xf32, #tpu.memory_space<vmem>>, vector<8x256xf32>
    %c0_289 = arith.constant 0 : index
    %c0_290 = arith.constant 0 : index
    %241 = vector.load %arg2[%c0_289, %c0_290] : memref<3x256xf32, #tpu.memory_space<vmem>>, vector<1x256xf32>
    %242 = vector.broadcast %241 : vector<1x256xf32> to vector<8x256xf32>
    %243 = arith.mulf %240, %242 : vector<8x256xf32>
    %c24_291 = arith.constant 24 : index
    %c0_292 = arith.constant 0 : index
    %244 = vector.load %arg13[%c24_291, %c0_292] : memref<72x256xf32, #tpu.memory_space<vmem>>, vector<8x256xf32>
    tpu.vector_store %arg13[%c24_291, %c0_292], %243 {strides = array<i32>} : memref<72x256xf32, #tpu.memory_space<vmem>>, vector<8x256xf32>,
    %c0_293 = arith.constant 0 : index
    %c128_294 = arith.constant 128 : index
    %245 = vector.load %arg12[%c0_293, %c128_294] : memref<8x512xf32, #tpu.memory_space<vmem>>, vector<8x256xf32>
    %c32_295 = arith.constant 32 : index
    %c0_296 = arith.constant 0 : index
    %246 = vector.load %arg13[%c32_295, %c0_296] : memref<72x256xf32, #tpu.memory_space<vmem>>, vector<8x256xf32>
    tpu.vector_store %arg13[%c32_295, %c0_296], %245 {strides = array<i32>} : memref<72x256xf32, #tpu.memory_space<vmem>>, vector<8x256xf32>,
    %c0_297 = arith.constant 0 : index
    %c129_298 = arith.constant 129 : index
    %247 = vector.load %arg12[%c0_297, %c129_298] : memref<8x512xf32, #tpu.memory_space<vmem>>, vector<8x256xf32>
    %c2_299 = arith.constant 2 : index
    %c0_300 = arith.constant 0 : index
    %248 = vector.load %arg2[%c2_299, %c0_300] : memref<3x256xf32, #tpu.memory_space<vmem>>, vector<1x256xf32>
    %249 = vector.broadcast %248 : vector<1x256xf32> to vector<8x256xf32>
    %250 = arith.mulf %247, %249 : vector<8x256xf32>
    %c40_301 = arith.constant 40 : index
    %c0_302 = arith.constant 0 : index
    %251 = vector.load %arg13[%c40_301, %c0_302] : memref<72x256xf32, #tpu.memory_space<vmem>>, vector<8x256xf32>
    tpu.vector_store %arg13[%c40_301, %c0_302], %250 {strides = array<i32>} : memref<72x256xf32, #tpu.memory_space<vmem>>, vector<8x256xf32>,
    %c0_303 = arith.constant 0 : index
    %c143_304 = arith.constant 143 : index
    %252 = vector.load %arg12[%c0_303, %c143_304] : memref<8x512xf32, #tpu.memory_space<vmem>>, vector<8x256xf32>
    %c0_305 = arith.constant 0 : index
    %c0_306 = arith.constant 0 : index
    %253 = vector.load %arg2[%c0_305, %c0_306] : memref<3x256xf32, #tpu.memory_space<vmem>>, vector<1x256xf32>
    %254 = vector.broadcast %253 : vector<1x256xf32> to vector<8x256xf32>
    %255 = arith.mulf %252, %254 : vector<8x256xf32>
    %c48_307 = arith.constant 48 : index
    %c0_308 = arith.constant 0 : index
    %256 = vector.load %arg13[%c48_307, %c0_308] : memref<72x256xf32, #tpu.memory_space<vmem>>, vector<8x256xf32>
    tpu.vector_store %arg13[%c48_307, %c0_308], %255 {strides = array<i32>} : memref<72x256xf32, #tpu.memory_space<vmem>>, vector<8x256xf32>,
    %c0_309 = arith.constant 0 : index
    %c144_310 = arith.constant 144 : index
    %257 = vector.load %arg12[%c0_309, %c144_310] : memref<8x512xf32, #tpu.memory_space<vmem>>, vector<8x256xf32>
    %c56_311 = arith.constant 56 : index
    %c0_312 = arith.constant 0 : index
    %258 = vector.load %arg13[%c56_311, %c0_312] : memref<72x256xf32, #tpu.memory_space<vmem>>, vector<8x256xf32>
    tpu.vector_store %arg13[%c56_311, %c0_312], %257 {strides = array<i32>} : memref<72x256xf32, #tpu.memory_space<vmem>>, vector<8x256xf32>,
    %c0_313 = arith.constant 0 : index
    %c145_314 = arith.constant 145 : index
    %259 = vector.load %arg12[%c0_313, %c145_314] : memref<8x512xf32, #tpu.memory_space<vmem>>, vector<8x256xf32>
    %c2_315 = arith.constant 2 : index
    %c0_316 = arith.constant 0 : index
    %260 = vector.load %arg2[%c2_315, %c0_316] : memref<3x256xf32, #tpu.memory_space<vmem>>, vector<1x256xf32>
    %261 = vector.broadcast %260 : vector<1x256xf32> to vector<8x256xf32>
    %262 = arith.mulf %259, %261 : vector<8x256xf32>
    %c64_317 = arith.constant 64 : index
    %c0_318 = arith.constant 0 : index
    %263 = vector.load %arg13[%c64_317, %c0_318] : memref<72x256xf32, #tpu.memory_space<vmem>>, vector<8x256xf32>
    tpu.vector_store %arg13[%c64_317, %c0_318], %262 {strides = array<i32>} : memref<72x256xf32, #tpu.memory_space<vmem>>, vector<8x256xf32>,
    %c0_319 = arith.constant 0 : index
    %c0_320 = arith.constant 0 : index
    %264 = vector.load %arg13[%c0_319, %c0_320] : memref<72x256xf32, #tpu.memory_space<vmem>>, vector<72x256xf32>
    %cst_321 = arith.constant dense<0.000000e+00> : vector<8x256xf32>
    %265 = tpu.matmul %225, %264, %cst_321 {dimension_numbers = #tpu.dot_dimension_numbers<[1], [0], [0], [1], [0, 0, 1, 1], [], []>} : vector<8x72xf32>, vector<72x256xf32>, vector<8x256xf32> -> vector<8x256xf32>
    %266 = vector.broadcast %227 : vector<8x1xf32> to vector<8x256xf32>
    %267 = arith.addf %265, %266 : vector<8x256xf32>
    %cst_322 = arith.constant 0.000000e+00 : f32
    %268 = vector.broadcast %cst_322 : f32 to vector<8x256xf32>
    %269 = arith.maximumf %267, %268 : vector<8x256xf32>
    %270 = arith.addf %269, %159 : vector<8x256xf32>
    %c0_323 = arith.constant 0 : index
    %c128_324 = arith.constant 128 : index
    %271 = vector.load %arg12[%c0_323, %c128_324] : memref<8x512xf32, #tpu.memory_space<vmem>>, vector<8x256xf32>
    tpu.vector_store %arg12[%c0_323, %c128_324], %270 {strides = array<i32>} : memref<8x512xf32, #tpu.memory_space<vmem>>, vector<8x256xf32>,
    %c0_325 = arith.constant 0 : index
    %c0_326 = arith.constant 0 : index
    %272 = vector.load %arg9[%c0_325, %c0_326] : memref<8x72xf32, #tpu.memory_space<vmem>>, vector<8x72xf32>
    %c0_327 = arith.constant 0 : index
    %c0_328 = arith.constant 0 : index
    %273 = vector.load %arg10[%c0_327, %c0_328] : memref<8x1xf32, #tpu.memory_space<vmem>>, vector<8x1xf32>
    %c0_329 = arith.constant 0 : index
    %c111_330 = arith.constant 111 : index
    %274 = vector.load %arg12[%c0_329, %c111_330] : memref<8x512xf32, #tpu.memory_space<vmem>>, vector<8x256xf32>
    %c0_331 = arith.constant 0 : index
    %c0_332 = arith.constant 0 : index
    %275 = vector.load %arg2[%c0_331, %c0_332] : memref<3x256xf32, #tpu.memory_space<vmem>>, vector<1x256xf32>
    %276 = vector.broadcast %275 : vector<1x256xf32> to vector<8x256xf32>
    %277 = arith.mulf %274, %276 : vector<8x256xf32>
    %c0_333 = arith.constant 0 : index
    %c0_334 = arith.constant 0 : index
    %278 = vector.load %arg13[%c0_333, %c0_334] : memref<72x256xf32, #tpu.memory_space<vmem>>, vector<8x256xf32>
    tpu.vector_store %arg13[%c0_333, %c0_334], %277 {strides = array<i32>} : memref<72x256xf32, #tpu.memory_space<vmem>>, vector<8x256xf32>,
    %c0_335 = arith.constant 0 : index
    %c112_336 = arith.constant 112 : index
    %279 = vector.load %arg12[%c0_335, %c112_336] : memref<8x512xf32, #tpu.memory_space<vmem>>, vector<8x256xf32>
    %c8_337 = arith.constant 8 : index
    %c0_338 = arith.constant 0 : index
    %280 = vector.load %arg13[%c8_337, %c0_338] : memref<72x256xf32, #tpu.memory_space<vmem>>, vector<8x256xf32>
    tpu.vector_store %arg13[%c8_337, %c0_338], %279 {strides = array<i32>} : memref<72x256xf32, #tpu.memory_space<vmem>>, vector<8x256xf32>,
    %c0_339 = arith.constant 0 : index
    %c113_340 = arith.constant 113 : index
    %281 = vector.load %arg12[%c0_339, %c113_340] : memref<8x512xf32, #tpu.memory_space<vmem>>, vector<8x256xf32>
    %c2_341 = arith.constant 2 : index
    %c0_342 = arith.constant 0 : index
    %282 = vector.load %arg2[%c2_341, %c0_342] : memref<3x256xf32, #tpu.memory_space<vmem>>, vector<1x256xf32>
    %283 = vector.broadcast %282 : vector<1x256xf32> to vector<8x256xf32>
    %284 = arith.mulf %281, %283 : vector<8x256xf32>
    %c16_343 = arith.constant 16 : index
    %c0_344 = arith.constant 0 : index
    %285 = vector.load %arg13[%c16_343, %c0_344] : memref<72x256xf32, #tpu.memory_space<vmem>>, vector<8x256xf32>
    tpu.vector_store %arg13[%c16_343, %c0_344], %284 {strides = array<i32>} : memref<72x256xf32, #tpu.memory_space<vmem>>, vector<8x256xf32>,
    %c0_345 = arith.constant 0 : index
    %c127_346 = arith.constant 127 : index
    %286 = vector.load %arg12[%c0_345, %c127_346] : memref<8x512xf32, #tpu.memory_space<vmem>>, vector<8x256xf32>
    %c0_347 = arith.constant 0 : index
    %c0_348 = arith.constant 0 : index
    %287 = vector.load %arg2[%c0_347, %c0_348] : memref<3x256xf32, #tpu.memory_space<vmem>>, vector<1x256xf32>
    %288 = vector.broadcast %287 : vector<1x256xf32> to vector<8x256xf32>
    %289 = arith.mulf %286, %288 : vector<8x256xf32>
    %c24_349 = arith.constant 24 : index
    %c0_350 = arith.constant 0 : index
    %290 = vector.load %arg13[%c24_349, %c0_350] : memref<72x256xf32, #tpu.memory_space<vmem>>, vector<8x256xf32>
    tpu.vector_store %arg13[%c24_349, %c0_350], %289 {strides = array<i32>} : memref<72x256xf32, #tpu.memory_space<vmem>>, vector<8x256xf32>,
    %c0_351 = arith.constant 0 : index
    %c128_352 = arith.constant 128 : index
    %291 = vector.load %arg12[%c0_351, %c128_352] : memref<8x512xf32, #tpu.memory_space<vmem>>, vector<8x256xf32>
    %c32_353 = arith.constant 32 : index
    %c0_354 = arith.constant 0 : index
    %292 = vector.load %arg13[%c32_353, %c0_354] : memref<72x256xf32, #tpu.memory_space<vmem>>, vector<8x256xf32>
    tpu.vector_store %arg13[%c32_353, %c0_354], %291 {strides = array<i32>} : memref<72x256xf32, #tpu.memory_space<vmem>>, vector<8x256xf32>,
    %c0_355 = arith.constant 0 : index
    %c129_356 = arith.constant 129 : index
    %293 = vector.load %arg12[%c0_355, %c129_356] : memref<8x512xf32, #tpu.memory_space<vmem>>, vector<8x256xf32>
    %c2_357 = arith.constant 2 : index
    %c0_358 = arith.constant 0 : index
    %294 = vector.load %arg2[%c2_357, %c0_358] : memref<3x256xf32, #tpu.memory_space<vmem>>, vector<1x256xf32>
    %295 = vector.broadcast %294 : vector<1x256xf32> to vector<8x256xf32>
    %296 = arith.mulf %293, %295 : vector<8x256xf32>
    %c40_359 = arith.constant 40 : index
    %c0_360 = arith.constant 0 : index
    %297 = vector.load %arg13[%c40_359, %c0_360] : memref<72x256xf32, #tpu.memory_space<vmem>>, vector<8x256xf32>
    tpu.vector_store %arg13[%c40_359, %c0_360], %296 {strides = array<i32>} : memref<72x256xf32, #tpu.memory_space<vmem>>, vector<8x256xf32>,
    %c0_361 = arith.constant 0 : index
    %c143_362 = arith.constant 143 : index
    %298 = vector.load %arg12[%c0_361, %c143_362] : memref<8x512xf32, #tpu.memory_space<vmem>>, vector<8x256xf32>
    %c0_363 = arith.constant 0 : index
    %c0_364 = arith.constant 0 : index
    %299 = vector.load %arg2[%c0_363, %c0_364] : memref<3x256xf32, #tpu.memory_space<vmem>>, vector<1x256xf32>
    %300 = vector.broadcast %299 : vector<1x256xf32> to vector<8x256xf32>
    %301 = arith.mulf %298, %300 : vector<8x256xf32>
    %c48_365 = arith.constant 48 : index
    %c0_366 = arith.constant 0 : index
    %302 = vector.load %arg13[%c48_365, %c0_366] : memref<72x256xf32, #tpu.memory_space<vmem>>, vector<8x256xf32>
    tpu.vector_store %arg13[%c48_365, %c0_366], %301 {strides = array<i32>} : memref<72x256xf32, #tpu.memory_space<vmem>>, vector<8x256xf32>,
    %c0_367 = arith.constant 0 : index
    %c144_368 = arith.constant 144 : index
    %303 = vector.load %arg12[%c0_367, %c144_368] : memref<8x512xf32, #tpu.memory_space<vmem>>, vector<8x256xf32>
    %c56_369 = arith.constant 56 : index
    %c0_370 = arith.constant 0 : index
    %304 = vector.load %arg13[%c56_369, %c0_370] : memref<72x256xf32, #tpu.memory_space<vmem>>, vector<8x256xf32>
    tpu.vector_store %arg13[%c56_369, %c0_370], %303 {strides = array<i32>} : memref<72x256xf32, #tpu.memory_space<vmem>>, vector<8x256xf32>,
    %c0_371 = arith.constant 0 : index
    %c145_372 = arith.constant 145 : index
    %305 = vector.load %arg12[%c0_371, %c145_372] : memref<8x512xf32, #tpu.memory_space<vmem>>, vector<8x256xf32>
    %c2_373 = arith.constant 2 : index
    %c0_374 = arith.constant 0 : index
    %306 = vector.load %arg2[%c2_373, %c0_374] : memref<3x256xf32, #tpu.memory_space<vmem>>, vector<1x256xf32>
    %307 = vector.broadcast %306 : vector<1x256xf32> to vector<8x256xf32>
    %308 = arith.mulf %305, %307 : vector<8x256xf32>
    %c64_375 = arith.constant 64 : index
    %c0_376 = arith.constant 0 : index
    %309 = vector.load %arg13[%c64_375, %c0_376] : memref<72x256xf32, #tpu.memory_space<vmem>>, vector<8x256xf32>
    tpu.vector_store %arg13[%c64_375, %c0_376], %308 {strides = array<i32>} : memref<72x256xf32, #tpu.memory_space<vmem>>, vector<8x256xf32>,
    %c0_377 = arith.constant 0 : index
    %c0_378 = arith.constant 0 : index
    %310 = vector.load %arg13[%c0_377, %c0_378] : memref<72x256xf32, #tpu.memory_space<vmem>>, vector<72x256xf32>
    %cst_379 = arith.constant dense<0.000000e+00> : vector<8x256xf32>
    %311 = tpu.matmul %272, %310, %cst_379 {dimension_numbers = #tpu.dot_dimension_numbers<[1], [0], [0], [1], [0, 0, 1, 1], [], []>} : vector<8x72xf32>, vector<72x256xf32>, vector<8x256xf32> -> vector<8x256xf32>
    %312 = vector.broadcast %273 : vector<8x1xf32> to vector<8x256xf32>
    %313 = arith.addf %311, %312 : vector<8x256xf32>
    %314 = vector.extract_strided_slice %313 {offsets = [0, 0], sizes = [3, 256], strides = [1, 1]} : vector<8x256xf32> to vector<3x256xf32>
    %c0_380 = arith.constant 0 : index
    %c0_381 = arith.constant 0 : index
    %c0_382 = arith.constant 0 : index
    %315 = vector.load %arg11[%c0_380, %c0_381, %c0_382] : memref<1x3x256xf32, #tpu.memory_space<vmem>>, vector<1x3x256xf32>
    %316 = vector.shape_cast %315 : vector<1x3x256xf32> to vector<3x256xf32>
    %317 = vector.shape_cast %314 : vector<3x256xf32> to vector<1x3x256xf32>
    tpu.vector_store %arg11[%c0_380, %c0_381, %c0_382], %317 {strides = array<i32>} : memref<1x3x256xf32, #tpu.memory_space<vmem>>, vector<1x3x256xf32>,
    return
  }
  func.func @transform_0(%arg0: i32) -> (i32, i32, i32) {
    %c0_i32 = arith.constant 0 : i32
    %c0_i32_0 = arith.constant 0 : i32
    %c0_i32_1 = arith.constant 0 : i32
    return %arg0, %c0_i32, %c0_i32_0 : i32, i32, i32
  }
  func.func @transform_1(%arg0: i32) -> (i32, i32) {
    %c0_i32 = arith.constant 0 : i32
    %c0_i32_0 = arith.constant 0 : i32
    %c0_i32_1 = arith.constant 0 : i32
    return %c0_i32, %c0_i32_0 : i32, i32
  }
  func.func @transform_2(%arg0: i32) -> (i32, i32) {
    %c0_i32 = arith.constant 0 : i32
    %c0_i32_0 = arith.constant 0 : i32
    %c0_i32_1 = arith.constant 0 : i32
    return %c0_i32, %c0_i32_0 : i32, i32
  }
  func.func @transform_3(%arg0: i32) -> (i32, i32) {
    %c0_i32 = arith.constant 0 : i32
    %c0_i32_0 = arith.constant 0 : i32
    %c0_i32_1 = arith.constant 0 : i32
    return %c0_i32, %c0_i32_0 : i32, i32
  }
  func.func @transform_4(%arg0: i32) -> (i32, i32, i32, i32) {
    %c0_i32 = arith.constant 0 : i32
    %c0_i32_0 = arith.constant 0 : i32
    %c0_i32_1 = arith.constant 0 : i32
    %c0_i32_2 = arith.constant 0 : i32
    %c0_i32_3 = arith.constant 0 : i32
    return %c0_i32, %c0_i32_0, %c0_i32_1, %c0_i32_2 : i32, i32, i32, i32
  }
  func.func @transform_5(%arg0: i32) -> (i32, i32, i32, i32) {
    %c0_i32 = arith.constant 0 : i32
    %c0_i32_0 = arith.constant 0 : i32
    %c0_i32_1 = arith.constant 0 : i32
    %c0_i32_2 = arith.constant 0 : i32
    %c0_i32_3 = arith.constant 0 : i32
    return %c0_i32, %c0_i32_0, %c0_i32_1, %c0_i32_2 : i32, i32, i32, i32
  }
  func.func @transform_6(%arg0: i32) -> (i32, i32, i32, i32) {
    %c0_i32 = arith.constant 0 : i32
    %c0_i32_0 = arith.constant 0 : i32
    %c0_i32_1 = arith.constant 0 : i32
    %c0_i32_2 = arith.constant 0 : i32
    %c0_i32_3 = arith.constant 0 : i32
    return %c0_i32, %c0_i32_0, %c0_i32_1, %c0_i32_2 : i32, i32, i32, i32
  }
  func.func @transform_7(%arg0: i32) -> (i32, i32, i32, i32) {
    %c0_i32 = arith.constant 0 : i32
    %c0_i32_0 = arith.constant 0 : i32
    %c0_i32_1 = arith.constant 0 : i32
    %c0_i32_2 = arith.constant 0 : i32
    %c0_i32_3 = arith.constant 0 : i32
    return %c0_i32, %c0_i32_0, %c0_i32_1, %c0_i32_2 : i32, i32, i32, i32
  }
  func.func @transform_8(%arg0: i32) -> (i32, i32) {
    %c0_i32 = arith.constant 0 : i32
    %c0_i32_0 = arith.constant 0 : i32
    %c0_i32_1 = arith.constant 0 : i32
    return %c0_i32, %c0_i32_0 : i32, i32
  }
  func.func @transform_9(%arg0: i32) -> (i32, i32) {
    %c0_i32 = arith.constant 0 : i32
    %c0_i32_0 = arith.constant 0 : i32
    %c0_i32_1 = arith.constant 0 : i32
    return %c0_i32, %c0_i32_0 : i32, i32
  }
  func.func @transform_10(%arg0: i32) -> (i32, i32, i32) {
    %c0_i32 = arith.constant 0 : i32
    %c0_i32_0 = arith.constant 0 : i32
    %c0_i32_1 = arith.constant 0 : i32
    return %arg0, %c0_i32, %c0_i32_0 : i32, i32, i32
  }
}

</mosaic_0001>

<llo_original>
// kernel: _lambda_.1
$region0: #{_lambda_.1}
  #allocation0 [shape = 'u32[]', space=smem, size = 0x4, offset = 0x4, fixed_abs, tag = 'smem constant byte address 0x4 - core index']
  #allocation1 [shape = 'u32[144,128]{1,0:T(1,128)}', space=vmem, size = 0x12000, scoped, tag = 'internal scratch']
  #allocation2 [shape = 'f32[8,512]{1,0:T(8,128)}', space=vmem, size = 0x4000, scoped, tag = 'scratch operand']
  #allocation3 [shape = 'f32[72,256]{1,0:T(8,128)}', space=vmem, size = 0x12000, scoped, tag = 'scratch operand']
  %s0 = inlined_call_operand.vmem [shape: f32[2,8,256], index: 0, kind: input, shape index: {}]
  %s1 = inlined_call_operand.vmem [shape: f32[3,256], index: 1, kind: input, shape index: {}]
  %s2 = inlined_call_operand.vmem [shape: f32[8,72], index: 2, kind: input, shape index: {}]
  %s3 = inlined_call_operand.vmem [shape: f32[8,1], index: 3, kind: input, shape index: {}]
  %s4 = inlined_call_operand.vmem [shape: f32[2,2,8,72], index: 4, kind: input, shape index: {}]
  %s5 = inlined_call_operand.vmem [shape: f32[2,2,8,1], index: 5, kind: input, shape index: {}]
  %s6 = inlined_call_operand.vmem [shape: f32[2,2,8,1], index: 6, kind: input, shape index: {}]
  %s7 = inlined_call_operand.vmem [shape: f32[2,2,8,1], index: 7, kind: input, shape index: {}]
  %s8 = inlined_call_operand.vmem [shape: f32[8,72], index: 8, kind: input, shape index: {}]
  %s9 = inlined_call_operand.vmem [shape: f32[8,1], index: 9, kind: input, shape index: {}]
  %s10 = inlined_call_operand.vmem [shape: f32[2,3,256], index: 10, kind: output, shape index: {}]
  %s11 = sld [smem:[#allocation0]]
  $region73: #{_lambda_.1} parent=0
    _
  %s13 = ssub.s32 1, %s11
  %s14 = scalar_select 0, %s13, %s11
  loop: start=0, step=1, limit=4
  $region2: #{_lambda_.1} parent=0 // loop_pre_header
    _
  $region3: #{_lambda_.1} parent=0 // loop_header
    %s16 = sphi 0, %s20
    %p17 = scmp.ge.s32.totalorder %s16, 4
    %s26 = sphi 0, %s28
    %s29 = sphi 0, %s26
    %s30 = sphi 0, %s29
    %s46 = sphi 0, %s30
    %s50 = sphi 0, %s50
    %s52 = sphi 0, %s50
    %s53 = sphi 0, %s52
    %s67 = sphi 0, %s53
    %s71 = sphi 0, %s71
    %s73 = sphi 0, %s71
    %s74 = sphi 0, %s73
    %s88 = sphi 0, %s74
    %s92 = sphi 0, %s92
    %s94 = sphi 0, %s92
    %s95 = sphi 0, %s94
    %s109 = sphi 0, %s95
    %s113 = sphi 0, %s113
    %s115 = sphi 0, %s113
    %s116 = sphi 0, %s115
    %s130 = sphi 0, %s116
    %s134 = sphi 0, %s134
    %s136 = sphi 0, %s134
    %s137 = sphi 0, %s136
    %s151 = sphi 0, %s137
    %s155 = sphi 0, %s155
    %s157 = sphi 0, %s155
    %s158 = sphi 0, %s157
    %s172 = sphi 0, %s158
    %s176 = sphi 0, %s176
    %s178 = sphi 0, %s176
    %s179 = sphi 0, %s178
    %s193 = sphi 0, %s179
    %s197 = sphi 0, %s197
    %s199 = sphi 0, %s197
    %s200 = sphi 0, %s199
    %s214 = sphi 0, %s200
    %s218 = sphi 0, %s218
    %s220 = sphi 0, %s218
    %s221 = sphi 0, %s220
    %s235 = sphi 0, %s221
    %s241 = sphi 0, %s243
    %s244 = sphi 0, %s241
    %s245 = sphi 0, %s244
    %s261 = sphi 0, %s245
  $region4: #{_lambda_.1} parent=0 // loop_header_branch
    %19 = sbr.rel (%p17) target = $region8
  $region5: #{_lambda_.1} parent=0 // loop_body
    %s21 = ssub.s32 %s16, 1
    %s22 = ssub.s32 %s16, 2
    %s23 = sadd.s32 %s16, 1
    %s24 = ssub.s32 %s16, %s23
    %p25 = scmp.eq.s32.totalorder %s24, 0
    %s27 = sadd.s32 %s26, 1
    %s28 = scalar_select %p25, %s26, %s27
    %p31 = pneg %p25
    %p32 = scmp.eq.s32.totalorder %s16, 1
    %p33 = por %p31, %p32
    %p34 = scmp.ne.s32.totalorder %s26, %s29
    %p35 = scmp.eq.s32.totalorder %s16, 0
    %p36 = por %p34, %p35
    %p37 = scmp.ne.s32.totalorder %s26, %s29
    %p38 = scmp.eq.s32.totalorder %s21, 1
    %p39 = por %p37, %p38
    %p40 = scmp.ne.s32.totalorder %s29, %s30
    %p41 = scmp.eq.s32.totalorder %s21, 0
    %p42 = por %p40, %p41
    %p43 = scmp.ne.s32.totalorder %s29, %s30
    %p44 = scmp.eq.s32.totalorder %s22, 1
    %p45 = por %p43, %p44
    %p47 = scmp.ne.s32.totalorder %s30, %s46
    %p48 = scmp.eq.s32.totalorder %s22, 0
    %p49 = por %p47, %p48
    %s51 = sadd.s32 %s50, 1
    %p54 = scmp.eq.s32.totalorder %s16, 1
    %p55 = scmp.ne.s32.totalorder %s50, %s52
    %p56 = scmp.eq.s32.totalorder %s16, 0
    %p57 = por %p55, %p56
    %p58 = scmp.ne.s32.totalorder %s50, %s52
    %p59 = scmp.eq.s32.totalorder %s21, 1
    %p60 = por %p58, %p59
    %p61 = scmp.ne.s32.totalorder %s52, %s53
    %p62 = scmp.eq.s32.totalorder %s21, 0
    %p63 = por %p61, %p62
    %p64 = scmp.ne.s32.totalorder %s52, %s53
    %p65 = scmp.eq.s32.totalorder %s22, 1
    %p66 = por %p64, %p65
    %p68 = scmp.ne.s32.totalorder %s53, %s67
    %p69 = scmp.eq.s32.totalorder %s22, 0
    %p70 = por %p68, %p69
    %s72 = sadd.s32 %s71, 1
    %p75 = scmp.eq.s32.totalorder %s16, 1
    %p76 = scmp.ne.s32.totalorder %s71, %s73
    %p77 = scmp.eq.s32.totalorder %s16, 0
    %p78 = por %p76, %p77
    %p79 = scmp.ne.s32.totalorder %s71, %s73
    %p80 = scmp.eq.s32.totalorder %s21, 1
    %p81 = por %p79, %p80
    %p82 = scmp.ne.s32.totalorder %s73, %s74
    %p83 = scmp.eq.s32.totalorder %s21, 0
    %p84 = por %p82, %p83
    %p85 = scmp.ne.s32.totalorder %s73, %s74
    %p86 = scmp.eq.s32.totalorder %s22, 1
    %p87 = por %p85, %p86
    %p89 = scmp.ne.s32.totalorder %s74, %s88
    %p90 = scmp.eq.s32.totalorder %s22, 0
    %p91 = por %p89, %p90
    %s93 = sadd.s32 %s92, 1
    %p96 = scmp.eq.s32.totalorder %s16, 1
    %p97 = scmp.ne.s32.totalorder %s92, %s94
    %p98 = scmp.eq.s32.totalorder %s16, 0
    %p99 = por %p97, %p98
    %p100 = scmp.ne.s32.totalorder %s92, %s94
    %p101 = scmp.eq.s32.totalorder %s21, 1
    %p102 = por %p100, %p101
    %p103 = scmp.ne.s32.totalorder %s94, %s95
    %p104 = scmp.eq.s32.totalorder %s21, 0
    %p105 = por %p103, %p104
    %p106 = scmp.ne.s32.totalorder %s94, %s95
    %p107 = scmp.eq.s32.totalorder %s22, 1
    %p108 = por %p106, %p107
    %p110 = scmp.ne.s32.totalorder %s95, %s109
    %p111 = scmp.eq.s32.totalorder %s22, 0
    %p112 = por %p110, %p111
    %s114 = sadd.s32 %s113, 1
    %p117 = scmp.eq.s32.totalorder %s16, 1
    %p118 = scmp.ne.s32.totalorder %s113, %s115
    %p119 = scmp.eq.s32.totalorder %s16, 0
    %p120 = por %p118, %p119
    %p121 = scmp.ne.s32.totalorder %s113, %s115
    %p122 = scmp.eq.s32.totalorder %s21, 1
    %p123 = por %p121, %p122
    %p124 = scmp.ne.s32.totalorder %s115, %s116
    %p125 = scmp.eq.s32.totalorder %s21, 0
    %p126 = por %p124, %p125
    %p127 = scmp.ne.s32.totalorder %s115, %s116
    %p128 = scmp.eq.s32.totalorder %s22, 1
    %p129 = por %p127, %p128
    %p131 = scmp.ne.s32.totalorder %s116, %s130
    %p132 = scmp.eq.s32.totalorder %s22, 0
    %p133 = por %p131, %p132
    %s135 = sadd.s32 %s134, 1
    %p138 = scmp.eq.s32.totalorder %s16, 1
    %p139 = scmp.ne.s32.totalorder %s134, %s136
    %p140 = scmp.eq.s32.totalorder %s16, 0
    %p141 = por %p139, %p140
    %p142 = scmp.ne.s32.totalorder %s134, %s136
    %p143 = scmp.eq.s32.totalorder %s21, 1
    %p144 = por %p142, %p143
    %p145 = scmp.ne.s32.totalorder %s136, %s137
    %p146 = scmp.eq.s32.totalorder %s21, 0
    %p147 = por %p145, %p146
    %p148 = scmp.ne.s32.totalorder %s136, %s137
    %p149 = scmp.eq.s32.totalorder %s22, 1
    %p150 = por %p148, %p149
    %p152 = scmp.ne.s32.totalorder %s137, %s151
    %p153 = scmp.eq.s32.totalorder %s22, 0
    %p154 = por %p152, %p153
    %s156 = sadd.s32 %s155, 1
    %p159 = scmp.eq.s32.totalorder %s16, 1
    %p160 = scmp.ne.s32.totalorder %s155, %s157
    %p161 = scmp.eq.s32.totalorder %s16, 0
    %p162 = por %p160, %p161
    %p163 = scmp.ne.s32.totalorder %s155, %s157
    %p164 = scmp.eq.s32.totalorder %s21, 1
    %p165 = por %p163, %p164
    %p166 = scmp.ne.s32.totalorder %s157, %s158
    %p167 = scmp.eq.s32.totalorder %s21, 0
    %p168 = por %p166, %p167
    %p169 = scmp.ne.s32.totalorder %s157, %s158
    %p170 = scmp.eq.s32.totalorder %s22, 1
    %p171 = por %p169, %p170
    %p173 = scmp.ne.s32.totalorder %s158, %s172
    %p174 = scmp.eq.s32.totalorder %s22, 0
    %p175 = por %p173, %p174
    %s177 = sadd.s32 %s176, 1
    %p180 = scmp.eq.s32.totalorder %s16, 1
    %p181 = scmp.ne.s32.totalorder %s176, %s178
    %p182 = scmp.eq.s32.totalorder %s16, 0
    %p183 = por %p181, %p182
    %p184 = scmp.ne.s32.totalorder %s176, %s178
    %p185 = scmp.eq.s32.totalorder %s21, 1
    %p186 = por %p184, %p185
    %p187 = scmp.ne.s32.totalorder %s178, %s179
    %p188 = scmp.eq.s32.totalorder %s21, 0
    %p189 = por %p187, %p188
    %p190 = scmp.ne.s32.totalorder %s178, %s179
    %p191 = scmp.eq.s32.totalorder %s22, 1
    %p192 = por %p190, %p191
    %p194 = scmp.ne.s32.totalorder %s179, %s193
    %p195 = scmp.eq.s32.totalorder %s22, 0
    %p196 = por %p194, %p195
    %s198 = sadd.s32 %s197, 1
    %p201 = scmp.eq.s32.totalorder %s16, 1
    %p202 = scmp.ne.s32.totalorder %s197, %s199
    %p203 = scmp.eq.s32.totalorder %s16, 0
    %p204 = por %p202, %p203
    %p205 = scmp.ne.s32.totalorder %s197, %s199
    %p206 = scmp.eq.s32.totalorder %s21, 1
    %p207 = por %p205, %p206
    %p208 = scmp.ne.s32.totalorder %s199, %s200
    %p209 = scmp.eq.s32.totalorder %s21, 0
    %p210 = por %p208, %p209
    %p211 = scmp.ne.s32.totalorder %s199, %s200
    %p212 = scmp.eq.s32.totalorder %s22, 1
    %p213 = por %p211, %p212
    %p215 = scmp.ne.s32.totalorder %s200, %s214
    %p216 = scmp.eq.s32.totalorder %s22, 0
    %p217 = por %p215, %p216
    %s219 = sadd.s32 %s218, 1
    %p222 = scmp.eq.s32.totalorder %s16, 1
    %p223 = scmp.ne.s32.totalorder %s218, %s220
    %p224 = scmp.eq.s32.totalorder %s16, 0
    %p225 = por %p223, %p224
    %p226 = scmp.ne.s32.totalorder %s218, %s220
    %p227 = scmp.eq.s32.totalorder %s21, 1
    %p228 = por %p226, %p227
    %p229 = scmp.ne.s32.totalorder %s220, %s221
    %p230 = scmp.eq.s32.totalorder %s21, 0
    %p231 = por %p229, %p230
    %p232 = scmp.ne.s32.totalorder %s220, %s221
    %p233 = scmp.eq.s32.totalorder %s22, 1
    %p234 = por %p232, %p233
    %p236 = scmp.ne.s32.totalorder %s221, %s235
    %p237 = scmp.eq.s32.totalorder %s22, 0
    %p238 = por %p236, %p237
    %s239 = ssub.s32 %s16, %s23
    %p240 = scmp.eq.s32.totalorder %s239, 0
    %s242 = sadd.s32 %s241, 1
    %s243 = scalar_select %p240, %s241, %s242
    %p246 = pneg %p240
    %p247 = scmp.eq.s32.totalorder %s16, 1
    %p248 = por %p246, %p247
    %p249 = scmp.ne.s32.totalorder %s241, %s244
    %p250 = scmp.eq.s32.totalorder %s16, 0
    %p251 = por %p249, %p250
    %p252 = scmp.ne.s32.totalorder %s241, %s244
    %p253 = scmp.eq.s32.totalorder %s21, 1
    %p254 = por %p252, %p253
    %p255 = scmp.ne.s32.totalorder %s244, %s245
    %p256 = scmp.eq.s32.totalorder %s21, 0
    %p257 = por %p255, %p256
    %p258 = scmp.ne.s32.totalorder %s244, %s245
    %p259 = scmp.eq.s32.totalorder %s22, 1
    %p260 = por %p258, %p259
    %p262 = scmp.ne.s32.totalorder %s245, %s261
    %p263 = scmp.eq.s32.totalorder %s22, 0
    %p264 = por %p262, %p263
    %p265 = scmp.le.s32.totalorder 1, %s16
    %p266 = scmp.lt.s32.totalorder %s16, 3
    %p267 = pnand %p265, %p266
    %p268 = pneg %p267
    // Predicated region
    $region9: #{_lambda_.1} parent=5 // pred_check
      _
    $region10: #{_lambda_.1} parent=5 // pred_check_branch
      %270 = sbr.rel (%p267) target = $region12
    $region11: #{_lambda_.1} parent=5 // pred_region
      %s271 = ssub.s32 %s16, 1
      // Predicated region
      $region13: #{_lambda_.1} parent=11 // pred_check
        %p272 = pneg %p63
      $region14: #{_lambda_.1} parent=11 // pred_check_branch
        %274 = sbr.rel (%p272) target = $region16
      $region15: #{_lambda_.1} parent=11 // pred_region
        _
      $region16: #{_lambda_.1} parent=11 // pred_fallthru
        _
      // Predicated region
      $region17: #{_lambda_.1} parent=11 // pred_check
        %p275 = pneg %p84
      $region18: #{_lambda_.1} parent=11 // pred_check_branch
        %277 = sbr.rel (%p275) target = $region20
      $region19: #{_lambda_.1} parent=11 // pred_region
        _
      $region20: #{_lambda_.1} parent=11 // pred_fallthru
        _
      // Predicated region
      $region21: #{_lambda_.1} parent=11 // pred_check
        %p278 = pneg %p105
      $region22: #{_lambda_.1} parent=11 // pred_check_branch
        %280 = sbr.rel (%p278) target = $region24
      $region23: #{_lambda_.1} parent=11 // pred_region
        _
      $region24: #{_lambda_.1} parent=11 // pred_fallthru
        _
      // Predicated region
      $region25: #{_lambda_.1} parent=11 // pred_check
        %p281 = pneg %p126
      $region26: #{_lambda_.1} parent=11 // pred_check_branch
        %283 = sbr.rel (%p281) target = $region28
      $region27: #{_lambda_.1} parent=11 // pred_region
        _
      $region28: #{_lambda_.1} parent=11 // pred_fallthru
        _
      // Predicated region
      $region29: #{_lambda_.1} parent=11 // pred_check
        %p284 = pneg %p147
      $region30: #{_lambda_.1} parent=11 // pred_check_branch
        %286 = sbr.rel (%p284) target = $region32
      $region31: #{_lambda_.1} parent=11 // pred_region
        _
      $region32: #{_lambda_.1} parent=11 // pred_fallthru
        _
      // Predicated region
      $region33: #{_lambda_.1} parent=11 // pred_check
        %p287 = pneg %p168
      $region34: #{_lambda_.1} parent=11 // pred_check_branch
        %289 = sbr.rel (%p287) target = $region36
      $region35: #{_lambda_.1} parent=11 // pred_region
        _
      $region36: #{_lambda_.1} parent=11 // pred_fallthru
        _
      // Predicated region
      $region37: #{_lambda_.1} parent=11 // pred_check
        %p290 = pneg %p189
      $region38: #{_lambda_.1} parent=11 // pred_check_branch
        %292 = sbr.rel (%p290) target = $region40
      $region39: #{_lambda_.1} parent=11 // pred_region
        _
      $region40: #{_lambda_.1} parent=11 // pred_fallthru
        _
      // Predicated region
      $region41: #{_lambda_.1} parent=11 // pred_check
        %p293 = pneg %p210
      $region42: #{_lambda_.1} parent=11 // pred_check_branch
        %295 = sbr.rel (%p293) target = $region44
      $region43: #{_lambda_.1} parent=11 // pred_region
        _
      $region44: #{_lambda_.1} parent=11 // pred_fallthru
        _
      // Predicated region
      $region45: #{_lambda_.1} parent=11 // pred_check
        %p296 = pneg %p231
      $region46: #{_lambda_.1} parent=11 // pred_check_branch
        %298 = sbr.rel (%p296) target = $region48
      $region47: #{_lambda_.1} parent=11 // pred_region
        _
      $region48: #{_lambda_.1} parent=11 // pred_fallthru
        _
    $region12: #{_lambda_.1} parent=5 // pred_fallthru
      _
    %p299 = scmp.lt.s32.totalorder %s16, 2
    // Predicated region
    $region49: #{_lambda_.1} parent=5 // pred_check
      %p300 = pneg %p299
    $region50: #{_lambda_.1} parent=5 // pred_check_branch
      %302 = sbr.rel (%p300) target = $region52
    $region51: #{_lambda_.1} parent=5 // pred_region
      // Predicated region
      $region53: #{_lambda_.1} parent=51 // pred_check
        %p303 = pneg %p36
      $region54: #{_lambda_.1} parent=51 // pred_check_branch
        %305 = sbr.rel (%p303) target = $region56
      $region55: #{_lambda_.1} parent=51 // pred_region
        %p306 = scmp.lt.s32.totalorder %s16, 1
        %s307 = scalar_select %p306, %s16, 1
        %s308 = smul.addr %s307, 2
        %s309 = smul.addr %s308, 8
        %s310 = scalar_lea.vmem %s0, %s309
      $region56: #{_lambda_.1} parent=51 // pred_fallthru
        _
    $region52: #{_lambda_.1} parent=5 // pred_fallthru
      _
    %p311 = scmp.le.s32.totalorder 1, %s16
    %p312 = scmp.lt.s32.totalorder %s16, 3
    %p313 = pnand %p311, %p312
    %p314 = pneg %p313
    // Predicated region
    $region57: #{_lambda_.1} parent=5 // pred_check
      _
    $region58: #{_lambda_.1} parent=5 // pred_check_branch
      %316 = sbr.rel (%p313) target = $region60
    $region59: #{_lambda_.1} parent=5 // pred_region
      %s317 = ssub.s32 %s16, 1
      %p318 = scmp.lt.s32.totalorder %s21, 1
      %s319 = scalar_select %p318, %s21, 1
      %s320 = smul.addr %s319, 2
      %s321 = smul.addr %s320, 8
      %s322 = scalar_lea.vmem %s0, %s321
      %p323 = pneg %p42
      %p324 = pneg %p39
      %p325 = pneg %p63
      %p326 = pneg %p60
      %p327 = pneg %p84
      %p328 = pneg %p81
      %p329 = pneg %p105
      %p330 = pneg %p102
      %p331 = pneg %p126
      %p332 = pneg %p123
      %p333 = pneg %p147
      %p334 = pneg %p144
      %p335 = pneg %p168
      %p336 = pneg %p165
      %p337 = pneg %p189
      %p338 = pneg %p186
      %p339 = pneg %p210
      %p340 = pneg %p207
      %p341 = pneg %p231
      %p342 = pneg %p228
      %p343 = pneg %p257
      %p344 = pneg %p254
      %p345 = scmp.lt.s32.totalorder %s21, 1
      %s346 = scalar_select %p345, %s21, 1
      %s347 = smul.addr %s346, 2
      %s348 = smul.addr %s347, 4
      %s349 = scalar_lea.vmem %s10, %s348
      %p350 = scmp.lt.s32.totalorder %s21, 1
      %s351 = scalar_select %p350, %s21, 1
      %s352 = smul.addr %s351, 2
      %s353 = smul.addr %s352, 8
      %s354 = scalar_lea.vmem %s0, %s353
      %p355 = scmp.lt.s32.totalorder %s21, 1
      %s356 = scalar_select %p355, %s21, 1
      %s357 = smul.addr %s356, 2
      %s358 = smul.addr %s357, 4
      %s359 = scalar_lea.vmem %s10, %s358
      %360 = vst [vmem:[#allocation2] sm:$0xff] 0.0
      %361 = vst [vmem:[#allocation2 + $0x8] sm:$0xff] 0.0
      %362 = vst [vmem:[#allocation2 + $0x10] sm:$0xff] 0.0
      %363 = vst [vmem:[#allocation2 + $0x18] sm:$0xff] 0.0
      %v364 = vld [vmem:[%s354] sm:$0xff]
      %v365 = vld [vmem:[%s354 + $0x8] sm:$0xff]
      %366 = vst [vmem:[#allocation2 + $0x8] sm:$0xff] %v364
      %367 = vst [vmem:[#allocation2 + $0x10] sm:$0xff] %v365
      %v368 = vld [vmem:[%s2] sm:$0xff]
      %v369 = vld [vmem:[%s3] sm:$0xff]
      %v370 = vld [vmem:[#allocation2] sm:$0xff]
      %v371 = vld [vmem:[#allocation2 + $0x8] sm:$0xff]
      %v372 = vld [vmem:[#allocation2 + $0x10] sm:$0xff]
      %v373 = vld [vmem:[%s1] ss:$4 sm:$0x3]
      %v375 = vlaneseq
      %v376 = vshrl.u32 %v375, 7
      %v377 = vsub.s32 0, %v376
      %v378 = vrot.slane %v373, %v377
      %v379 = vlaneseq
      %v380 = vshrl.u32 %v379, 7
      %v381 = vsub.s32 1, %v380
      %v382 = vrot.slane %v373, %v381
      %383 = vrot.lane.b32.xlu0 %v378, 111
      %v384 = vpop.permute.xlu0 %383
      %385 = vrot.lane.b32.xlu0 %v382, 111
      %v386 = vpop.permute.xlu0 %385
      %vm387 = vcmask 908288
      %v388 = vsel %vm387, %v384, %v386
      %v392 = vmul.f32 %v370, %v384
      %v393 = vmul.f32 %v371, %v388
      %v394 = vmul.f32 %v372, %v386
      %398 = vrot.lane.b32.xlu0 %v392, 17
      %v399 = vpop.permute.xlu0 %398
      %400 = vrot.lane.b32.xlu0 %v393, 17
      %v401 = vpop.permute.xlu0 %400
      %402 = vrot.lane.b32.xlu0 %v394, 17
      %v403 = vpop.permute.xlu0 %402
      %vm404 = vcmask 138240
      %v405 = vsel %vm404, %v399, %v401
      %v406 = vsel %vm404, %v401, %v403
      %409 = vst [vmem:[#allocation3] sm:$0xff] %v405
      %410 = vst [vmem:[#allocation3 + $0x8] sm:$0xff] %v406
      %v411 = vld [vmem:[#allocation2] sm:$0xff]
      %v412 = vld [vmem:[#allocation2 + $0x8] sm:$0xff]
      %v413 = vld [vmem:[#allocation2 + $0x10] sm:$0xff]
      %417 = vrot.lane.b32.xlu0 %v411, 16
      %v418 = vpop.permute.xlu0 %417
      %419 = vrot.lane.b32.xlu0 %v412, 16
      %v420 = vpop.permute.xlu0 %419
      %421 = vrot.lane.b32.xlu0 %v413, 16
      %v422 = vpop.permute.xlu0 %421
      %vm423 = vcmask 130048
      %v424 = vsel %vm423, %v418, %v420
      %v425 = vsel %vm423, %v420, %v422
      %428 = vst [vmem:[#allocation3 + $0x10] sm:$0xff] %v424
      %429 = vst [vmem:[#allocation3 + $0x18] sm:$0xff] %v425
      %v430 = vld [vmem:[#allocation2] sm:$0xff]
      %v431 = vld [vmem:[#allocation2 + $0x8] sm:$0xff]
      %v432 = vld [vmem:[#allocation2 + $0x10] sm:$0xff]
      %s433 = scalar_lea.vmem %s1, 2
      %v434 = vld [vmem:[%s433] ss:$4 sm:$0x3]
      %v436 = vlaneseq
      %v437 = vshrl.u32 %v436, 7
      %v438 = vsub.s32 0, %v437
      %v439 = vrot.slane %v434, %v438
      %v440 = vlaneseq
      %v441 = vshrl.u32 %v440, 7
      %v442 = vsub.s32 1, %v441
      %v443 = vrot.slane %v434, %v442
      %444 = vrot.lane.b32.xlu0 %v439, 113
      %v445 = vpop.permute.xlu0 %444
      %446 = vrot.lane.b32.xlu0 %v443, 113
      %v447 = vpop.permute.xlu0 %446
      %vm448 = vcmask 924672
      %v449 = vsel %vm448, %v445, %v447
      %v453 = vmul.f32 %v430, %v445
      %v454 = vmul.f32 %v431, %v449
      %v455 = vmul.f32 %v432, %v447
      %459 = vrot.lane.b32.xlu0 %v453, 15
      %v460 = vpop.permute.xlu0 %459
      %461 = vrot.lane.b32.xlu0 %v454, 15
      %v462 = vpop.permute.xlu0 %461
      %463 = vrot.lane.b32.xlu0 %v455, 15
      %v464 = vpop.permute.xlu0 %463
      %vm465 = vcmask 121856
      %v466 = vsel %vm465, %v460, %v462
      %v467 = vsel %vm465, %v462, %v464
      %470 = vst [vmem:[#allocation3 + $0x20] sm:$0xff] %v466
      %471 = vst [vmem:[#allocation3 + $0x28] sm:$0xff] %v467
      %v472 = vld [vmem:[#allocation2] sm:$0xff]
      %v473 = vld [vmem:[#allocation2 + $0x8] sm:$0xff]
      %v474 = vld [vmem:[#allocation2 + $0x10] sm:$0xff]
      %v475 = vld [vmem:[%s1] ss:$4 sm:$0x3]
      %v477 = vlaneseq
      %v478 = vshrl.u32 %v477, 7
      %v479 = vsub.s32 0, %v478
      %v480 = vrot.slane %v475, %v479
      %v481 = vlaneseq
      %v482 = vshrl.u32 %v481, 7
      %v483 = vsub.s32 1, %v482
      %v484 = vrot.slane %v475, %v483
      %485 = vrot.lane.b32.xlu0 %v480, 127
      %v486 = vpop.permute.xlu0 %485
      %487 = vrot.lane.b32.xlu0 %v484, 127
      %v488 = vpop.permute.xlu0 %487
      %vm489 = vcmask 1039360
      %v490 = vsel %vm489, %v486, %v488
      %v494 = vmul.f32 %v472, %v486
      %v495 = vmul.f32 %v473, %v490
      %v496 = vmul.f32 %v474, %v488
      %500 = vrot.lane.b32.xlu0 %v494, 1
      %v501 = vpop.permute.xlu0 %500
      %502 = vrot.lane.b32.xlu0 %v495, 1
      %v503 = vpop.permute.xlu0 %502
      %504 = vrot.lane.b32.xlu0 %v496, 1
      %v505 = vpop.permute.xlu0 %504
      %vm506 = vcmask 7168
      %v507 = vsel %vm506, %v501, %v503
      %v508 = vsel %vm506, %v503, %v505
      %511 = vst [vmem:[#allocation3 + $0x30] sm:$0xff] %v507
      %512 = vst [vmem:[#allocation3 + $0x38] sm:$0xff] %v508
      %v513 = vld [vmem:[#allocation2 + $0x8] sm:$0xff]
      %v514 = vld [vmem:[#allocation2 + $0x10] sm:$0xff]
      %515 = vst [vmem:[#allocation3 + $0x40] sm:$0xff] %v513
      %516 = vst [vmem:[#allocation3 + $0x48] sm:$0xff] %v514
      %v517 = vld [vmem:[#allocation2 + $0x8] sm:$0xff]
      %v518 = vld [vmem:[#allocation2 + $0x10] sm:$0xff]
      %v519 = vld [vmem:[#allocation2 + $0x18] sm:$0xff]
      %v520 = vld [vmem:[%s433] ss:$4 sm:$0x3]
      %v522 = vlaneseq
      %v523 = vshrl.u32 %v522, 7
      %v524 = vsub.s32 0, %v523
      %v525 = vrot.slane %v520, %v524
      %v526 = vlaneseq
      %v527 = vshrl.u32 %v526, 7
      %v528 = vsub.s32 1, %v527
      %v529 = vrot.slane %v520, %v528
      %530 = vrot.lane.b32.xlu0 %v525, 1
      %v531 = vpop.permute.xlu0 %530
      %532 = vrot.lane.b32.xlu0 %v529, 1
      %v533 = vpop.permute.xlu0 %532
      %v534 = vsel %vm506, %v531, %v533
      %v538 = vmul.f32 %v517, %v531
      %v539 = vmul.f32 %v518, %v534
      %v540 = vmul.f32 %v519, %v533
      %544 = vrot.lane.b32.xlu0 %v538, 127
      %v545 = vpop.permute.xlu0 %544
      %546 = vrot.lane.b32.xlu0 %v539, 127
      %v547 = vpop.permute.xlu0 %546
      %548 = vrot.lane.b32.xlu0 %v540, 127
      %v549 = vpop.permute.xlu0 %548
      %v550 = vsel %vm489, %v545, %v547
      %v551 = vsel %vm489, %v547, %v549
      %554 = vst [vmem:[#allocation3 + $0x50] sm:$0xff] %v550
      %555 = vst [vmem:[#allocation3 + $0x58] sm:$0xff] %v551
      %v556 = vld [vmem:[#allocation2 + $0x8] sm:$0xff]
      %v557 = vld [vmem:[#allocation2 + $0x10] sm:$0xff]
      %v558 = vld [vmem:[#allocation2 + $0x18] sm:$0xff]
      %v559 = vld [vmem:[%s1] ss:$4 sm:$0x3]
      %v561 = vlaneseq
      %v562 = vshrl.u32 %v561, 7
      %v563 = vsub.s32 0, %v562
      %v564 = vrot.slane %v559, %v563
      %v565 = vlaneseq
      %v566 = vshrl.u32 %v565, 7
      %v567 = vsub.s32 1, %v566
      %v568 = vrot.slane %v559, %v567
      %569 = vrot.lane.b32.xlu0 %v564, 15
      %v570 = vpop.permute.xlu0 %569
      %571 = vrot.lane.b32.xlu0 %v568, 15
      %v572 = vpop.permute.xlu0 %571
      %v573 = vsel %vm465, %v570, %v572
      %v577 = vmul.f32 %v556, %v570
      %v578 = vmul.f32 %v557, %v573
      %v579 = vmul.f32 %v558, %v572
      %583 = vrot.lane.b32.xlu0 %v577, 113
      %v584 = vpop.permute.xlu0 %583
      %585 = vrot.lane.b32.xlu0 %v578, 113
      %v586 = vpop.permute.xlu0 %585
      %587 = vrot.lane.b32.xlu0 %v579, 113
      %v588 = vpop.permute.xlu0 %587
      %v589 = vsel %vm448, %v584, %v586
      %v590 = vsel %vm448, %v586, %v588
      %593 = vst [vmem:[#allocation3 + $0x60] sm:$0xff] %v589
      %594 = vst [vmem:[#allocation3 + $0x68] sm:$0xff] %v590
      %v595 = vld [vmem:[#allocation2 + $0x8] sm:$0xff]
      %v596 = vld [vmem:[#allocation2 + $0x10] sm:$0xff]
      %v597 = vld [vmem:[#allocation2 + $0x18] sm:$0xff]
      %601 = vrot.lane.b32.xlu0 %v595, 112
      %v602 = vpop.permute.xlu0 %601
      %603 = vrot.lane.b32.xlu0 %v596, 112
      %v604 = vpop.permute.xlu0 %603
      %605 = vrot.lane.b32.xlu0 %v597, 112
      %v606 = vpop.permute.xlu0 %605
      %vm607 = vcmask 916480
      %v608 = vsel %vm607, %v602, %v604
      %v609 = vsel %vm607, %v604, %v606
      %612 = vst [vmem:[#allocation3 + $0x70] sm:$0xff] %v608
      %613 = vst [vmem:[#allocation3 + $0x78] sm:$0xff] %v609
      %v614 = vld [vmem:[#allocation2 + $0x8] sm:$0xff]
      %v615 = vld [vmem:[#allocation2 + $0x10] sm:$0xff]
      %v616 = vld [vmem:[#allocation2 + $0x18] sm:$0xff]
      %v617 = vld [vmem:[%s433] ss:$4 sm:$0x3]
      %v619 = vlaneseq
      %v620 = vshrl.u32 %v619, 7
      %v621 = vsub.s32 0, %v620
      %v622 = vrot.slane %v617, %v621
      %v623 = vlaneseq
      %v624 = vshrl.u32 %v623, 7
      %v625 = vsub.s32 1, %v624
      %v626 = vrot.slane %v617, %v625
      %627 = vrot.lane.b32.xlu0 %v622, 17
      %v628 = vpop.permute.xlu0 %627
      %629 = vrot.lane.b32.xlu0 %v626, 17
      %v630 = vpop.permute.xlu0 %629
      %v631 = vsel %vm404, %v628, %v630
      %v635 = vmul.f32 %v614, %v628
      %v636 = vmul.f32 %v615, %v631
      %v637 = vmul.f32 %v616, %v630
      %641 = vrot.lane.b32.xlu0 %v635, 111
      %v642 = vpop.permute.xlu0 %641
      %643 = vrot.lane.b32.xlu0 %v636, 111
      %v644 = vpop.permute.xlu0 %643
      %645 = vrot.lane.b32.xlu0 %v637, 111
      %v646 = vpop.permute.xlu0 %645
      %v647 = vsel %vm387, %v642, %v644
      %v648 = vsel %vm387, %v644, %v646
      %651 = vst [vmem:[#allocation3 + $0x80] sm:$0xff] %v647
      %652 = vst [vmem:[#allocation3 + $0x88] sm:$0xff] %v648
      %v653 = vld [vmem:[#allocation3] sm:$0xff]
      %v654 = vld [vmem:[#allocation3 + $0x8] sm:$0xff]
      %v655 = vld [vmem:[#allocation3 + $0x10] sm:$0xff]
      %v656 = vld [vmem:[#allocation3 + $0x18] sm:$0xff]
      %v657 = vld [vmem:[#allocation3 + $0x20] sm:$0xff]
      %v658 = vld [vmem:[#allocation3 + $0x28] sm:$0xff]
      %v659 = vld [vmem:[#allocation3 + $0x30] sm:$0xff]
      %v660 = vld [vmem:[#allocation3 + $0x38] sm:$0xff]
      %v661 = vld [vmem:[#allocation3 + $0x40] sm:$0xff]
      %v662 = vld [vmem:[#allocation3 + $0x48] sm:$0xff]
      %v663 = vld [vmem:[#allocation3 + $0x50] sm:$0xff]
      %v664 = vld [vmem:[#allocation3 + $0x58] sm:$0xff]
      %v665 = vld [vmem:[#allocation3 + $0x60] sm:$0xff]
      %v666 = vld [vmem:[#allocation3 + $0x68] sm:$0xff]
      %v667 = vld [vmem:[#allocation3 + $0x70] sm:$0xff]
      %v668 = vld [vmem:[#allocation3 + $0x78] sm:$0xff]
      %v669 = vld [vmem:[#allocation3 + $0x80] sm:$0xff]
      %v670 = vld [vmem:[#allocation3 + $0x88] sm:$0xff]
      %672 = vset.pattern.permute.xlu0 0
      %673 = vperm.xlu0 %672, %v369
      %v674 = vpop.permute.xlu0 %673
      %vm676 = vcmask 588800
      %v678 = vsel %vm676, %v368, 0
      %680 = vmatprep.subr.mxu0 0.0
      %681 = vmatpush1.msra.mxu0 0.0
      %682 = vmatprep.subr.mxu0 0.0
      %683 = vmatpush1.msra.mxu0 0.0
      %684 = vmatprep.subr.mxu0 0.0
      %685 = vmatpush1.msra.mxu0 0.0
      %686 = vmatprep.subr.mxu0 0.0
      %687 = vmatpush1.msra.mxu0 0.0
      %688 = vmatprep.subr.mxu0 0.0
      %689 = vmatpush1.msra.mxu0 0.0
      %690 = vmatprep.subr.mxu0 0.0
      %691 = vmatpush1.msra.mxu0 0.0
      %692 = vmatprep.subr.mxu0 0.0
      %693 = vmatpush1.msra.mxu0 0.0
      %694 = vmatprep.subr.mxu0 %v670
      %695 = vmatpush1.msra.mxu0 %v669
      %696 = vmatprep.subr.mxu0 %v668
      %697 = vmatpush1.msra.mxu0 %v667
      %698 = vmatprep.subr.mxu0 %v666
      %699 = vmatpush1.msra.mxu0 %v665
      %700 = vmatprep.subr.mxu0 %v664
      %701 = vmatpush1.msra.mxu0 %v663
      %702 = vmatprep.subr.mxu0 %v662
      %703 = vmatpush1.msra.mxu0 %v661
      %704 = vmatprep.subr.mxu0 %v660
      %705 = vmatpush1.msra.mxu0 %v659
      %706 = vmatprep.subr.mxu0 %v658
      %707 = vmatpush1.msra.mxu0 %v657
      %708 = vmatprep.subr.mxu0 %v656
      %709 = vmatpush1.msra.mxu0 %v655
      %710 = vmatprep.subr.mxu0 %v654
      %711 = vmatpush1.msra.mxu0 %v653
      %712 = vmatprep.subr.mxu0 0.0
      %713 = vmatpush2.msra.mxu0 0.0
      %714 = vmatprep.subr.mxu0 0.0
      %715 = vmatpush2.msra.mxu0 0.0
      %716 = vmatprep.subr.mxu0 0.0
      %717 = vmatpush2.msra.mxu0 0.0
      %718 = vmatprep.subr.mxu0 0.0
      %719 = vmatpush2.msra.mxu0 0.0
      %720 = vmatprep.subr.mxu0 0.0
      %721 = vmatpush2.msra.mxu0 0.0
      %722 = vmatprep.subr.mxu0 0.0
      %723 = vmatpush2.msra.mxu0 0.0
      %724 = vmatprep.subr.mxu0 0.0
      %725 = vmatpush2.msra.mxu0 0.0
      %726 = vmatprep.subr.mxu0 0.0
      %727 = vmatpush2.msra.mxu0 0.0
      %728 = vmatprep.subr.mxu0 0.0
      %729 = vmatpush2.msra.mxu0 0.0
      %730 = vmatprep.subr.mxu0 0.0
      %731 = vmatpush2.msra.mxu0 0.0
      %732 = vmatprep.subr.mxu0 0.0
      %733 = vmatpush2.msra.mxu0 0.0
      %734 = vmatprep.subr.mxu0 0.0
      %735 = vmatpush2.msra.mxu0 0.0
      %736 = vmatprep.subr.mxu0 0.0
      %737 = vmatpush2.msra.mxu0 0.0
      %738 = vmatprep.subr.mxu0 0.0
      %739 = vmatpush2.msra.mxu0 0.0
      %740 = vmatprep.subr.mxu0 0.0
      %741 = vmatpush2.msra.mxu0 0.0
      %742 = vmatprep.subr.mxu0 0.0
      %743 = vmatpush2.msra.mxu0 0.0
      %744 = vmatprep.mubr.f32.mxu0 0.0
      %745 = vmatmul.mubr.f32.gmra.mxu0 %v678
      %v746 = vpop.f32.mrf.mxu0
      %v747 = vadd.f32 %v674, %v746
      %v748 = vpop.f32.mrf.mxu0
      %v749 = vadd.f32 %v674, %v748
      %750 = vdwg.mxu0
      %v751 = vmax.f32 %v747, 0.0
      %v752 = vmax.f32 %v749, 0.0
      %v753 = vld [vmem:[%s6] sm:$0xff]
      %755 = vset.pattern.permute.xlu0 0
      %756 = vperm.xlu0 %755, %v753
      %v757 = vpop.permute.xlu0 %756
      %v759 = vmul.f32 %v751, %v757
      %v760 = vmul.f32 %v752, %v757
      %v761 = vld [vmem:[%s7] sm:$0xff]
      %763 = vset.pattern.permute.xlu0 0
      %764 = vperm.xlu0 %763, %v761
      %v765 = vpop.permute.xlu0 %764
      %v767 = vadd.f32 %v759, %v765
      %v768 = vadd.f32 %v760, %v765
      %769 = vst [vmem:[#allocation2 + $0x8] sm:$0xff] %v767
      %770 = vst [vmem:[#allocation2 + $0x10] sm:$0xff] %v768
      %v771 = vld [vmem:[%s4] sm:$0xff]
      %v772 = vld [vmem:[%s5] sm:$0xff]
      %v773 = vld [vmem:[#allocation2] sm:$0xff]
      %v774 = vld [vmem:[#allocation2 + $0x8] sm:$0xff]
      %v775 = vld [vmem:[#allocation2 + $0x10] sm:$0xff]
      %v776 = vld [vmem:[%s1] ss:$4 sm:$0x3]
      %v778 = vlaneseq
      %v779 = vshrl.u32 %v778, 7
      %v780 = vsub.s32 0, %v779
      %v781 = vrot.slane %v776, %v780
      %v782 = vlaneseq
      %v783 = vshrl.u32 %v782, 7
      %v784 = vsub.s32 1, %v783
      %v785 = vrot.slane %v776, %v784
      %786 = vrot.lane.b32.xlu0 %v781, 111
      %v787 = vpop.permute.xlu0 %786
      %788 = vrot.lane.b32.xlu0 %v785, 111
      %v789 = vpop.permute.xlu0 %788
      %v790 = vsel %vm387, %v787, %v789
      %v794 = vmul.f32 %v773, %v787
      %v795 = vmul.f32 %v774, %v790
      %v796 = vmul.f32 %v775, %v789
      %800 = vrot.lane.b32.xlu0 %v794, 17
      %v801 = vpop.permute.xlu0 %800
      %802 = vrot.lane.b32.xlu0 %v795, 17
      %v803 = vpop.permute.xlu0 %802
      %804 = vrot.lane.b32.xlu0 %v796, 17
      %v805 = vpop.permute.xlu0 %804
      %v806 = vsel %vm404, %v801, %v803
      %v807 = vsel %vm404, %v803, %v805
      %810 = vst [vmem:[#allocation3] sm:$0xff] %v806
      %811 = vst [vmem:[#allocation3 + $0x8] sm:$0xff] %v807
      %v812 = vld [vmem:[#allocation2] sm:$0xff]
      %v813 = vld [vmem:[#allocation2 + $0x8] sm:$0xff]
      %v814 = vld [vmem:[#allocation2 + $0x10] sm:$0xff]
      %818 = vrot.lane.b32.xlu0 %v812, 16
      %v819 = vpop.permute.xlu0 %818
      %820 = vrot.lane.b32.xlu0 %v813, 16
      %v821 = vpop.permute.xlu0 %820
      %822 = vrot.lane.b32.xlu0 %v814, 16
      %v823 = vpop.permute.xlu0 %822
      %v824 = vsel %vm423, %v819, %v821
      %v825 = vsel %vm423, %v821, %v823
      %828 = vst [vmem:[#allocation3 + $0x10] sm:$0xff] %v824
      %829 = vst [vmem:[#allocation3 + $0x18] sm:$0xff] %v825
      %v830 = vld [vmem:[#allocation2] sm:$0xff]
      %v831 = vld [vmem:[#allocation2 + $0x8] sm:$0xff]
      %v832 = vld [vmem:[#allocation2 + $0x10] sm:$0xff]
      %v833 = vld [vmem:[%s433] ss:$4 sm:$0x3]
      %v835 = vlaneseq
      %v836 = vshrl.u32 %v835, 7
      %v837 = vsub.s32 0, %v836
      %v838 = vrot.slane %v833, %v837
      %v839 = vlaneseq
      %v840 = vshrl.u32 %v839, 7
      %v841 = vsub.s32 1, %v840
      %v842 = vrot.slane %v833, %v841
      %843 = vrot.lane.b32.xlu0 %v838, 113
      %v844 = vpop.permute.xlu0 %843
      %845 = vrot.lane.b32.xlu0 %v842, 113
      %v846 = vpop.permute.xlu0 %845
      %v847 = vsel %vm448, %v844, %v846
      %v851 = vmul.f32 %v830, %v844
      %v852 = vmul.f32 %v831, %v847
      %v853 = vmul.f32 %v832, %v846
      %857 = vrot.lane.b32.xlu0 %v851, 15
      %v858 = vpop.permute.xlu0 %857
      %859 = vrot.lane.b32.xlu0 %v852, 15
      %v860 = vpop.permute.xlu0 %859
      %861 = vrot.lane.b32.xlu0 %v853, 15
      %v862 = vpop.permute.xlu0 %861
      %v863 = vsel %vm465, %v858, %v860
      %v864 = vsel %vm465, %v860, %v862
      %867 = vst [vmem:[#allocation3 + $0x20] sm:$0xff] %v863
      %868 = vst [vmem:[#allocation3 + $0x28] sm:$0xff] %v864
      %v869 = vld [vmem:[#allocation2] sm:$0xff]
      %v870 = vld [vmem:[#allocation2 + $0x8] sm:$0xff]
      %v871 = vld [vmem:[#allocation2 + $0x10] sm:$0xff]
      %v872 = vld [vmem:[%s1] ss:$4 sm:$0x3]
      %v874 = vlaneseq
      %v875 = vshrl.u32 %v874, 7
      %v876 = vsub.s32 0, %v875
      %v877 = vrot.slane %v872, %v876
      %v878 = vlaneseq
      %v879 = vshrl.u32 %v878, 7
      %v880 = vsub.s32 1, %v879
      %v881 = vrot.slane %v872, %v880
      %882 = vrot.lane.b32.xlu0 %v877, 127
      %v883 = vpop.permute.xlu0 %882
      %884 = vrot.lane.b32.xlu0 %v881, 127
      %v885 = vpop.permute.xlu0 %884
      %v886 = vsel %vm489, %v883, %v885
      %v890 = vmul.f32 %v869, %v883
      %v891 = vmul.f32 %v870, %v886
      %v892 = vmul.f32 %v871, %v885
      %896 = vrot.lane.b32.xlu0 %v890, 1
      %v897 = vpop.permute.xlu0 %896
      %898 = vrot.lane.b32.xlu0 %v891, 1
      %v899 = vpop.permute.xlu0 %898
      %900 = vrot.lane.b32.xlu0 %v892, 1
      %v901 = vpop.permute.xlu0 %900
      %v902 = vsel %vm506, %v897, %v899
      %v903 = vsel %vm506, %v899, %v901
      %906 = vst [vmem:[#allocation3 + $0x30] sm:$0xff] %v902
      %907 = vst [vmem:[#allocation3 + $0x38] sm:$0xff] %v903
      %v908 = vld [vmem:[#allocation2 + $0x8] sm:$0xff]
      %v909 = vld [vmem:[#allocation2 + $0x10] sm:$0xff]
      %910 = vst [vmem:[#allocation3 + $0x40] sm:$0xff] %v908
      %911 = vst [vmem:[#allocation3 + $0x48] sm:$0xff] %v909
      %v912 = vld [vmem:[#allocation2 + $0x8] sm:$0xff]
      %v913 = vld [vmem:[#allocation2 + $0x10] sm:$0xff]
      %v914 = vld [vmem:[#allocation2 + $0x18] sm:$0xff]
      %v915 = vld [vmem:[%s433] ss:$4 sm:$0x3]
      %v917 = vlaneseq
      %v918 = vshrl.u32 %v917, 7
      %v919 = vsub.s32 0, %v918
      %v920 = vrot.slane %v915, %v919
      %v921 = vlaneseq
      %v922 = vshrl.u32 %v921, 7
      %v923 = vsub.s32 1, %v922
      %v924 = vrot.slane %v915, %v923
      %925 = vrot.lane.b32.xlu0 %v920, 1
      %v926 = vpop.permute.xlu0 %925
      %927 = vrot.lane.b32.xlu0 %v924, 1
      %v928 = vpop.permute.xlu0 %927
      %v929 = vsel %vm506, %v926, %v928
      %v933 = vmul.f32 %v912, %v926
      %v934 = vmul.f32 %v913, %v929
      %v935 = vmul.f32 %v914, %v928
      %939 = vrot.lane.b32.xlu0 %v933, 127
      %v940 = vpop.permute.xlu0 %939
      %941 = vrot.lane.b32.xlu0 %v934, 127
      %v942 = vpop.permute.xlu0 %941
      %943 = vrot.lane.b32.xlu0 %v935, 127
      %v944 = vpop.permute.xlu0 %943
      %v945 = vsel %vm489, %v940, %v942
      %v946 = vsel %vm489, %v942, %v944
      %949 = vst [vmem:[#allocation3 + $0x50] sm:$0xff] %v945
      %950 = vst [vmem:[#allocation3 + $0x58] sm:$0xff] %v946
      %v951 = vld [vmem:[#allocation2 + $0x8] sm:$0xff]
      %v952 = vld [vmem:[#allocation2 + $0x10] sm:$0xff]
      %v953 = vld [vmem:[#allocation2 + $0x18] sm:$0xff]
      %v954 = vld [vmem:[%s1] ss:$4 sm:$0x3]
      %v956 = vlaneseq
      %v957 = vshrl.u32 %v956, 7
      %v958 = vsub.s32 0, %v957
      %v959 = vrot.slane %v954, %v958
      %v960 = vlaneseq
      %v961 = vshrl.u32 %v960, 7
      %v962 = vsub.s32 1, %v961
      %v963 = vrot.slane %v954, %v962
      %964 = vrot.lane.b32.xlu0 %v959, 15
      %v965 = vpop.permute.xlu0 %964
      %966 = vrot.lane.b32.xlu0 %v963, 15
      %v967 = vpop.permute.xlu0 %966
      %v968 = vsel %vm465, %v965, %v967
      %v972 = vmul.f32 %v951, %v965
      %v973 = vmul.f32 %v952, %v968
      %v974 = vmul.f32 %v953, %v967
      %978 = vrot.lane.b32.xlu0 %v972, 113
      %v979 = vpop.permute.xlu0 %978
      %980 = vrot.lane.b32.xlu0 %v973, 113
      %v981 = vpop.permute.xlu0 %980
      %982 = vrot.lane.b32.xlu0 %v974, 113
      %v983 = vpop.permute.xlu0 %982
      %v984 = vsel %vm448, %v979, %v981
      %v985 = vsel %vm448, %v981, %v983
      %988 = vst [vmem:[#allocation3 + $0x60] sm:$0xff] %v984
      %989 = vst [vmem:[#allocation3 + $0x68] sm:$0xff] %v985
      %v990 = vld [vmem:[#allocation2 + $0x8] sm:$0xff]
      %v991 = vld [vmem:[#allocation2 + $0x10] sm:$0xff]
      %v992 = vld [vmem:[#allocation2 + $0x18] sm:$0xff]
      %996 = vrot.lane.b32.xlu0 %v990, 112
      %v997 = vpop.permute.xlu0 %996
      %998 = vrot.lane.b32.xlu0 %v991, 112
      %v999 = vpop.permute.xlu0 %998
      %1000 = vrot.lane.b32.xlu0 %v992, 112
      %v1001 = vpop.permute.xlu0 %1000
      %v1002 = vsel %vm607, %v997, %v999
      %v1003 = vsel %vm607, %v999, %v1001
      %1006 = vst [vmem:[#allocation3 + $0x70] sm:$0xff] %v1002
      %1007 = vst [vmem:[#allocation3 + $0x78] sm:$0xff] %v1003
      %v1008 = vld [vmem:[#allocation2 + $0x8] sm:$0xff]
      %v1009 = vld [vmem:[#allocation2 + $0x10] sm:$0xff]
      %v1010 = vld [vmem:[#allocation2 + $0x18] sm:$0xff]
      %v1011 = vld [vmem:[%s433] ss:$4 sm:$0x3]
      %v1013 = vlaneseq
      %v1014 = vshrl.u32 %v1013, 7
      %v1015 = vsub.s32 0, %v1014
      %v1016 = vrot.slane %v1011, %v1015
      %v1017 = vlaneseq
      %v1018 = vshrl.u32 %v1017, 7
      %v1019 = vsub.s32 1, %v1018
      %v1020 = vrot.slane %v1011, %v1019
      %1021 = vrot.lane.b32.xlu0 %v1016, 17
      %v1022 = vpop.permute.xlu0 %1021
      %1023 = vrot.lane.b32.xlu0 %v1020, 17
      %v1024 = vpop.permute.xlu0 %1023
      %v1025 = vsel %vm404, %v1022, %v1024
      %v1029 = vmul.f32 %v1008, %v1022
      %v1030 = vmul.f32 %v1009, %v1025
      %v1031 = vmul.f32 %v1010, %v1024
      %1035 = vrot.lane.b32.xlu0 %v1029, 111
      %v1036 = vpop.permute.xlu0 %1035
      %1037 = vrot.lane.b32.xlu0 %v1030, 111
      %v1038 = vpop.permute.xlu0 %1037
      %1039 = vrot.lane.b32.xlu0 %v1031, 111
      %v1040 = vpop.permute.xlu0 %1039
      %v1041 = vsel %vm387, %v1036, %v1038
      %v1042 = vsel %vm387, %v1038, %v1040
      %1045 = vst [vmem:[#allocation3 + $0x80] sm:$0xff] %v1041
      %1046 = vst [vmem:[#allocation3 + $0x88] sm:$0xff] %v1042
      %v1047 = vld [vmem:[#allocation3] sm:$0xff]
      %v1048 = vld [vmem:[#allocation3 + $0x8] sm:$0xff]
      %v1049 = vld [vmem:[#allocation3 + $0x10] sm:$0xff]
      %v1050 = vld [vmem:[#allocation3 + $0x18] sm:$0xff]
      %v1051 = vld [vmem:[#allocation3 + $0x20] sm:$0xff]
      %v1052 = vld [vmem:[#allocation3 + $0x28] sm:$0xff]
      %v1053 = vld [vmem:[#allocation3 + $0x30] sm:$0xff]
      %v1054 = vld [vmem:[#allocation3 + $0x38] sm:$0xff]
      %v1055 = vld [vmem:[#allocation3 + $0x40] sm:$0xff]
      %v1056 = vld [vmem:[#allocation3 + $0x48] sm:$0xff]
      %v1057 = vld [vmem:[#allocation3 + $0x50] sm:$0xff]
      %v1058 = vld [vmem:[#allocation3 + $0x58] sm:$0xff]
      %v1059 = vld [vmem:[#allocation3 + $0x60] sm:$0xff]
      %v1060 = vld [vmem:[#allocation3 + $0x68] sm:$0xff]
      %v1061 = vld [vmem:[#allocation3 + $0x70] sm:$0xff]
      %v1062 = vld [vmem:[#allocation3 + $0x78] sm:$0xff]
      %v1063 = vld [vmem:[#allocation3 + $0x80] sm:$0xff]
      %v1064 = vld [vmem:[#allocation3 + $0x88] sm:$0xff]
      %1066 = vset.pattern.permute.xlu0 0
      %1067 = vperm.xlu0 %1066, %v772
      %v1068 = vpop.permute.xlu0 %1067
      %v1071 = vsel %vm676, %v771, 0
      %1073 = vmatprep.subr.mxu0 0.0
      %1074 = vmatpush1.msra.mxu0 0.0
      %1075 = vmatprep.subr.mxu0 0.0
      %1076 = vmatpush1.msra.mxu0 0.0
      %1077 = vmatprep.subr.mxu0 0.0
      %1078 = vmatpush1.msra.mxu0 0.0
      %1079 = vmatprep.subr.mxu0 0.0
      %1080 = vmatpush1.msra.mxu0 0.0
      %1081 = vmatprep.subr.mxu0 0.0
      %1082 = vmatpush1.msra.mxu0 0.0
      %1083 = vmatprep.subr.mxu0 0.0
      %1084 = vmatpush1.msra.mxu0 0.0
      %1085 = vmatprep.subr.mxu0 0.0
      %1086 = vmatpush1.msra.mxu0 0.0
      %1087 = vmatprep.subr.mxu0 %v1064
      %1088 = vmatpush1.msra.mxu0 %v1063
      %1089 = vmatprep.subr.mxu0 %v1062
      %1090 = vmatpush1.msra.mxu0 %v1061
      %1091 = vmatprep.subr.mxu0 %v1060
      %1092 = vmatpush1.msra.mxu0 %v1059
      %1093 = vmatprep.subr.mxu0 %v1058
      %1094 = vmatpush1.msra.mxu0 %v1057
      %1095 = vmatprep.subr.mxu0 %v1056
      %1096 = vmatpush1.msra.mxu0 %v1055
      %1097 = vmatprep.subr.mxu0 %v1054
      %1098 = vmatpush1.msra.mxu0 %v1053
      %1099 = vmatprep.subr.mxu0 %v1052
      %1100 = vmatpush1.msra.mxu0 %v1051
      %1101 = vmatprep.subr.mxu0 %v1050
      %1102 = vmatpush1.msra.mxu0 %v1049
      %1103 = vmatprep.subr.mxu0 %v1048
      %1104 = vmatpush1.msra.mxu0 %v1047
      %1105 = vmatprep.subr.mxu0 0.0
      %1106 = vmatpush2.msra.mxu0 0.0
      %1107 = vmatprep.subr.mxu0 0.0
      %1108 = vmatpush2.msra.mxu0 0.0
      %1109 = vmatprep.subr.mxu0 0.0
      %1110 = vmatpush2.msra.mxu0 0.0
      %1111 = vmatprep.subr.mxu0 0.0
      %1112 = vmatpush2.msra.mxu0 0.0
      %1113 = vmatprep.subr.mxu0 0.0
      %1114 = vmatpush2.msra.mxu0 0.0
      %1115 = vmatprep.subr.mxu0 0.0
      %1116 = vmatpush2.msra.mxu0 0.0
      %1117 = vmatprep.subr.mxu0 0.0
      %1118 = vmatpush2.msra.mxu0 0.0
      %1119 = vmatprep.subr.mxu0 0.0
      %1120 = vmatpush2.msra.mxu0 0.0
      %1121 = vmatprep.subr.mxu0 0.0
      %1122 = vmatpush2.msra.mxu0 0.0
      %1123 = vmatprep.subr.mxu0 0.0
      %1124 = vmatpush2.msra.mxu0 0.0
      %1125 = vmatprep.subr.mxu0 0.0
      %1126 = vmatpush2.msra.mxu0 0.0
      %1127 = vmatprep.subr.mxu0 0.0
      %1128 = vmatpush2.msra.mxu0 0.0
      %1129 = vmatprep.subr.mxu0 0.0
      %1130 = vmatpush2.msra.mxu0 0.0
      %1131 = vmatprep.subr.mxu0 0.0
      %1132 = vmatpush2.msra.mxu0 0.0
      %1133 = vmatprep.subr.mxu0 0.0
      %1134 = vmatpush2.msra.mxu0 0.0
      %1135 = vmatprep.subr.mxu0 0.0
      %1136 = vmatpush2.msra.mxu0 0.0
      %1137 = vmatprep.mubr.f32.mxu0 0.0
      %1138 = vmatmul.mubr.f32.gmra.mxu0 %v1071
      %v1139 = vpop.f32.mrf.mxu0
      %v1140 = vadd.f32 %v1068, %v1139
      %v1141 = vpop.f32.mrf.mxu0
      %v1142 = vadd.f32 %v1068, %v1141
      %1143 = vdwg.mxu0
      %v1144 = vmax.f32 %v1140, 0.0
      %v1145 = vmax.f32 %v1142, 0.0
      %s1146 = scalar_lea.vmem %s6, 8
      %v1147 = vld [vmem:[%s1146] sm:$0xff]
      %1149 = vset.pattern.permute.xlu0 0
      %1150 = vperm.xlu0 %1149, %v1147
      %v1151 = vpop.permute.xlu0 %1150
      %v1153 = vmul.f32 %v1144, %v1151
      %v1154 = vmul.f32 %v1145, %v1151
      %s1155 = scalar_lea.vmem %s7, 8
      %v1156 = vld [vmem:[%s1155] sm:$0xff]
      %1158 = vset.pattern.permute.xlu0 0
      %1159 = vperm.xlu0 %1158, %v1156
      %v1160 = vpop.permute.xlu0 %1159
      %v1162 = vadd.f32 %v1153, %v1160
      %v1163 = vadd.f32 %v1154, %v1160
      %1164 = vst [vmem:[#allocation2 + $0x8] sm:$0xff] %v1162
      %1165 = vst [vmem:[#allocation2 + $0x10] sm:$0xff] %v1163
      %s1166 = scalar_lea.vmem %s4, 8
      %v1167 = vld [vmem:[%s1166] sm:$0xff]
      %s1168 = scalar_lea.vmem %s5, 8
      %v1169 = vld [vmem:[%s1168] sm:$0xff]
      %v1170 = vld [vmem:[#allocation2] sm:$0xff]
      %v1171 = vld [vmem:[#allocation2 + $0x8] sm:$0xff]
      %v1172 = vld [vmem:[#allocation2 + $0x10] sm:$0xff]
      %v1173 = vld [vmem:[%s1] ss:$4 sm:$0x3]
      %v1175 = vlaneseq
      %v1176 = vshrl.u32 %v1175, 7
      %v1177 = vsub.s32 0, %v1176
      %v1178 = vrot.slane %v1173, %v1177
      %v1179 = vlaneseq
      %v1180 = vshrl.u32 %v1179, 7
      %v1181 = vsub.s32 1, %v1180
      %v1182 = vrot.slane %v1173, %v1181
      %1183 = vrot.lane.b32.xlu0 %v1178, 111
      %v1184 = vpop.permute.xlu0 %1183
      %1185 = vrot.lane.b32.xlu0 %v1182, 111
      %v1186 = vpop.permute.xlu0 %1185
      %v1187 = vsel %vm387, %v1184, %v1186
      %v1191 = vmul.f32 %v1170, %v1184
      %v1192 = vmul.f32 %v1171, %v1187
      %v1193 = vmul.f32 %v1172, %v1186
      %1197 = vrot.lane.b32.xlu0 %v1191, 17
      %v1198 = vpop.permute.xlu0 %1197
      %1199 = vrot.lane.b32.xlu0 %v1192, 17
      %v1200 = vpop.permute.xlu0 %1199
      %1201 = vrot.lane.b32.xlu0 %v1193, 17
      %v1202 = vpop.permute.xlu0 %1201
      %v1203 = vsel %vm404, %v1198, %v1200
      %v1204 = vsel %vm404, %v1200, %v1202
      %1207 = vst [vmem:[#allocation3] sm:$0xff] %v1203
      %1208 = vst [vmem:[#allocation3 + $0x8] sm:$0xff] %v1204
      %v1209 = vld [vmem:[#allocation2] sm:$0xff]
      %v1210 = vld [vmem:[#allocation2 + $0x8] sm:$0xff]
      %v1211 = vld [vmem:[#allocation2 + $0x10] sm:$0xff]
      %1215 = vrot.lane.b32.xlu0 %v1209, 16
      %v1216 = vpop.permute.xlu0 %1215
      %1217 = vrot.lane.b32.xlu0 %v1210, 16
      %v1218 = vpop.permute.xlu0 %1217
      %1219 = vrot.lane.b32.xlu0 %v1211, 16
      %v1220 = vpop.permute.xlu0 %1219
      %v1221 = vsel %vm423, %v1216, %v1218
      %v1222 = vsel %vm423, %v1218, %v1220
      %1225 = vst [vmem:[#allocation3 + $0x10] sm:$0xff] %v1221
      %1226 = vst [vmem:[#allocation3 + $0x18] sm:$0xff] %v1222
      %v1227 = vld [vmem:[#allocation2] sm:$0xff]
      %v1228 = vld [vmem:[#allocation2 + $0x8] sm:$0xff]
      %v1229 = vld [vmem:[#allocation2 + $0x10] sm:$0xff]
      %v1230 = vld [vmem:[%s433] ss:$4 sm:$0x3]
      %v1232 = vlaneseq
      %v1233 = vshrl.u32 %v1232, 7
      %v1234 = vsub.s32 0, %v1233
      %v1235 = vrot.slane %v1230, %v1234
      %v1236 = vlaneseq
      %v1237 = vshrl.u32 %v1236, 7
      %v1238 = vsub.s32 1, %v1237
      %v1239 = vrot.slane %v1230, %v1238
      %1240 = vrot.lane.b32.xlu0 %v1235, 113
      %v1241 = vpop.permute.xlu0 %1240
      %1242 = vrot.lane.b32.xlu0 %v1239, 113
      %v1243 = vpop.permute.xlu0 %1242
      %v1244 = vsel %vm448, %v1241, %v1243
      %v1248 = vmul.f32 %v1227, %v1241
      %v1249 = vmul.f32 %v1228, %v1244
      %v1250 = vmul.f32 %v1229, %v1243
      %1254 = vrot.lane.b32.xlu0 %v1248, 15
      %v1255 = vpop.permute.xlu0 %1254
      %1256 = vrot.lane.b32.xlu0 %v1249, 15
      %v1257 = vpop.permute.xlu0 %1256
      %1258 = vrot.lane.b32.xlu0 %v1250, 15
      %v1259 = vpop.permute.xlu0 %1258
      %v1260 = vsel %vm465, %v1255, %v1257
      %v1261 = vsel %vm465, %v1257, %v1259
      %1264 = vst [vmem:[#allocation3 + $0x20] sm:$0xff] %v1260
      %1265 = vst [vmem:[#allocation3 + $0x28] sm:$0xff] %v1261
      %v1266 = vld [vmem:[#allocation2] sm:$0xff]
      %v1267 = vld [vmem:[#allocation2 + $0x8] sm:$0xff]
      %v1268 = vld [vmem:[#allocation2 + $0x10] sm:$0xff]
      %v1269 = vld [vmem:[%s1] ss:$4 sm:$0x3]
      %v1271 = vlaneseq
      %v1272 = vshrl.u32 %v1271, 7
      %v1273 = vsub.s32 0, %v1272
      %v1274 = vrot.slane %v1269, %v1273
      %v1275 = vlaneseq
      %v1276 = vshrl.u32 %v1275, 7
      %v1277 = vsub.s32 1, %v1276
      %v1278 = vrot.slane %v1269, %v1277
      %1279 = vrot.lane.b32.xlu0 %v1274, 127
      %v1280 = vpop.permute.xlu0 %1279
      %1281 = vrot.lane.b32.xlu0 %v1278, 127
      %v1282 = vpop.permute.xlu0 %1281
      %v1283 = vsel %vm489, %v1280, %v1282
      %v1287 = vmul.f32 %v1266, %v1280
      %v1288 = vmul.f32 %v1267, %v1283
      %v1289 = vmul.f32 %v1268, %v1282
      %1293 = vrot.lane.b32.xlu0 %v1287, 1
      %v1294 = vpop.permute.xlu0 %1293
      %1295 = vrot.lane.b32.xlu0 %v1288, 1
      %v1296 = vpop.permute.xlu0 %1295
      %1297 = vrot.lane.b32.xlu0 %v1289, 1
      %v1298 = vpop.permute.xlu0 %1297
      %v1299 = vsel %vm506, %v1294, %v1296
      %v1300 = vsel %vm506, %v1296, %v1298
      %1303 = vst [vmem:[#allocation3 + $0x30] sm:$0xff] %v1299
      %1304 = vst [vmem:[#allocation3 + $0x38] sm:$0xff] %v1300
      %v1305 = vld [vmem:[#allocation2 + $0x8] sm:$0xff]
      %v1306 = vld [vmem:[#allocation2 + $0x10] sm:$0xff]
      %1307 = vst [vmem:[#allocation3 + $0x40] sm:$0xff] %v1305
      %1308 = vst [vmem:[#allocation3 + $0x48] sm:$0xff] %v1306
      %v1309 = vld [vmem:[#allocation2 + $0x8] sm:$0xff]
      %v1310 = vld [vmem:[#allocation2 + $0x10] sm:$0xff]
      %v1311 = vld [vmem:[#allocation2 + $0x18] sm:$0xff]
      %v1312 = vld [vmem:[%s433] ss:$4 sm:$0x3]
      %v1314 = vlaneseq
      %v1315 = vshrl.u32 %v1314, 7
      %v1316 = vsub.s32 0, %v1315
      %v1317 = vrot.slane %v1312, %v1316
      %v1318 = vlaneseq
      %v1319 = vshrl.u32 %v1318, 7
      %v1320 = vsub.s32 1, %v1319
      %v1321 = vrot.slane %v1312, %v1320
      %1322 = vrot.lane.b32.xlu0 %v1317, 1
      %v1323 = vpop.permute.xlu0 %1322
      %1324 = vrot.lane.b32.xlu0 %v1321, 1
      %v1325 = vpop.permute.xlu0 %1324
      %v1326 = vsel %vm506, %v1323, %v1325
      %v1330 = vmul.f32 %v1309, %v1323
      %v1331 = vmul.f32 %v1310, %v1326
      %v1332 = vmul.f32 %v1311, %v1325
      %1336 = vrot.lane.b32.xlu0 %v1330, 127
      %v1337 = vpop.permute.xlu0 %1336
      %1338 = vrot.lane.b32.xlu0 %v1331, 127
      %v1339 = vpop.permute.xlu0 %1338
      %1340 = vrot.lane.b32.xlu0 %v1332, 127
      %v1341 = vpop.permute.xlu0 %1340
      %v1342 = vsel %vm489, %v1337, %v1339
      %v1343 = vsel %vm489, %v1339, %v1341
      %1346 = vst [vmem:[#allocation3 + $0x50] sm:$0xff] %v1342
      %1347 = vst [vmem:[#allocation3 + $0x58] sm:$0xff] %v1343
      %v1348 = vld [vmem:[#allocation2 + $0x8] sm:$0xff]
      %v1349 = vld [vmem:[#allocation2 + $0x10] sm:$0xff]
      %v1350 = vld [vmem:[#allocation2 + $0x18] sm:$0xff]
      %v1351 = vld [vmem:[%s1] ss:$4 sm:$0x3]
      %v1353 = vlaneseq
      %v1354 = vshrl.u32 %v1353, 7
      %v1355 = vsub.s32 0, %v1354
      %v1356 = vrot.slane %v1351, %v1355
      %v1357 = vlaneseq
      %v1358 = vshrl.u32 %v1357, 7
      %v1359 = vsub.s32 1, %v1358
      %v1360 = vrot.slane %v1351, %v1359
      %1361 = vrot.lane.b32.xlu0 %v1356, 15
      %v1362 = vpop.permute.xlu0 %1361
      %1363 = vrot.lane.b32.xlu0 %v1360, 15
      %v1364 = vpop.permute.xlu0 %1363
      %v1365 = vsel %vm465, %v1362, %v1364
      %v1369 = vmul.f32 %v1348, %v1362
      %v1370 = vmul.f32 %v1349, %v1365
      %v1371 = vmul.f32 %v1350, %v1364
      %1375 = vrot.lane.b32.xlu0 %v1369, 113
      %v1376 = vpop.permute.xlu0 %1375
      %1377 = vrot.lane.b32.xlu0 %v1370, 113
      %v1378 = vpop.permute.xlu0 %1377
      %1379 = vrot.lane.b32.xlu0 %v1371, 113
      %v1380 = vpop.permute.xlu0 %1379
      %v1381 = vsel %vm448, %v1376, %v1378
      %v1382 = vsel %vm448, %v1378, %v1380
      %1385 = vst [vmem:[#allocation3 + $0x60] sm:$0xff] %v1381
      %1386 = vst [vmem:[#allocation3 + $0x68] sm:$0xff] %v1382
      %v1387 = vld [vmem:[#allocation2 + $0x8] sm:$0xff]
      %v1388 = vld [vmem:[#allocation2 + $0x10] sm:$0xff]
      %v1389 = vld [vmem:[#allocation2 + $0x18] sm:$0xff]
      %1393 = vrot.lane.b32.xlu0 %v1387, 112
      %v1394 = vpop.permute.xlu0 %1393
      %1395 = vrot.lane.b32.xlu0 %v1388, 112
      %v1396 = vpop.permute.xlu0 %1395
      %1397 = vrot.lane.b32.xlu0 %v1389, 112
      %v1398 = vpop.permute.xlu0 %1397
      %v1399 = vsel %vm607, %v1394, %v1396
      %v1400 = vsel %vm607, %v1396, %v1398
      %1403 = vst [vmem:[#allocation3 + $0x70] sm:$0xff] %v1399
      %1404 = vst [vmem:[#allocation3 + $0x78] sm:$0xff] %v1400
      %v1405 = vld [vmem:[#allocation2 + $0x8] sm:$0xff]
      %v1406 = vld [vmem:[#allocation2 + $0x10] sm:$0xff]
      %v1407 = vld [vmem:[#allocation2 + $0x18] sm:$0xff]
      %v1408 = vld [vmem:[%s433] ss:$4 sm:$0x3]
      %v1410 = vlaneseq
      %v1411 = vshrl.u32 %v1410, 7
      %v1412 = vsub.s32 0, %v1411
      %v1413 = vrot.slane %v1408, %v1412
      %v1414 = vlaneseq
      %v1415 = vshrl.u32 %v1414, 7
      %v1416 = vsub.s32 1, %v1415
      %v1417 = vrot.slane %v1408, %v1416
      %1418 = vrot.lane.b32.xlu0 %v1413, 17
      %v1419 = vpop.permute.xlu0 %1418
      %1420 = vrot.lane.b32.xlu0 %v1417, 17
      %v1421 = vpop.permute.xlu0 %1420
      %v1422 = vsel %vm404, %v1419, %v1421
      %v1426 = vmul.f32 %v1405, %v1419
      %v1427 = vmul.f32 %v1406, %v1422
      %v1428 = vmul.f32 %v1407, %v1421
      %1432 = vrot.lane.b32.xlu0 %v1426, 111
      %v1433 = vpop.permute.xlu0 %1432
      %1434 = vrot.lane.b32.xlu0 %v1427, 111
      %v1435 = vpop.permute.xlu0 %1434
      %1436 = vrot.lane.b32.xlu0 %v1428, 111
      %v1437 = vpop.permute.xlu0 %1436
      %v1438 = vsel %vm387, %v1433, %v1435
      %v1439 = vsel %vm387, %v1435, %v1437
      %1442 = vst [vmem:[#allocation3 + $0x80] sm:$0xff] %v1438
      %1443 = vst [vmem:[#allocation3 + $0x88] sm:$0xff] %v1439
      %v1444 = vld [vmem:[#allocation3] sm:$0xff]
      %v1445 = vld [vmem:[#allocation3 + $0x8] sm:$0xff]
      %v1446 = vld [vmem:[#allocation3 + $0x10] sm:$0xff]
      %v1447 = vld [vmem:[#allocation3 + $0x18] sm:$0xff]
      %v1448 = vld [vmem:[#allocation3 + $0x20] sm:$0xff]
      %v1449 = vld [vmem:[#allocation3 + $0x28] sm:$0xff]
      %v1450 = vld [vmem:[#allocation3 + $0x30] sm:$0xff]
      %v1451 = vld [vmem:[#allocation3 + $0x38] sm:$0xff]
      %v1452 = vld [vmem:[#allocation3 + $0x40] sm:$0xff]
      %v1453 = vld [vmem:[#allocation3 + $0x48] sm:$0xff]
      %v1454 = vld [vmem:[#allocation3 + $0x50] sm:$0xff]
      %v1455 = vld [vmem:[#allocation3 + $0x58] sm:$0xff]
      %v1456 = vld [vmem:[#allocation3 + $0x60] sm:$0xff]
      %v1457 = vld [vmem:[#allocation3 + $0x68] sm:$0xff]
      %v1458 = vld [vmem:[#allocation3 + $0x70] sm:$0xff]
      %v1459 = vld [vmem:[#allocation3 + $0x78] sm:$0xff]
      %v1460 = vld [vmem:[#allocation3 + $0x80] sm:$0xff]
      %v1461 = vld [vmem:[#allocation3 + $0x88] sm:$0xff]
      %1463 = vset.pattern.permute.xlu0 0
      %1464 = vperm.xlu0 %1463, %v1169
      %v1465 = vpop.permute.xlu0 %1464
      %v1468 = vsel %vm676, %v1167, 0
      %1470 = vmatprep.subr.mxu0 0.0
      %1471 = vmatpush1.msra.mxu0 0.0
      %1472 = vmatprep.subr.mxu0 0.0
      %1473 = vmatpush1.msra.mxu0 0.0
      %1474 = vmatprep.subr.mxu0 0.0
      %1475 = vmatpush1.msra.mxu0 0.0
      %1476 = vmatprep.subr.mxu0 0.0
      %1477 = vmatpush1.msra.mxu0 0.0
      %1478 = vmatprep.subr.mxu0 0.0
      %1479 = vmatpush1.msra.mxu0 0.0
      %1480 = vmatprep.subr.mxu0 0.0
      %1481 = vmatpush1.msra.mxu0 0.0
      %1482 = vmatprep.subr.mxu0 0.0
      %1483 = vmatpush1.msra.mxu0 0.0
      %1484 = vmatprep.subr.mxu0 %v1461
      %1485 = vmatpush1.msra.mxu0 %v1460
      %1486 = vmatprep.subr.mxu0 %v1459
      %1487 = vmatpush1.msra.mxu0 %v1458
      %1488 = vmatprep.subr.mxu0 %v1457
      %1489 = vmatpush1.msra.mxu0 %v1456
      %1490 = vmatprep.subr.mxu0 %v1455
      %1491 = vmatpush1.msra.mxu0 %v1454
      %1492 = vmatprep.subr.mxu0 %v1453
      %1493 = vmatpush1.msra.mxu0 %v1452
      %1494 = vmatprep.subr.mxu0 %v1451
      %1495 = vmatpush1.msra.mxu0 %v1450
      %1496 = vmatprep.subr.mxu0 %v1449
      %1497 = vmatpush1.msra.mxu0 %v1448
      %1498 = vmatprep.subr.mxu0 %v1447
      %1499 = vmatpush1.msra.mxu0 %v1446
      %1500 = vmatprep.subr.mxu0 %v1445
      %1501 = vmatpush1.msra.mxu0 %v1444
      %1502 = vmatprep.subr.mxu0 0.0
      %1503 = vmatpush2.msra.mxu0 0.0
      %1504 = vmatprep.subr.mxu0 0.0
      %1505 = vmatpush2.msra.mxu0 0.0
      %1506 = vmatprep.subr.mxu0 0.0
      %1507 = vmatpush2.msra.mxu0 0.0
      %1508 = vmatprep.subr.mxu0 0.0
      %1509 = vmatpush2.msra.mxu0 0.0
      %1510 = vmatprep.subr.mxu0 0.0
      %1511 = vmatpush2.msra.mxu0 0.0
      %1512 = vmatprep.subr.mxu0 0.0
      %1513 = vmatpush2.msra.mxu0 0.0
      %1514 = vmatprep.subr.mxu0 0.0
      %1515 = vmatpush2.msra.mxu0 0.0
      %1516 = vmatprep.subr.mxu0 0.0
      %1517 = vmatpush2.msra.mxu0 0.0
      %1518 = vmatprep.subr.mxu0 0.0
      %1519 = vmatpush2.msra.mxu0 0.0
      %1520 = vmatprep.subr.mxu0 0.0
      %1521 = vmatpush2.msra.mxu0 0.0
      %1522 = vmatprep.subr.mxu0 0.0
      %1523 = vmatpush2.msra.mxu0 0.0
      %1524 = vmatprep.subr.mxu0 0.0
      %1525 = vmatpush2.msra.mxu0 0.0
      %1526 = vmatprep.subr.mxu0 0.0
      %1527 = vmatpush2.msra.mxu0 0.0
      %1528 = vmatprep.subr.mxu0 0.0
      %1529 = vmatpush2.msra.mxu0 0.0
      %1530 = vmatprep.subr.mxu0 0.0
      %1531 = vmatpush2.msra.mxu0 0.0
      %1532 = vmatprep.subr.mxu0 0.0
      %1533 = vmatpush2.msra.mxu0 0.0
      %1534 = vmatprep.mubr.f32.mxu0 0.0
      %1535 = vmatmul.mubr.f32.gmra.mxu0 %v1468
      %v1536 = vpop.f32.mrf.mxu0
      %v1537 = vadd.f32 %v1465, %v1536
      %v1538 = vpop.f32.mrf.mxu0
      %v1539 = vadd.f32 %v1465, %v1538
      %1540 = vdwg.mxu0
      %v1541 = vmax.f32 %v1537, 0.0
      %v1542 = vmax.f32 %v1539, 0.0
      %v1543 = vadd.f32 %v1541, %v751
      %v1544 = vadd.f32 %v1542, %v752
      %s1545 = scalar_lea.vmem %s6, 16
      %v1546 = vld [vmem:[%s1545] sm:$0xff]
      %1548 = vset.pattern.permute.xlu0 0
      %1549 = vperm.xlu0 %1548, %v1546
      %v1550 = vpop.permute.xlu0 %1549
      %v1552 = vmul.f32 %v1543, %v1550
      %v1553 = vmul.f32 %v1544, %v1550
      %s1554 = scalar_lea.vmem %s7, 16
      %v1555 = vld [vmem:[%s1554] sm:$0xff]
      %1557 = vset.pattern.permute.xlu0 0
      %1558 = vperm.xlu0 %1557, %v1555
      %v1559 = vpop.permute.xlu0 %1558
      %v1561 = vadd.f32 %v1552, %v1559
      %v1562 = vadd.f32 %v1553, %v1559
      %1563 = vst [vmem:[#allocation2 + $0x8] sm:$0xff] %v1561
      %1564 = vst [vmem:[#allocation2 + $0x10] sm:$0xff] %v1562
      %s1565 = scalar_lea.vmem %s4, 16
      %v1566 = vld [vmem:[%s1565] sm:$0xff]
      %s1567 = scalar_lea.vmem %s5, 16
      %v1568 = vld [vmem:[%s1567] sm:$0xff]
      %v1569 = vld [vmem:[#allocation2] sm:$0xff]
      %v1570 = vld [vmem:[#allocation2 + $0x8] sm:$0xff]
      %v1571 = vld [vmem:[#allocation2 + $0x10] sm:$0xff]
      %v1572 = vld [vmem:[%s1] ss:$4 sm:$0x3]
      %v1574 = vlaneseq
      %v1575 = vshrl.u32 %v1574, 7
      %v1576 = vsub.s32 0, %v1575
      %v1577 = vrot.slane %v1572, %v1576
      %v1578 = vlaneseq
      %v1579 = vshrl.u32 %v1578, 7
      %v1580 = vsub.s32 1, %v1579
      %v1581 = vrot.slane %v1572, %v1580
      %1582 = vrot.lane.b32.xlu0 %v1577, 111
      %v1583 = vpop.permute.xlu0 %1582
      %1584 = vrot.lane.b32.xlu0 %v1581, 111
      %v1585 = vpop.permute.xlu0 %1584
      %v1586 = vsel %vm387, %v1583, %v1585
      %v1590 = vmul.f32 %v1569, %v1583
      %v1591 = vmul.f32 %v1570, %v1586
      %v1592 = vmul.f32 %v1571, %v1585
      %1596 = vrot.lane.b32.xlu0 %v1590, 17
      %v1597 = vpop.permute.xlu0 %1596
      %1598 = vrot.lane.b32.xlu0 %v1591, 17
      %v1599 = vpop.permute.xlu0 %1598
      %1600 = vrot.lane.b32.xlu0 %v1592, 17
      %v1601 = vpop.permute.xlu0 %1600
      %v1602 = vsel %vm404, %v1597, %v1599
      %v1603 = vsel %vm404, %v1599, %v1601
      %1606 = vst [vmem:[#allocation3] sm:$0xff] %v1602
      %1607 = vst [vmem:[#allocation3 + $0x8] sm:$0xff] %v1603
      %v1608 = vld [vmem:[#allocation2] sm:$0xff]
      %v1609 = vld [vmem:[#allocation2 + $0x8] sm:$0xff]
      %v1610 = vld [vmem:[#allocation2 + $0x10] sm:$0xff]
      %1614 = vrot.lane.b32.xlu0 %v1608, 16
      %v1615 = vpop.permute.xlu0 %1614
      %1616 = vrot.lane.b32.xlu0 %v1609, 16
      %v1617 = vpop.permute.xlu0 %1616
      %1618 = vrot.lane.b32.xlu0 %v1610, 16
      %v1619 = vpop.permute.xlu0 %1618
      %v1620 = vsel %vm423, %v1615, %v1617
      %v1621 = vsel %vm423, %v1617, %v1619
      %1624 = vst [vmem:[#allocation3 + $0x10] sm:$0xff] %v1620
      %1625 = vst [vmem:[#allocation3 + $0x18] sm:$0xff] %v1621
      %v1626 = vld [vmem:[#allocation2] sm:$0xff]
      %v1627 = vld [vmem:[#allocation2 + $0x8] sm:$0xff]
      %v1628 = vld [vmem:[#allocation2 + $0x10] sm:$0xff]
      %v1629 = vld [vmem:[%s433] ss:$4 sm:$0x3]
      %v1631 = vlaneseq
      %v1632 = vshrl.u32 %v1631, 7
      %v1633 = vsub.s32 0, %v1632
      %v1634 = vrot.slane %v1629, %v1633
      %v1635 = vlaneseq
      %v1636 = vshrl.u32 %v1635, 7
      %v1637 = vsub.s32 1, %v1636
      %v1638 = vrot.slane %v1629, %v1637
      %1639 = vrot.lane.b32.xlu0 %v1634, 113
      %v1640 = vpop.permute.xlu0 %1639
      %1641 = vrot.lane.b32.xlu0 %v1638, 113
      %v1642 = vpop.permute.xlu0 %1641
      %v1643 = vsel %vm448, %v1640, %v1642
      %v1647 = vmul.f32 %v1626, %v1640
      %v1648 = vmul.f32 %v1627, %v1643
      %v1649 = vmul.f32 %v1628, %v1642
      %1653 = vrot.lane.b32.xlu0 %v1647, 15
      %v1654 = vpop.permute.xlu0 %1653
      %1655 = vrot.lane.b32.xlu0 %v1648, 15
      %v1656 = vpop.permute.xlu0 %1655
      %1657 = vrot.lane.b32.xlu0 %v1649, 15
      %v1658 = vpop.permute.xlu0 %1657
      %v1659 = vsel %vm465, %v1654, %v1656
      %v1660 = vsel %vm465, %v1656, %v1658
      %1663 = vst [vmem:[#allocation3 + $0x20] sm:$0xff] %v1659
      %1664 = vst [vmem:[#allocation3 + $0x28] sm:$0xff] %v1660
      %v1665 = vld [vmem:[#allocation2] sm:$0xff]
      %v1666 = vld [vmem:[#allocation2 + $0x8] sm:$0xff]
      %v1667 = vld [vmem:[#allocation2 + $0x10] sm:$0xff]
      %v1668 = vld [vmem:[%s1] ss:$4 sm:$0x3]
      %v1670 = vlaneseq
      %v1671 = vshrl.u32 %v1670, 7
      %v1672 = vsub.s32 0, %v1671
      %v1673 = vrot.slane %v1668, %v1672
      %v1674 = vlaneseq
      %v1675 = vshrl.u32 %v1674, 7
      %v1676 = vsub.s32 1, %v1675
      %v1677 = vrot.slane %v1668, %v1676
      %1678 = vrot.lane.b32.xlu0 %v1673, 127
      %v1679 = vpop.permute.xlu0 %1678
      %1680 = vrot.lane.b32.xlu0 %v1677, 127
      %v1681 = vpop.permute.xlu0 %1680
      %v1682 = vsel %vm489, %v1679, %v1681
      %v1686 = vmul.f32 %v1665, %v1679
      %v1687 = vmul.f32 %v1666, %v1682
      %v1688 = vmul.f32 %v1667, %v1681
      %1692 = vrot.lane.b32.xlu0 %v1686, 1
      %v1693 = vpop.permute.xlu0 %1692
      %1694 = vrot.lane.b32.xlu0 %v1687, 1
      %v1695 = vpop.permute.xlu0 %1694
      %1696 = vrot.lane.b32.xlu0 %v1688, 1
      %v1697 = vpop.permute.xlu0 %1696
      %v1698 = vsel %vm506, %v1693, %v1695
      %v1699 = vsel %vm506, %v1695, %v1697
      %1702 = vst [vmem:[#allocation3 + $0x30] sm:$0xff] %v1698
      %1703 = vst [vmem:[#allocation3 + $0x38] sm:$0xff] %v1699
      %v1704 = vld [vmem:[#allocation2 + $0x8] sm:$0xff]
      %v1705 = vld [vmem:[#allocation2 + $0x10] sm:$0xff]
      %1706 = vst [vmem:[#allocation3 + $0x40] sm:$0xff] %v1704
      %1707 = vst [vmem:[#allocation3 + $0x48] sm:$0xff] %v1705
      %v1708 = vld [vmem:[#allocation2 + $0x8] sm:$0xff]
      %v1709 = vld [vmem:[#allocation2 + $0x10] sm:$0xff]
      %v1710 = vld [vmem:[#allocation2 + $0x18] sm:$0xff]
      %v1711 = vld [vmem:[%s433] ss:$4 sm:$0x3]
      %v1713 = vlaneseq
      %v1714 = vshrl.u32 %v1713, 7
      %v1715 = vsub.s32 0, %v1714
      %v1716 = vrot.slane %v1711, %v1715
      %v1717 = vlaneseq
      %v1718 = vshrl.u32 %v1717, 7
      %v1719 = vsub.s32 1, %v1718
      %v1720 = vrot.slane %v1711, %v1719
      %1721 = vrot.lane.b32.xlu0 %v1716, 1
      %v1722 = vpop.permute.xlu0 %1721
      %1723 = vrot.lane.b32.xlu0 %v1720, 1
      %v1724 = vpop.permute.xlu0 %1723
      %v1725 = vsel %vm506, %v1722, %v1724
      %v1729 = vmul.f32 %v1708, %v1722
      %v1730 = vmul.f32 %v1709, %v1725
      %v1731 = vmul.f32 %v1710, %v1724
      %1735 = vrot.lane.b32.xlu0 %v1729, 127
      %v1736 = vpop.permute.xlu0 %1735
      %1737 = vrot.lane.b32.xlu0 %v1730, 127
      %v1738 = vpop.permute.xlu0 %1737
      %1739 = vrot.lane.b32.xlu0 %v1731, 127
      %v1740 = vpop.permute.xlu0 %1739
      %v1741 = vsel %vm489, %v1736, %v1738
      %v1742 = vsel %vm489, %v1738, %v1740
      %1745 = vst [vmem:[#allocation3 + $0x50] sm:$0xff] %v1741
      %1746 = vst [vmem:[#allocation3 + $0x58] sm:$0xff] %v1742
      %v1747 = vld [vmem:[#allocation2 + $0x8] sm:$0xff]
      %v1748 = vld [vmem:[#allocation2 + $0x10] sm:$0xff]
      %v1749 = vld [vmem:[#allocation2 + $0x18] sm:$0xff]
      %v1750 = vld [vmem:[%s1] ss:$4 sm:$0x3]
      %v1752 = vlaneseq
      %v1753 = vshrl.u32 %v1752, 7
      %v1754 = vsub.s32 0, %v1753
      %v1755 = vrot.slane %v1750, %v1754
      %v1756 = vlaneseq
      %v1757 = vshrl.u32 %v1756, 7
      %v1758 = vsub.s32 1, %v1757
      %v1759 = vrot.slane %v1750, %v1758
      %1760 = vrot.lane.b32.xlu0 %v1755, 15
      %v1761 = vpop.permute.xlu0 %1760
      %1762 = vrot.lane.b32.xlu0 %v1759, 15
      %v1763 = vpop.permute.xlu0 %1762
      %v1764 = vsel %vm465, %v1761, %v1763
      %v1768 = vmul.f32 %v1747, %v1761
      %v1769 = vmul.f32 %v1748, %v1764
      %v1770 = vmul.f32 %v1749, %v1763
      %1774 = vrot.lane.b32.xlu0 %v1768, 113
      %v1775 = vpop.permute.xlu0 %1774
      %1776 = vrot.lane.b32.xlu0 %v1769, 113
      %v1777 = vpop.permute.xlu0 %1776
      %1778 = vrot.lane.b32.xlu0 %v1770, 113
      %v1779 = vpop.permute.xlu0 %1778
      %v1780 = vsel %vm448, %v1775, %v1777
      %v1781 = vsel %vm448, %v1777, %v1779
      %1784 = vst [vmem:[#allocation3 + $0x60] sm:$0xff] %v1780
      %1785 = vst [vmem:[#allocation3 + $0x68] sm:$0xff] %v1781
      %v1786 = vld [vmem:[#allocation2 + $0x8] sm:$0xff]
      %v1787 = vld [vmem:[#allocation2 + $0x10] sm:$0xff]
      %v1788 = vld [vmem:[#allocation2 + $0x18] sm:$0xff]
      %1792 = vrot.lane.b32.xlu0 %v1786, 112
      %v1793 = vpop.permute.xlu0 %1792
      %1794 = vrot.lane.b32.xlu0 %v1787, 112
      %v1795 = vpop.permute.xlu0 %1794
      %1796 = vrot.lane.b32.xlu0 %v1788, 112
      %v1797 = vpop.permute.xlu0 %1796
      %v1798 = vsel %vm607, %v1793, %v1795
      %v1799 = vsel %vm607, %v1795, %v1797
      %1802 = vst [vmem:[#allocation3 + $0x70] sm:$0xff] %v1798
      %1803 = vst [vmem:[#allocation3 + $0x78] sm:$0xff] %v1799
      %v1804 = vld [vmem:[#allocation2 + $0x8] sm:$0xff]
      %v1805 = vld [vmem:[#allocation2 + $0x10] sm:$0xff]
      %v1806 = vld [vmem:[#allocation2 + $0x18] sm:$0xff]
      %v1807 = vld [vmem:[%s433] ss:$4 sm:$0x3]
      %v1809 = vlaneseq
      %v1810 = vshrl.u32 %v1809, 7
      %v1811 = vsub.s32 0, %v1810
      %v1812 = vrot.slane %v1807, %v1811
      %v1813 = vlaneseq
      %v1814 = vshrl.u32 %v1813, 7
      %v1815 = vsub.s32 1, %v1814
      %v1816 = vrot.slane %v1807, %v1815
      %1817 = vrot.lane.b32.xlu0 %v1812, 17
      %v1818 = vpop.permute.xlu0 %1817
      %1819 = vrot.lane.b32.xlu0 %v1816, 17
      %v1820 = vpop.permute.xlu0 %1819
      %v1821 = vsel %vm404, %v1818, %v1820
      %v1825 = vmul.f32 %v1804, %v1818
      %v1826 = vmul.f32 %v1805, %v1821
      %v1827 = vmul.f32 %v1806, %v1820
      %1831 = vrot.lane.b32.xlu0 %v1825, 111
      %v1832 = vpop.permute.xlu0 %1831
      %1833 = vrot.lane.b32.xlu0 %v1826, 111
      %v1834 = vpop.permute.xlu0 %1833
      %1835 = vrot.lane.b32.xlu0 %v1827, 111
      %v1836 = vpop.permute.xlu0 %1835
      %v1837 = vsel %vm387, %v1832, %v1834
      %v1838 = vsel %vm387, %v1834, %v1836
      %1841 = vst [vmem:[#allocation3 + $0x80] sm:$0xff] %v1837
      %1842 = vst [vmem:[#allocation3 + $0x88] sm:$0xff] %v1838
      %v1843 = vld [vmem:[#allocation3] sm:$0xff]
      %v1844 = vld [vmem:[#allocation3 + $0x8] sm:$0xff]
      %v1845 = vld [vmem:[#allocation3 + $0x10] sm:$0xff]
      %v1846 = vld [vmem:[#allocation3 + $0x18] sm:$0xff]
      %v1847 = vld [vmem:[#allocation3 + $0x20] sm:$0xff]
      %v1848 = vld [vmem:[#allocation3 + $0x28] sm:$0xff]
      %v1849 = vld [vmem:[#allocation3 + $0x30] sm:$0xff]
      %v1850 = vld [vmem:[#allocation3 + $0x38] sm:$0xff]
      %v1851 = vld [vmem:[#allocation3 + $0x40] sm:$0xff]
      %v1852 = vld [vmem:[#allocation3 + $0x48] sm:$0xff]
      %v1853 = vld [vmem:[#allocation3 + $0x50] sm:$0xff]
      %v1854 = vld [vmem:[#allocation3 + $0x58] sm:$0xff]
      %v1855 = vld [vmem:[#allocation3 + $0x60] sm:$0xff]
      %v1856 = vld [vmem:[#allocation3 + $0x68] sm:$0xff]
      %v1857 = vld [vmem:[#allocation3 + $0x70] sm:$0xff]
      %v1858 = vld [vmem:[#allocation3 + $0x78] sm:$0xff]
      %v1859 = vld [vmem:[#allocation3 + $0x80] sm:$0xff]
      %v1860 = vld [vmem:[#allocation3 + $0x88] sm:$0xff]
      %1862 = vset.pattern.permute.xlu0 0
      %1863 = vperm.xlu0 %1862, %v1568
      %v1864 = vpop.permute.xlu0 %1863
      %v1867 = vsel %vm676, %v1566, 0
      %1869 = vmatprep.subr.mxu0 0.0
      %1870 = vmatpush1.msra.mxu0 0.0
      %1871 = vmatprep.subr.mxu0 0.0
      %1872 = vmatpush1.msra.mxu0 0.0
      %1873 = vmatprep.subr.mxu0 0.0
      %1874 = vmatpush1.msra.mxu0 0.0
      %1875 = vmatprep.subr.mxu0 0.0
      %1876 = vmatpush1.msra.mxu0 0.0
      %1877 = vmatprep.subr.mxu0 0.0
      %1878 = vmatpush1.msra.mxu0 0.0
      %1879 = vmatprep.subr.mxu0 0.0
      %1880 = vmatpush1.msra.mxu0 0.0
      %1881 = vmatprep.subr.mxu0 0.0
      %1882 = vmatpush1.msra.mxu0 0.0
      %1883 = vmatprep.subr.mxu0 %v1860
      %1884 = vmatpush1.msra.mxu0 %v1859
      %1885 = vmatprep.subr.mxu0 %v1858
      %1886 = vmatpush1.msra.mxu0 %v1857
      %1887 = vmatprep.subr.mxu0 %v1856
      %1888 = vmatpush1.msra.mxu0 %v1855
      %1889 = vmatprep.subr.mxu0 %v1854
      %1890 = vmatpush1.msra.mxu0 %v1853
      %1891 = vmatprep.subr.mxu0 %v1852
      %1892 = vmatpush1.msra.mxu0 %v1851
      %1893 = vmatprep.subr.mxu0 %v1850
      %1894 = vmatpush1.msra.mxu0 %v1849
      %1895 = vmatprep.subr.mxu0 %v1848
      %1896 = vmatpush1.msra.mxu0 %v1847
      %1897 = vmatprep.subr.mxu0 %v1846
      %1898 = vmatpush1.msra.mxu0 %v1845
      %1899 = vmatprep.subr.mxu0 %v1844
      %1900 = vmatpush1.msra.mxu0 %v1843
      %1901 = vmatprep.subr.mxu0 0.0
      %1902 = vmatpush2.msra.mxu0 0.0
      %1903 = vmatprep.subr.mxu0 0.0
      %1904 = vmatpush2.msra.mxu0 0.0
      %1905 = vmatprep.subr.mxu0 0.0
      %1906 = vmatpush2.msra.mxu0 0.0
      %1907 = vmatprep.subr.mxu0 0.0
      %1908 = vmatpush2.msra.mxu0 0.0
      %1909 = vmatprep.subr.mxu0 0.0
      %1910 = vmatpush2.msra.mxu0 0.0
      %1911 = vmatprep.subr.mxu0 0.0
      %1912 = vmatpush2.msra.mxu0 0.0
      %1913 = vmatprep.subr.mxu0 0.0
      %1914 = vmatpush2.msra.mxu0 0.0
      %1915 = vmatprep.subr.mxu0 0.0
      %1916 = vmatpush2.msra.mxu0 0.0
      %1917 = vmatprep.subr.mxu0 0.0
      %1918 = vmatpush2.msra.mxu0 0.0
      %1919 = vmatprep.subr.mxu0 0.0
      %1920 = vmatpush2.msra.mxu0 0.0
      %1921 = vmatprep.subr.mxu0 0.0
      %1922 = vmatpush2.msra.mxu0 0.0
      %1923 = vmatprep.subr.mxu0 0.0
      %1924 = vmatpush2.msra.mxu0 0.0
      %1925 = vmatprep.subr.mxu0 0.0
      %1926 = vmatpush2.msra.mxu0 0.0
      %1927 = vmatprep.subr.mxu0 0.0
      %1928 = vmatpush2.msra.mxu0 0.0
      %1929 = vmatprep.subr.mxu0 0.0
      %1930 = vmatpush2.msra.mxu0 0.0
      %1931 = vmatprep.subr.mxu0 0.0
      %1932 = vmatpush2.msra.mxu0 0.0
      %1933 = vmatprep.mubr.f32.mxu0 0.0
      %1934 = vmatmul.mubr.f32.gmra.mxu0 %v1867
      %v1935 = vpop.f32.mrf.mxu0
      %v1936 = vadd.f32 %v1864, %v1935
      %v1937 = vpop.f32.mrf.mxu0
      %v1938 = vadd.f32 %v1864, %v1937
      %1939 = vdwg.mxu0
      %v1940 = vmax.f32 %v1936, 0.0
      %v1941 = vmax.f32 %v1938, 0.0
      %s1942 = scalar_lea.vmem %s6, 24
      %v1943 = vld [vmem:[%s1942] sm:$0xff]
      %1945 = vset.pattern.permute.xlu0 0
      %1946 = vperm.xlu0 %1945, %v1943
      %v1947 = vpop.permute.xlu0 %1946
      %v1949 = vmul.f32 %v1940, %v1947
      %v1950 = vmul.f32 %v1941, %v1947
      %s1951 = scalar_lea.vmem %s7, 24
      %v1952 = vld [vmem:[%s1951] sm:$0xff]
      %1954 = vset.pattern.permute.xlu0 0
      %1955 = vperm.xlu0 %1954, %v1952
      %v1956 = vpop.permute.xlu0 %1955
      %v1958 = vadd.f32 %v1949, %v1956
      %v1959 = vadd.f32 %v1950, %v1956
      %1960 = vst [vmem:[#allocation2 + $0x8] sm:$0xff] %v1958
      %1961 = vst [vmem:[#allocation2 + $0x10] sm:$0xff] %v1959
      %s1962 = scalar_lea.vmem %s4, 24
      %v1963 = vld [vmem:[%s1962] sm:$0xff]
      %s1964 = scalar_lea.vmem %s5, 24
      %v1965 = vld [vmem:[%s1964] sm:$0xff]
      %v1966 = vld [vmem:[#allocation2] sm:$0xff]
      %v1967 = vld [vmem:[#allocation2 + $0x8] sm:$0xff]
      %v1968 = vld [vmem:[#allocation2 + $0x10] sm:$0xff]
      %v1969 = vld [vmem:[%s1] ss:$4 sm:$0x3]
      %v1971 = vlaneseq
      %v1972 = vshrl.u32 %v1971, 7
      %v1973 = vsub.s32 0, %v1972
      %v1974 = vrot.slane %v1969, %v1973
      %v1975 = vlaneseq
      %v1976 = vshrl.u32 %v1975, 7
      %v1977 = vsub.s32 1, %v1976
      %v1978 = vrot.slane %v1969, %v1977
      %1979 = vrot.lane.b32.xlu0 %v1974, 111
      %v1980 = vpop.permute.xlu0 %1979
      %1981 = vrot.lane.b32.xlu0 %v1978, 111
      %v1982 = vpop.permute.xlu0 %1981
      %v1983 = vsel %vm387, %v1980, %v1982
      %v1987 = vmul.f32 %v1966, %v1980
      %v1988 = vmul.f32 %v1967, %v1983
      %v1989 = vmul.f32 %v1968, %v1982
      %1993 = vrot.lane.b32.xlu0 %v1987, 17
      %v1994 = vpop.permute.xlu0 %1993
      %1995 = vrot.lane.b32.xlu0 %v1988, 17
      %v1996 = vpop.permute.xlu0 %1995
      %1997 = vrot.lane.b32.xlu0 %v1989, 17
      %v1998 = vpop.permute.xlu0 %1997
      %v1999 = vsel %vm404, %v1994, %v1996
      %v2000 = vsel %vm404, %v1996, %v1998
      %2003 = vst [vmem:[#allocation3] sm:$0xff] %v1999
      %2004 = vst [vmem:[#allocation3 + $0x8] sm:$0xff] %v2000
      %v2005 = vld [vmem:[#allocation2] sm:$0xff]
      %v2006 = vld [vmem:[#allocation2 + $0x8] sm:$0xff]
      %v2007 = vld [vmem:[#allocation2 + $0x10] sm:$0xff]
      %2011 = vrot.lane.b32.xlu0 %v2005, 16
      %v2012 = vpop.permute.xlu0 %2011
      %2013 = vrot.lane.b32.xlu0 %v2006, 16
      %v2014 = vpop.permute.xlu0 %2013
      %2015 = vrot.lane.b32.xlu0 %v2007, 16
      %v2016 = vpop.permute.xlu0 %2015
      %v2017 = vsel %vm423, %v2012, %v2014
      %v2018 = vsel %vm423, %v2014, %v2016
      %2021 = vst [vmem:[#allocation3 + $0x10] sm:$0xff] %v2017
      %2022 = vst [vmem:[#allocation3 + $0x18] sm:$0xff] %v2018
      %v2023 = vld [vmem:[#allocation2] sm:$0xff]
      %v2024 = vld [vmem:[#allocation2 + $0x8] sm:$0xff]
      %v2025 = vld [vmem:[#allocation2 + $0x10] sm:$0xff]
      %v2026 = vld [vmem:[%s433] ss:$4 sm:$0x3]
      %v2028 = vlaneseq
      %v2029 = vshrl.u32 %v2028, 7
      %v2030 = vsub.s32 0, %v2029
      %v2031 = vrot.slane %v2026, %v2030
      %v2032 = vlaneseq
      %v2033 = vshrl.u32 %v2032, 7
      %v2034 = vsub.s32 1, %v2033
      %v2035 = vrot.slane %v2026, %v2034
      %2036 = vrot.lane.b32.xlu0 %v2031, 113
      %v2037 = vpop.permute.xlu0 %2036
      %2038 = vrot.lane.b32.xlu0 %v2035, 113
      %v2039 = vpop.permute.xlu0 %2038
      %v2040 = vsel %vm448, %v2037, %v2039
      %v2044 = vmul.f32 %v2023, %v2037
      %v2045 = vmul.f32 %v2024, %v2040
      %v2046 = vmul.f32 %v2025, %v2039
      %2050 = vrot.lane.b32.xlu0 %v2044, 15
      %v2051 = vpop.permute.xlu0 %2050
      %2052 = vrot.lane.b32.xlu0 %v2045, 15
      %v2053 = vpop.permute.xlu0 %2052
      %2054 = vrot.lane.b32.xlu0 %v2046, 15
      %v2055 = vpop.permute.xlu0 %2054
      %v2056 = vsel %vm465, %v2051, %v2053
      %v2057 = vsel %vm465, %v2053, %v2055
      %2060 = vst [vmem:[#allocation3 + $0x20] sm:$0xff] %v2056
      %2061 = vst [vmem:[#allocation3 + $0x28] sm:$0xff] %v2057
      %v2062 = vld [vmem:[#allocation2] sm:$0xff]
      %v2063 = vld [vmem:[#allocation2 + $0x8] sm:$0xff]
      %v2064 = vld [vmem:[#allocation2 + $0x10] sm:$0xff]
      %v2065 = vld [vmem:[%s1] ss:$4 sm:$0x3]
      %v2067 = vlaneseq
      %v2068 = vshrl.u32 %v2067, 7
      %v2069 = vsub.s32 0, %v2068
      %v2070 = vrot.slane %v2065, %v2069
      %v2071 = vlaneseq
      %v2072 = vshrl.u32 %v2071, 7
      %v2073 = vsub.s32 1, %v2072
      %v2074 = vrot.slane %v2065, %v2073
      %2075 = vrot.lane.b32.xlu0 %v2070, 127
      %v2076 = vpop.permute.xlu0 %2075
      %2077 = vrot.lane.b32.xlu0 %v2074, 127
      %v2078 = vpop.permute.xlu0 %2077
      %v2079 = vsel %vm489, %v2076, %v2078
      %v2083 = vmul.f32 %v2062, %v2076
      %v2084 = vmul.f32 %v2063, %v2079
      %v2085 = vmul.f32 %v2064, %v2078
      %2089 = vrot.lane.b32.xlu0 %v2083, 1
      %v2090 = vpop.permute.xlu0 %2089
      %2091 = vrot.lane.b32.xlu0 %v2084, 1
      %v2092 = vpop.permute.xlu0 %2091
      %2093 = vrot.lane.b32.xlu0 %v2085, 1
      %v2094 = vpop.permute.xlu0 %2093
      %v2095 = vsel %vm506, %v2090, %v2092
      %v2096 = vsel %vm506, %v2092, %v2094
      %2099 = vst [vmem:[#allocation3 + $0x30] sm:$0xff] %v2095
      %2100 = vst [vmem:[#allocation3 + $0x38] sm:$0xff] %v2096
      %v2101 = vld [vmem:[#allocation2 + $0x8] sm:$0xff]
      %v2102 = vld [vmem:[#allocation2 + $0x10] sm:$0xff]
      %2103 = vst [vmem:[#allocation3 + $0x40] sm:$0xff] %v2101
      %2104 = vst [vmem:[#allocation3 + $0x48] sm:$0xff] %v2102
      %v2105 = vld [vmem:[#allocation2 + $0x8] sm:$0xff]
      %v2106 = vld [vmem:[#allocation2 + $0x10] sm:$0xff]
      %v2107 = vld [vmem:[#allocation2 + $0x18] sm:$0xff]
      %v2108 = vld [vmem:[%s433] ss:$4 sm:$0x3]
      %v2110 = vlaneseq
      %v2111 = vshrl.u32 %v2110, 7
      %v2112 = vsub.s32 0, %v2111
      %v2113 = vrot.slane %v2108, %v2112
      %v2114 = vlaneseq
      %v2115 = vshrl.u32 %v2114, 7
      %v2116 = vsub.s32 1, %v2115
      %v2117 = vrot.slane %v2108, %v2116
      %2118 = vrot.lane.b32.xlu0 %v2113, 1
      %v2119 = vpop.permute.xlu0 %2118
      %2120 = vrot.lane.b32.xlu0 %v2117, 1
      %v2121 = vpop.permute.xlu0 %2120
      %v2122 = vsel %vm506, %v2119, %v2121
      %v2126 = vmul.f32 %v2105, %v2119
      %v2127 = vmul.f32 %v2106, %v2122
      %v2128 = vmul.f32 %v2107, %v2121
      %2132 = vrot.lane.b32.xlu0 %v2126, 127
      %v2133 = vpop.permute.xlu0 %2132
      %2134 = vrot.lane.b32.xlu0 %v2127, 127
      %v2135 = vpop.permute.xlu0 %2134
      %2136 = vrot.lane.b32.xlu0 %v2128, 127
      %v2137 = vpop.permute.xlu0 %2136
      %v2138 = vsel %vm489, %v2133, %v2135
      %v2139 = vsel %vm489, %v2135, %v2137
      %2142 = vst [vmem:[#allocation3 + $0x50] sm:$0xff] %v2138
      %2143 = vst [vmem:[#allocation3 + $0x58] sm:$0xff] %v2139
      %v2144 = vld [vmem:[#allocation2 + $0x8] sm:$0xff]
      %v2145 = vld [vmem:[#allocation2 + $0x10] sm:$0xff]
      %v2146 = vld [vmem:[#allocation2 + $0x18] sm:$0xff]
      %v2147 = vld [vmem:[%s1] ss:$4 sm:$0x3]
      %v2149 = vlaneseq
      %v2150 = vshrl.u32 %v2149, 7
      %v2151 = vsub.s32 0, %v2150
      %v2152 = vrot.slane %v2147, %v2151
      %v2153 = vlaneseq
      %v2154 = vshrl.u32 %v2153, 7
      %v2155 = vsub.s32 1, %v2154
      %v2156 = vrot.slane %v2147, %v2155
      %2157 = vrot.lane.b32.xlu0 %v2152, 15
      %v2158 = vpop.permute.xlu0 %2157
      %2159 = vrot.lane.b32.xlu0 %v2156, 15
      %v2160 = vpop.permute.xlu0 %2159
      %v2161 = vsel %vm465, %v2158, %v2160
      %v2165 = vmul.f32 %v2144, %v2158
      %v2166 = vmul.f32 %v2145, %v2161
      %v2167 = vmul.f32 %v2146, %v2160
      %2171 = vrot.lane.b32.xlu0 %v2165, 113
      %v2172 = vpop.permute.xlu0 %2171
      %2173 = vrot.lane.b32.xlu0 %v2166, 113
      %v2174 = vpop.permute.xlu0 %2173
      %2175 = vrot.lane.b32.xlu0 %v2167, 113
      %v2176 = vpop.permute.xlu0 %2175
      %v2177 = vsel %vm448, %v2172, %v2174
      %v2178 = vsel %vm448, %v2174, %v2176
      %2181 = vst [vmem:[#allocation3 + $0x60] sm:$0xff] %v2177
      %2182 = vst [vmem:[#allocation3 + $0x68] sm:$0xff] %v2178
      %v2183 = vld [vmem:[#allocation2 + $0x8] sm:$0xff]
      %v2184 = vld [vmem:[#allocation2 + $0x10] sm:$0xff]
      %v2185 = vld [vmem:[#allocation2 + $0x18] sm:$0xff]
      %2189 = vrot.lane.b32.xlu0 %v2183, 112
      %v2190 = vpop.permute.xlu0 %2189
      %2191 = vrot.lane.b32.xlu0 %v2184, 112
      %v2192 = vpop.permute.xlu0 %2191
      %2193 = vrot.lane.b32.xlu0 %v2185, 112
      %v2194 = vpop.permute.xlu0 %2193
      %v2195 = vsel %vm607, %v2190, %v2192
      %v2196 = vsel %vm607, %v2192, %v2194
      %2199 = vst [vmem:[#allocation3 + $0x70] sm:$0xff] %v2195
      %2200 = vst [vmem:[#allocation3 + $0x78] sm:$0xff] %v2196
      %v2201 = vld [vmem:[#allocation2 + $0x8] sm:$0xff]
      %v2202 = vld [vmem:[#allocation2 + $0x10] sm:$0xff]
      %v2203 = vld [vmem:[#allocation2 + $0x18] sm:$0xff]
      %v2204 = vld [vmem:[%s433] ss:$4 sm:$0x3]
      %v2206 = vlaneseq
      %v2207 = vshrl.u32 %v2206, 7
      %v2208 = vsub.s32 0, %v2207
      %v2209 = vrot.slane %v2204, %v2208
      %v2210 = vlaneseq
      %v2211 = vshrl.u32 %v2210, 7
      %v2212 = vsub.s32 1, %v2211
      %v2213 = vrot.slane %v2204, %v2212
      %2214 = vrot.lane.b32.xlu0 %v2209, 17
      %v2215 = vpop.permute.xlu0 %2214
      %2216 = vrot.lane.b32.xlu0 %v2213, 17
      %v2217 = vpop.permute.xlu0 %2216
      %v2218 = vsel %vm404, %v2215, %v2217
      %v2222 = vmul.f32 %v2201, %v2215
      %v2223 = vmul.f32 %v2202, %v2218
      %v2224 = vmul.f32 %v2203, %v2217
      %2228 = vrot.lane.b32.xlu0 %v2222, 111
      %v2229 = vpop.permute.xlu0 %2228
      %2230 = vrot.lane.b32.xlu0 %v2223, 111
      %v2231 = vpop.permute.xlu0 %2230
      %2232 = vrot.lane.b32.xlu0 %v2224, 111
      %v2233 = vpop.permute.xlu0 %2232
      %v2234 = vsel %vm387, %v2229, %v2231
      %v2235 = vsel %vm387, %v2231, %v2233
      %2238 = vst [vmem:[#allocation3 + $0x80] sm:$0xff] %v2234
      %2239 = vst [vmem:[#allocation3 + $0x88] sm:$0xff] %v2235
      %v2240 = vld [vmem:[#allocation3] sm:$0xff]
      %v2241 = vld [vmem:[#allocation3 + $0x8] sm:$0xff]
      %v2242 = vld [vmem:[#allocation3 + $0x10] sm:$0xff]
      %v2243 = vld [vmem:[#allocation3 + $0x18] sm:$0xff]
      %v2244 = vld [vmem:[#allocation3 + $0x20] sm:$0xff]
      %v2245 = vld [vmem:[#allocation3 + $0x28] sm:$0xff]
      %v2246 = vld [vmem:[#allocation3 + $0x30] sm:$0xff]
      %v2247 = vld [vmem:[#allocation3 + $0x38] sm:$0xff]
      %v2248 = vld [vmem:[#allocation3 + $0x40] sm:$0xff]
      %v2249 = vld [vmem:[#allocation3 + $0x48] sm:$0xff]
      %v2250 = vld [vmem:[#allocation3 + $0x50] sm:$0xff]
      %v2251 = vld [vmem:[#allocation3 + $0x58] sm:$0xff]
      %v2252 = vld [vmem:[#allocation3 + $0x60] sm:$0xff]
      %v2253 = vld [vmem:[#allocation3 + $0x68] sm:$0xff]
      %v2254 = vld [vmem:[#allocation3 + $0x70] sm:$0xff]
      %v2255 = vld [vmem:[#allocation3 + $0x78] sm:$0xff]
      %v2256 = vld [vmem:[#allocation3 + $0x80] sm:$0xff]
      %v2257 = vld [vmem:[#allocation3 + $0x88] sm:$0xff]
      %2259 = vset.pattern.permute.xlu0 0
      %2260 = vperm.xlu0 %2259, %v1965
      %v2261 = vpop.permute.xlu0 %2260
      %v2264 = vsel %vm676, %v1963, 0
      %2266 = vmatprep.subr.mxu0 0.0
      %2267 = vmatpush1.msra.mxu0 0.0
      %2268 = vmatprep.subr.mxu0 0.0
      %2269 = vmatpush1.msra.mxu0 0.0
      %2270 = vmatprep.subr.mxu0 0.0
      %2271 = vmatpush1.msra.mxu0 0.0
      %2272 = vmatprep.subr.mxu0 0.0
      %2273 = vmatpush1.msra.mxu0 0.0
      %2274 = vmatprep.subr.mxu0 0.0
      %2275 = vmatpush1.msra.mxu0 0.0
      %2276 = vmatprep.subr.mxu0 0.0
      %2277 = vmatpush1.msra.mxu0 0.0
      %2278 = vmatprep.subr.mxu0 0.0
      %2279 = vmatpush1.msra.mxu0 0.0
      %2280 = vmatprep.subr.mxu0 %v2257
      %2281 = vmatpush1.msra.mxu0 %v2256
      %2282 = vmatprep.subr.mxu0 %v2255
      %2283 = vmatpush1.msra.mxu0 %v2254
      %2284 = vmatprep.subr.mxu0 %v2253
      %2285 = vmatpush1.msra.mxu0 %v2252
      %2286 = vmatprep.subr.mxu0 %v2251
      %2287 = vmatpush1.msra.mxu0 %v2250
      %2288 = vmatprep.subr.mxu0 %v2249
      %2289 = vmatpush1.msra.mxu0 %v2248
      %2290 = vmatprep.subr.mxu0 %v2247
      %2291 = vmatpush1.msra.mxu0 %v2246
      %2292 = vmatprep.subr.mxu0 %v2245
      %2293 = vmatpush1.msra.mxu0 %v2244
      %2294 = vmatprep.subr.mxu0 %v2243
      %2295 = vmatpush1.msra.mxu0 %v2242
      %2296 = vmatprep.subr.mxu0 %v2241
      %2297 = vmatpush1.msra.mxu0 %v2240
      %2298 = vmatprep.subr.mxu0 0.0
      %2299 = vmatpush2.msra.mxu0 0.0
      %2300 = vmatprep.subr.mxu0 0.0
      %2301 = vmatpush2.msra.mxu0 0.0
      %2302 = vmatprep.subr.mxu0 0.0
      %2303 = vmatpush2.msra.mxu0 0.0
      %2304 = vmatprep.subr.mxu0 0.0
      %2305 = vmatpush2.msra.mxu0 0.0
      %2306 = vmatprep.subr.mxu0 0.0
      %2307 = vmatpush2.msra.mxu0 0.0
      %2308 = vmatprep.subr.mxu0 0.0
      %2309 = vmatpush2.msra.mxu0 0.0
      %2310 = vmatprep.subr.mxu0 0.0
      %2311 = vmatpush2.msra.mxu0 0.0
      %2312 = vmatprep.subr.mxu0 0.0
      %2313 = vmatpush2.msra.mxu0 0.0
      %2314 = vmatprep.subr.mxu0 0.0
      %2315 = vmatpush2.msra.mxu0 0.0
      %2316 = vmatprep.subr.mxu0 0.0
      %2317 = vmatpush2.msra.mxu0 0.0
      %2318 = vmatprep.subr.mxu0 0.0
      %2319 = vmatpush2.msra.mxu0 0.0
      %2320 = vmatprep.subr.mxu0 0.0
      %2321 = vmatpush2.msra.mxu0 0.0
      %2322 = vmatprep.subr.mxu0 0.0
      %2323 = vmatpush2.msra.mxu0 0.0
      %2324 = vmatprep.subr.mxu0 0.0
      %2325 = vmatpush2.msra.mxu0 0.0
      %2326 = vmatprep.subr.mxu0 0.0
      %2327 = vmatpush2.msra.mxu0 0.0
      %2328 = vmatprep.subr.mxu0 0.0
      %2329 = vmatpush2.msra.mxu0 0.0
      %2330 = vmatprep.mubr.f32.mxu0 0.0
      %2331 = vmatmul.mubr.f32.gmra.mxu0 %v2264
      %v2332 = vpop.f32.mrf.mxu0
      %v2333 = vadd.f32 %v2261, %v2332
      %v2334 = vpop.f32.mrf.mxu0
      %v2335 = vadd.f32 %v2261, %v2334
      %2336 = vdwg.mxu0
      %v2337 = vmax.f32 %v2333, 0.0
      %v2338 = vmax.f32 %v2335, 0.0
      %v2339 = vadd.f32 %v2337, %v1543
      %v2340 = vadd.f32 %v2338, %v1544
      %2341 = vst [vmem:[#allocation2 + $0x8] sm:$0xff] %v2339
      %2342 = vst [vmem:[#allocation2 + $0x10] sm:$0xff] %v2340
      %v2343 = vld [vmem:[%s8] sm:$0xff]
      %v2344 = vld [vmem:[%s9] sm:$0xff]
      %v2345 = vld [vmem:[#allocation2] sm:$0xff]
      %v2346 = vld [vmem:[#allocation2 + $0x8] sm:$0xff]
      %v2347 = vld [vmem:[#allocation2 + $0x10] sm:$0xff]
      %v2348 = vld [vmem:[%s1] ss:$4 sm:$0x3]
      %v2350 = vlaneseq
      %v2351 = vshrl.u32 %v2350, 7
      %v2352 = vsub.s32 0, %v2351
      %v2353 = vrot.slane %v2348, %v2352
      %v2354 = vlaneseq
      %v2355 = vshrl.u32 %v2354, 7
      %v2356 = vsub.s32 1, %v2355
      %v2357 = vrot.slane %v2348, %v2356
      %2358 = vrot.lane.b32.xlu0 %v2353, 111
      %v2359 = vpop.permute.xlu0 %2358
      %2360 = vrot.lane.b32.xlu0 %v2357, 111
      %v2361 = vpop.permute.xlu0 %2360
      %v2362 = vsel %vm387, %v2359, %v2361
      %v2366 = vmul.f32 %v2345, %v2359
      %v2367 = vmul.f32 %v2346, %v2362
      %v2368 = vmul.f32 %v2347, %v2361
      %2372 = vrot.lane.b32.xlu0 %v2366, 17
      %v2373 = vpop.permute.xlu0 %2372
      %2374 = vrot.lane.b32.xlu0 %v2367, 17
      %v2375 = vpop.permute.xlu0 %2374
      %2376 = vrot.lane.b32.xlu0 %v2368, 17
      %v2377 = vpop.permute.xlu0 %2376
      %v2378 = vsel %vm404, %v2373, %v2375
      %v2379 = vsel %vm404, %v2375, %v2377
      %2382 = vst [vmem:[#allocation3] sm:$0xff] %v2378
      %2383 = vst [vmem:[#allocation3 + $0x8] sm:$0xff] %v2379
      %v2384 = vld [vmem:[#allocation2] sm:$0xff]
      %v2385 = vld [vmem:[#allocation2 + $0x8] sm:$0xff]
      %v2386 = vld [vmem:[#allocation2 + $0x10] sm:$0xff]
      %2390 = vrot.lane.b32.xlu0 %v2384, 16
      %v2391 = vpop.permute.xlu0 %2390
      %2392 = vrot.lane.b32.xlu0 %v2385, 16
      %v2393 = vpop.permute.xlu0 %2392
      %2394 = vrot.lane.b32.xlu0 %v2386, 16
      %v2395 = vpop.permute.xlu0 %2394
      %v2396 = vsel %vm423, %v2391, %v2393
      %v2397 = vsel %vm423, %v2393, %v2395
      %2400 = vst [vmem:[#allocation3 + $0x10] sm:$0xff] %v2396
      %2401 = vst [vmem:[#allocation3 + $0x18] sm:$0xff] %v2397
      %v2402 = vld [vmem:[#allocation2] sm:$0xff]
      %v2403 = vld [vmem:[#allocation2 + $0x8] sm:$0xff]
      %v2404 = vld [vmem:[#allocation2 + $0x10] sm:$0xff]
      %v2405 = vld [vmem:[%s433] ss:$4 sm:$0x3]
      %v2407 = vlaneseq
      %v2408 = vshrl.u32 %v2407, 7
      %v2409 = vsub.s32 0, %v2408
      %v2410 = vrot.slane %v2405, %v2409
      %v2411 = vlaneseq
      %v2412 = vshrl.u32 %v2411, 7
      %v2413 = vsub.s32 1, %v2412
      %v2414 = vrot.slane %v2405, %v2413
      %2415 = vrot.lane.b32.xlu0 %v2410, 113
      %v2416 = vpop.permute.xlu0 %2415
      %2417 = vrot.lane.b32.xlu0 %v2414, 113
      %v2418 = vpop.permute.xlu0 %2417
      %v2419 = vsel %vm448, %v2416, %v2418
      %v2423 = vmul.f32 %v2402, %v2416
      %v2424 = vmul.f32 %v2403, %v2419
      %v2425 = vmul.f32 %v2404, %v2418
      %2429 = vrot.lane.b32.xlu0 %v2423, 15
      %v2430 = vpop.permute.xlu0 %2429
      %2431 = vrot.lane.b32.xlu0 %v2424, 15
      %v2432 = vpop.permute.xlu0 %2431
      %2433 = vrot.lane.b32.xlu0 %v2425, 15
      %v2434 = vpop.permute.xlu0 %2433
      %v2435 = vsel %vm465, %v2430, %v2432
      %v2436 = vsel %vm465, %v2432, %v2434
      %2439 = vst [vmem:[#allocation3 + $0x20] sm:$0xff] %v2435
      %2440 = vst [vmem:[#allocation3 + $0x28] sm:$0xff] %v2436
      %v2441 = vld [vmem:[#allocation2] sm:$0xff]
      %v2442 = vld [vmem:[#allocation2 + $0x8] sm:$0xff]
      %v2443 = vld [vmem:[#allocation2 + $0x10] sm:$0xff]
      %v2444 = vld [vmem:[%s1] ss:$4 sm:$0x3]
      %v2446 = vlaneseq
      %v2447 = vshrl.u32 %v2446, 7
      %v2448 = vsub.s32 0, %v2447
      %v2449 = vrot.slane %v2444, %v2448
      %v2450 = vlaneseq
      %v2451 = vshrl.u32 %v2450, 7
      %v2452 = vsub.s32 1, %v2451
      %v2453 = vrot.slane %v2444, %v2452
      %2454 = vrot.lane.b32.xlu0 %v2449, 127
      %v2455 = vpop.permute.xlu0 %2454
      %2456 = vrot.lane.b32.xlu0 %v2453, 127
      %v2457 = vpop.permute.xlu0 %2456
      %v2458 = vsel %vm489, %v2455, %v2457
      %v2462 = vmul.f32 %v2441, %v2455
      %v2463 = vmul.f32 %v2442, %v2458
      %v2464 = vmul.f32 %v2443, %v2457
      %2468 = vrot.lane.b32.xlu0 %v2462, 1
      %v2469 = vpop.permute.xlu0 %2468
      %2470 = vrot.lane.b32.xlu0 %v2463, 1
      %v2471 = vpop.permute.xlu0 %2470
      %2472 = vrot.lane.b32.xlu0 %v2464, 1
      %v2473 = vpop.permute.xlu0 %2472
      %v2474 = vsel %vm506, %v2469, %v2471
      %v2475 = vsel %vm506, %v2471, %v2473
      %2478 = vst [vmem:[#allocation3 + $0x30] sm:$0xff] %v2474
      %2479 = vst [vmem:[#allocation3 + $0x38] sm:$0xff] %v2475
      %v2480 = vld [vmem:[#allocation2 + $0x8] sm:$0xff]
      %v2481 = vld [vmem:[#allocation2 + $0x10] sm:$0xff]
      %2482 = vst [vmem:[#allocation3 + $0x40] sm:$0xff] %v2480
      %2483 = vst [vmem:[#allocation3 + $0x48] sm:$0xff] %v2481
      %v2484 = vld [vmem:[#allocation2 + $0x8] sm:$0xff]
      %v2485 = vld [vmem:[#allocation2 + $0x10] sm:$0xff]
      %v2486 = vld [vmem:[#allocation2 + $0x18] sm:$0xff]
      %v2487 = vld [vmem:[%s433] ss:$4 sm:$0x3]
      %v2489 = vlaneseq
      %v2490 = vshrl.u32 %v2489, 7
      %v2491 = vsub.s32 0, %v2490
      %v2492 = vrot.slane %v2487, %v2491
      %v2493 = vlaneseq
      %v2494 = vshrl.u32 %v2493, 7
      %v2495 = vsub.s32 1, %v2494
      %v2496 = vrot.slane %v2487, %v2495
      %2497 = vrot.lane.b32.xlu0 %v2492, 1
      %v2498 = vpop.permute.xlu0 %2497
      %2499 = vrot.lane.b32.xlu0 %v2496, 1
      %v2500 = vpop.permute.xlu0 %2499
      %v2501 = vsel %vm506, %v2498, %v2500
      %v2505 = vmul.f32 %v2484, %v2498
      %v2506 = vmul.f32 %v2485, %v2501
      %v2507 = vmul.f32 %v2486, %v2500
      %2511 = vrot.lane.b32.xlu0 %v2505, 127
      %v2512 = vpop.permute.xlu0 %2511
      %2513 = vrot.lane.b32.xlu0 %v2506, 127
      %v2514 = vpop.permute.xlu0 %2513
      %2515 = vrot.lane.b32.xlu0 %v2507, 127
      %v2516 = vpop.permute.xlu0 %2515
      %v2517 = vsel %vm489, %v2512, %v2514
      %v2518 = vsel %vm489, %v2514, %v2516
      %2521 = vst [vmem:[#allocation3 + $0x50] sm:$0xff] %v2517
      %2522 = vst [vmem:[#allocation3 + $0x58] sm:$0xff] %v2518
      %v2523 = vld [vmem:[#allocation2 + $0x8] sm:$0xff]
      %v2524 = vld [vmem:[#allocation2 + $0x10] sm:$0xff]
      %v2525 = vld [vmem:[#allocation2 + $0x18] sm:$0xff]
      %v2526 = vld [vmem:[%s1] ss:$4 sm:$0x3]
      %v2528 = vlaneseq
      %v2529 = vshrl.u32 %v2528, 7
      %v2530 = vsub.s32 0, %v2529
      %v2531 = vrot.slane %v2526, %v2530
      %v2532 = vlaneseq
      %v2533 = vshrl.u32 %v2532, 7
      %v2534 = vsub.s32 1, %v2533
      %v2535 = vrot.slane %v2526, %v2534
      %2536 = vrot.lane.b32.xlu0 %v2531, 15
      %v2537 = vpop.permute.xlu0 %2536
      %2538 = vrot.lane.b32.xlu0 %v2535, 15
      %v2539 = vpop.permute.xlu0 %2538
      %v2540 = vsel %vm465, %v2537, %v2539
      %v2544 = vmul.f32 %v2523, %v2537
      %v2545 = vmul.f32 %v2524, %v2540
      %v2546 = vmul.f32 %v2525, %v2539
      %2550 = vrot.lane.b32.xlu0 %v2544, 113
      %v2551 = vpop.permute.xlu0 %2550
      %2552 = vrot.lane.b32.xlu0 %v2545, 113
      %v2553 = vpop.permute.xlu0 %2552
      %2554 = vrot.lane.b32.xlu0 %v2546, 113
      %v2555 = vpop.permute.xlu0 %2554
      %v2556 = vsel %vm448, %v2551, %v2553
      %v2557 = vsel %vm448, %v2553, %v2555
      %2560 = vst [vmem:[#allocation3 + $0x60] sm:$0xff] %v2556
      %2561 = vst [vmem:[#allocation3 + $0x68] sm:$0xff] %v2557
      %v2562 = vld [vmem:[#allocation2 + $0x8] sm:$0xff]
      %v2563 = vld [vmem:[#allocation2 + $0x10] sm:$0xff]
      %v2564 = vld [vmem:[#allocation2 + $0x18] sm:$0xff]
      %2568 = vrot.lane.b32.xlu0 %v2562, 112
      %v2569 = vpop.permute.xlu0 %2568
      %2570 = vrot.lane.b32.xlu0 %v2563, 112
      %v2571 = vpop.permute.xlu0 %2570
      %2572 = vrot.lane.b32.xlu0 %v2564, 112
      %v2573 = vpop.permute.xlu0 %2572
      %v2574 = vsel %vm607, %v2569, %v2571
      %v2575 = vsel %vm607, %v2571, %v2573
      %2578 = vst [vmem:[#allocation3 + $0x70] sm:$0xff] %v2574
      %2579 = vst [vmem:[#allocation3 + $0x78] sm:$0xff] %v2575
      %v2580 = vld [vmem:[#allocation2 + $0x8] sm:$0xff]
      %v2581 = vld [vmem:[#allocation2 + $0x10] sm:$0xff]
      %v2582 = vld [vmem:[#allocation2 + $0x18] sm:$0xff]
      %v2583 = vld [vmem:[%s433] ss:$4 sm:$0x3]
      %v2585 = vlaneseq
      %v2586 = vshrl.u32 %v2585, 7
      %v2587 = vsub.s32 0, %v2586
      %v2588 = vrot.slane %v2583, %v2587
      %v2589 = vlaneseq
      %v2590 = vshrl.u32 %v2589, 7
      %v2591 = vsub.s32 1, %v2590
      %v2592 = vrot.slane %v2583, %v2591
      %2593 = vrot.lane.b32.xlu0 %v2588, 17
      %v2594 = vpop.permute.xlu0 %2593
      %2595 = vrot.lane.b32.xlu0 %v2592, 17
      %v2596 = vpop.permute.xlu0 %2595
      %v2597 = vsel %vm404, %v2594, %v2596
      %v2601 = vmul.f32 %v2580, %v2594
      %v2602 = vmul.f32 %v2581, %v2597
      %v2603 = vmul.f32 %v2582, %v2596
      %2607 = vrot.lane.b32.xlu0 %v2601, 111
      %v2608 = vpop.permute.xlu0 %2607
      %2609 = vrot.lane.b32.xlu0 %v2602, 111
      %v2610 = vpop.permute.xlu0 %2609
      %2611 = vrot.lane.b32.xlu0 %v2603, 111
      %v2612 = vpop.permute.xlu0 %2611
      %v2613 = vsel %vm387, %v2608, %v2610
      %v2614 = vsel %vm387, %v2610, %v2612
      %2617 = vst [vmem:[#allocation3 + $0x80] sm:$0xff] %v2613
      %2618 = vst [vmem:[#allocation3 + $0x88] sm:$0xff] %v2614
      %v2619 = vld [vmem:[#allocation3] sm:$0xff]
      %v2620 = vld [vmem:[#allocation3 + $0x8] sm:$0xff]
      %v2621 = vld [vmem:[#allocation3 + $0x10] sm:$0xff]
      %v2622 = vld [vmem:[#allocation3 + $0x18] sm:$0xff]
      %v2623 = vld [vmem:[#allocation3 + $0x20] sm:$0xff]
      %v2624 = vld [vmem:[#allocation3 + $0x28] sm:$0xff]
      %v2625 = vld [vmem:[#allocation3 + $0x30] sm:$0xff]
      %v2626 = vld [vmem:[#allocation3 + $0x38] sm:$0xff]
      %v2627 = vld [vmem:[#allocation3 + $0x40] sm:$0xff]
      %v2628 = vld [vmem:[#allocation3 + $0x48] sm:$0xff]
      %v2629 = vld [vmem:[#allocation3 + $0x50] sm:$0xff]
      %v2630 = vld [vmem:[#allocation3 + $0x58] sm:$0xff]
      %v2631 = vld [vmem:[#allocation3 + $0x60] sm:$0xff]
      %v2632 = vld [vmem:[#allocation3 + $0x68] sm:$0xff]
      %v2633 = vld [vmem:[#allocation3 + $0x70] sm:$0xff]
      %v2634 = vld [vmem:[#allocation3 + $0x78] sm:$0xff]
      %v2635 = vld [vmem:[#allocation3 + $0x80] sm:$0xff]
      %v2636 = vld [vmem:[#allocation3 + $0x88] sm:$0xff]
      %2638 = vset.pattern.permute.xlu0 0
      %2639 = vperm.xlu0 %2638, %v2344
      %v2640 = vpop.permute.xlu0 %2639
      %v2643 = vsel %vm676, %v2343, 0
      %2645 = vmatprep.subr.mxu0 0.0
      %2646 = vmatpush1.msra.mxu0 0.0
      %2647 = vmatprep.subr.mxu0 0.0
      %2648 = vmatpush1.msra.mxu0 0.0
      %2649 = vmatprep.subr.mxu0 0.0
      %2650 = vmatpush1.msra.mxu0 0.0
      %2651 = vmatprep.subr.mxu0 0.0
      %2652 = vmatpush1.msra.mxu0 0.0
      %2653 = vmatprep.subr.mxu0 0.0
      %2654 = vmatpush1.msra.mxu0 0.0
      %2655 = vmatprep.subr.mxu0 0.0
      %2656 = vmatpush1.msra.mxu0 0.0
      %2657 = vmatprep.subr.mxu0 0.0
      %2658 = vmatpush1.msra.mxu0 0.0
      %2659 = vmatprep.subr.mxu0 %v2636
      %2660 = vmatpush1.msra.mxu0 %v2635
      %2661 = vmatprep.subr.mxu0 %v2634
      %2662 = vmatpush1.msra.mxu0 %v2633
      %2663 = vmatprep.subr.mxu0 %v2632
      %2664 = vmatpush1.msra.mxu0 %v2631
      %2665 = vmatprep.subr.mxu0 %v2630
      %2666 = vmatpush1.msra.mxu0 %v2629
      %2667 = vmatprep.subr.mxu0 %v2628
      %2668 = vmatpush1.msra.mxu0 %v2627
      %2669 = vmatprep.subr.mxu0 %v2626
      %2670 = vmatpush1.msra.mxu0 %v2625
      %2671 = vmatprep.subr.mxu0 %v2624
      %2672 = vmatpush1.msra.mxu0 %v2623
      %2673 = vmatprep.subr.mxu0 %v2622
      %2674 = vmatpush1.msra.mxu0 %v2621
      %2675 = vmatprep.subr.mxu0 %v2620
      %2676 = vmatpush1.msra.mxu0 %v2619
      %2677 = vmatprep.subr.mxu0 0.0
      %2678 = vmatpush2.msra.mxu0 0.0
      %2679 = vmatprep.subr.mxu0 0.0
      %2680 = vmatpush2.msra.mxu0 0.0
      %2681 = vmatprep.subr.mxu0 0.0
      %2682 = vmatpush2.msra.mxu0 0.0
      %2683 = vmatprep.subr.mxu0 0.0
      %2684 = vmatpush2.msra.mxu0 0.0
      %2685 = vmatprep.subr.mxu0 0.0
      %2686 = vmatpush2.msra.mxu0 0.0
      %2687 = vmatprep.subr.mxu0 0.0
      %2688 = vmatpush2.msra.mxu0 0.0
      %2689 = vmatprep.subr.mxu0 0.0
      %2690 = vmatpush2.msra.mxu0 0.0
      %2691 = vmatprep.subr.mxu0 0.0
      %2692 = vmatpush2.msra.mxu0 0.0
      %2693 = vmatprep.subr.mxu0 0.0
      %2694 = vmatpush2.msra.mxu0 0.0
      %2695 = vmatprep.subr.mxu0 0.0
      %2696 = vmatpush2.msra.mxu0 0.0
      %2697 = vmatprep.subr.mxu0 0.0
      %2698 = vmatpush2.msra.mxu0 0.0
      %2699 = vmatprep.subr.mxu0 0.0
      %2700 = vmatpush2.msra.mxu0 0.0
      %2701 = vmatprep.subr.mxu0 0.0
      %2702 = vmatpush2.msra.mxu0 0.0
      %2703 = vmatprep.subr.mxu0 0.0
      %2704 = vmatpush2.msra.mxu0 0.0
      %2705 = vmatprep.subr.mxu0 0.0
      %2706 = vmatpush2.msra.mxu0 0.0
      %2707 = vmatprep.subr.mxu0 0.0
      %2708 = vmatpush2.msra.mxu0 0.0
      %2709 = vmatprep.mubr.f32.mxu0 0.0
      %2710 = vmatmul.mubr.f32.gmra.mxu0 %v2643
      %v2711 = vpop.f32.mrf.mxu0
      %v2712 = vadd.f32 %v2640, %v2711
      %v2713 = vpop.f32.mrf.mxu0
      %v2714 = vadd.f32 %v2640, %v2713
      %2715 = vdwg.mxu0
      %v2718 = vcombine.low %v2712, %v2714
      %2720 = vst [vmem:[%s359] sm:$0x77] %v2718
      %p2721 = scmp.lt.s32.totalorder %s21, 1
      %s2722 = scalar_select %p2721, %s21, 1
      %s2723 = smul.addr %s2722, 2
      %s2724 = smul.addr %s2723, 4
      %s2725 = scalar_lea.vmem %s10, %s2724
      // Predicated region
      $region61: #{_lambda_.1} parent=59 // pred_check
        %p2726 = pneg %p254
      $region62: #{_lambda_.1} parent=59 // pred_check_branch
        %2728 = sbr.rel (%p2726) target = $region64
      $region63: #{_lambda_.1} parent=59 // pred_region
        _
      $region64: #{_lambda_.1} parent=59 // pred_fallthru
        _
    $region60: #{_lambda_.1} parent=5 // pred_fallthru
      _
    %p2729 = scmp.le.s32.totalorder 2, %s16
    // Predicated region
    $region65: #{_lambda_.1} parent=5 // pred_check
      %p2730 = pneg %p2729
    $region66: #{_lambda_.1} parent=5 // pred_check_branch
      %2732 = sbr.rel (%p2730) target = $region68
    $region67: #{_lambda_.1} parent=5 // pred_region
      %s2733 = ssub.s32 %s16, 2
      // Predicated region
      $region69: #{_lambda_.1} parent=67 // pred_check
        %p2734 = pneg %p260
      $region70: #{_lambda_.1} parent=67 // pred_check_branch
        %2736 = sbr.rel (%p2734) target = $region72
      $region71: #{_lambda_.1} parent=67 // pred_region
        %p2737 = scmp.lt.s32.totalorder %s22, 1
        %s2738 = scalar_select %p2737, %s22, 1
        %s2739 = smul.addr %s2738, 2
        %s2740 = smul.addr %s2739, 4
        %s2741 = scalar_lea.vmem %s10, %s2740
      $region72: #{_lambda_.1} parent=67 // pred_fallthru
        _
    $region68: #{_lambda_.1} parent=5 // pred_fallthru
      _
  $region6: #{_lambda_.1} parent=0 // loop_footer
    %s20 = sadd.s32 1, %s16
  $region7: #{_lambda_.1} parent=0 // loop_footer_branch
    %15 = sbr.rel target = $region3
  $region8: #{_lambda_.1} parent=0 // loop_exit
    _

</llo_original>
